<compile_context>
chip_gen: v7x
topology: tpu7x:2x2x1
jax: 0.10.0
libtpu: 0.0.40
codegen_flags: <defaults>
</compile_context>

<pallas_src>
import functools
import math

import jax
import jax.numpy as jnp
from jax import lax
from jax.experimental import pallas as pl
from jax.experimental.pallas import tpu as pltpu

INPUT_DIM = 11
D_MODEL = 64
NHEAD = 4
NUM_LAYERS = 2
DIM_FF = 128
LN_EPS = 1e-5

SUB = 256                # compute sub-tile (lanes); caps vreg live set (~50/64)
MAX_SUBS_PER_STEP = 8    # DMA slab per grid step: up to 2048 lanes
EMB_PAD = ((D_MODEL + 127) // 128) * 128   # 128: pad fused-embedding output so
                                           # the in-kernel transpose is aligned


# ----------------------------- kernel side ---------------------------------


def _ln_cols(x, gamma, beta):
    # x: (D, SUB) f32; normalize over the feature axis (axis 0 / sublanes), so
    # the reductions are cheap sublane adds instead of cross-lane XLU work.
    # One-pass stats (var = E[x^2] - mu^2): slightly different rounding than the
    # centered two-pass form, fine in f32 for this model (LN_EPS guards rsqrt).
    mu = jnp.mean(x, axis=0, keepdims=True)            # (1, SUB)
    ex2 = jnp.mean(x * x, axis=0, keepdims=True)       # (1, SUB)
    var = ex2 - mu * mu
    inv = lax.rsqrt(var + LN_EPS)
    return (x - mu) * inv * gamma + beta               # gamma/beta: (D, 1)


def transformer_kernel(x_ref, wf0_ref, w_attn_ref, w1_ref, w2_ref,
                       b1_ref, vec_ref, w_fc_ref, b_fc_ref, o_ref,
                       *, sub, n_sub, mdt):
    """One grid step = one batch slab; inner loop over 256-lane sub-tiles."""

    def forward_cols(x_rows):
        # x_rows: (sub, INPUT_DIM) f32, batch on sublanes (HBM row-major, no
        # host transpose).  Fused embedding+layer-0-attention matmul is done
        # row-major (standard (M,K)@(K,N), K=11 stays f32), then ONE aligned
        # (sub,128)->(128,sub) f32 transpose puts activations feature-major
        # (batch on the 128-lane axis) for everything downstream.
        zr = jnp.dot(x_rows, wf0_ref[...],
                     preferred_element_type=jnp.float32)       # (sub, EMB_PAD)
        z = zr.T[:D_MODEL, :]                                   # (D, sub)

        h = None
        for l in range(NUM_LAYERS):                             # static unroll
            b_attn = vec_ref[6 * l + 0]                         # (D, 1) each
            b2 = vec_ref[6 * l + 1]
            g1 = vec_ref[6 * l + 2]
            be1 = vec_ref[6 * l + 3]
            g2 = vec_ref[6 * l + 4]
            be2 = vec_ref[6 * l + 5]

            # seq_len == 1 attention with the residual folded into the weight:
            #   LN1 input = (I + W_out@W_v) @ h + b_attn
            # Layer 0's weight is already fused with the embedding above.
            if l:
                z = jnp.dot(w_attn_ref[l - 1], h.astype(mdt),
                            preferred_element_type=jnp.float32)
            h = _ln_cols(z + b_attn, g1, be1)

            # feed forward: Linear -> relu -> Linear, post-norm residual
            ff = jnp.dot(w1_ref[l], h.astype(mdt),
                         preferred_element_type=jnp.float32) + b1_ref[l]
            ff = jnp.maximum(ff, 0.0)
            ff = jnp.dot(w2_ref[l], ff.astype(mdt),
                         preferred_element_type=jnp.float32) + b2
            h = _ln_cols(h + ff, g2, be2)

        # head: (1, D) @ (D, sub) -> lane-dense (1, sub) output row (f32, tiny)
        return jnp.dot(w_fc_ref[...], h,
                       preferred_element_type=jnp.float32) + b_fc_ref[...]

    if n_sub == 1:
        o_ref[...] = forward_cols(x_ref[...])
    else:
        # Inner loop over 256-lane sub-tiles: amortizes grid-step overhead while
        # bounding vreg pressure (not unrolled on purpose: each body is heavy).
        def body(s, carry):
            start = pl.multiple_of(s * sub, sub)
            cols = forward_cols(x_ref[pl.ds(start, sub), :])
            o_ref[:, pl.ds(start, sub)] = cols
            return carry

        lax.fori_loop(0, n_sub, body, 0)


# ----------------------------- host wrapper --------------------------------


def prepare_params(params, matmul_dtype=jnp.bfloat16):
    """One-time host-side fusion / casting.  Keep OUT of the per-call hot path."""
    mdt = matmul_dtype
    D = D_MODEL

    w_v = params["in_proj_w"][:, 2 * D:3 * D, :]                  # (L, D, D)
    b_v = params["in_proj_b"][:, 2 * D:3 * D]                     # (L, D)

    # seq_len==1: attention output == W_out @ V; fold the residual into the
    # weight:  W_attn' = I + W_out @ W_v,  b_attn = W_out @ b_v + b_out.
    w_attn = (jnp.eye(D, dtype=jnp.float32)[None]
              + jnp.einsum("lij,ljk->lik", params["out_w"], w_v))  # (L, D, D)
    b_attn = jnp.einsum("lij,lj->li", params["out_w"], b_v) + params["out_b"]
    # Fold the embedding bias into layer-0's attention bias.
    b_attn = b_attn.at[0].add(w_attn[0] @ params["emb_b"])
    # Fold the embedding weight into layer-0's attention weight (K stays 11);
    # pad the output dim to 128 so the in-kernel transpose is (8,128)-aligned.
    wfused0 = w_attn[0] @ params["emb_w"]                          # (D, 11)
    wf0 = jnp.zeros((INPUT_DIM, EMB_PAD), jnp.float32).at[:, :D].set(wfused0.T)

    # Pack the per-layer 64-wide vectors (fewer inputs / BlockSpec DMAs).
    vec64 = jnp.stack([b_attn, params["lin2_b"], params["ln1_g"], params["ln1_b"],
                       params["ln2_g"], params["ln2_b"]], axis=1)  # (L, 6, D)
    vec64 = vec64.reshape(NUM_LAYERS * 6, D)[:, :, None]           # (6L, D, 1)

    return {
        "wf0": wf0,                                   # (11, 128) f32 (fused)
        "w_attn": w_attn[1:].astype(mdt),             # (L-1, D, D) layers >= 1
        "w1": params["lin1_w"].astype(mdt),           # (L, FF, D)
        "w2": params["lin2_w"].astype(mdt),           # (L, D, FF)
        "b1": params["lin1_b"][:, :, None].astype(jnp.float32),   # (L, FF, 1)
        "vec": vec64.astype(jnp.float32),             # (6L, D, 1)
        "w_fc": params["fc_w"].astype(jnp.float32),   # (1, D)
        "b_fc": params["fc_b"][:, None].astype(jnp.float32),      # (1, 1)
    }


def _plan_tiles(B):
    """slab (lanes per grid step), grid steps, sub-tiles per step."""
    n_sub = -(-B // SUB)
    if n_sub <= 1:
        return SUB, 1, 1
    steps = max(2, -(-n_sub // MAX_SUBS_PER_STEP))
    if steps % 2:
        steps += 1            # even #steps -> balanced across v7x's 2 TCs
    subs = -(-n_sub // steps)
    return subs * SUB, steps, subs


def transformer_forward(x, prepped):
    """Pallas forward.  x: (B, input_dim) f32 -> (B,) f32."""
    B = x.shape[0]
    slab, steps, subs = _plan_tiles(B)
    Bp = steps * slab
    if Bp != B:
        x = jnp.pad(x, ((0, Bp - B), (0, 0)))

    mdt = prepped["w_attn"].dtype
    args = [prepped[k] for k in
            ("wf0", "w_attn", "w1", "w2", "b1", "vec", "w_fc", "b_fc")]

    def full_block(a):
        nd = a.ndim
        return pl.BlockSpec(a.shape, lambda i, nd=nd: (0,) * nd)

    macs_per_row = (EMB_PAD * INPUT_DIM
                    + (NUM_LAYERS - 1) * D_MODEL * D_MODEL
                    + NUM_LAYERS * 2 * D_MODEL * DIM_FF
                    + D_MODEL)
    param_bytes = sum(int(a.size) * a.dtype.itemsize for a in args)
    cost = pl.CostEstimate(
        flops=2 * Bp * macs_per_row,
        transcendentals=2 * NUM_LAYERS * Bp,                 # one rsqrt per LN/row
        bytes_accessed=4 * Bp * (INPUT_DIM + 1) + param_bytes)

    kernel = functools.partial(transformer_kernel, sub=SUB, n_sub=subs, mdt=mdt)
    out = pl.pallas_call(
        kernel,
        out_shape=jax.ShapeDtypeStruct((1, Bp), jnp.float32),
        grid=(steps,),
        in_specs=[pl.BlockSpec((slab, INPUT_DIM), lambda i: (i, 0))]
                 + [full_block(a) for a in args],
        out_specs=pl.BlockSpec((1, slab), lambda i: (0, i)),
        compiler_params=pltpu.CompilerParams(dimension_semantics=("parallel",)),
        cost_estimate=cost,
    )(x, *args)
    # PyTorch's final .squeeze() would give a 0-d scalar for B == 1; we return (B,).
    return out.reshape(-1)[:B]


# ------------------------- init + pure-JAX reference ------------------------


def init_params(key):
    # xavier_uniform for 2-D weights, zeros for biases, ones for LayerNorm
    # weights — matching TransformerModel.initialize_weights().  Weights stored
    # in PyTorch (out_features, in_features) layout.
    keys = iter(jax.random.split(key, 32))

    def xavier(shape):
        limit = math.sqrt(6.0 / (shape[0] + shape[1]))
        return jax.random.uniform(next(keys), shape, jnp.float32, -limit, limit)

    p = {}
    p["emb_w"] = xavier((D_MODEL, INPUT_DIM))
    p["emb_b"] = jnp.zeros((D_MODEL,), jnp.float32)
    p["in_proj_w"] = jnp.stack([xavier((3 * D_MODEL, D_MODEL)) for _ in range(NUM_LAYERS)])
    p["in_proj_b"] = jnp.zeros((NUM_LAYERS, 3 * D_MODEL), jnp.float32)
    p["out_w"] = jnp.stack([xavier((D_MODEL, D_MODEL)) for _ in range(NUM_LAYERS)])
    p["out_b"] = jnp.zeros((NUM_LAYERS, D_MODEL), jnp.float32)
    p["lin1_w"] = jnp.stack([xavier((DIM_FF, D_MODEL)) for _ in range(NUM_LAYERS)])
    p["lin1_b"] = jnp.zeros((NUM_LAYERS, DIM_FF), jnp.float32)
    p["lin2_w"] = jnp.stack([xavier((D_MODEL, DIM_FF)) for _ in range(NUM_LAYERS)])
    p["lin2_b"] = jnp.zeros((NUM_LAYERS, D_MODEL), jnp.float32)
    p["ln1_g"] = jnp.ones((NUM_LAYERS, D_MODEL), jnp.float32)
    p["ln1_b"] = jnp.zeros((NUM_LAYERS, D_MODEL), jnp.float32)
    p["ln2_g"] = jnp.ones((NUM_LAYERS, D_MODEL), jnp.float32)
    p["ln2_b"] = jnp.zeros((NUM_LAYERS, D_MODEL), jnp.float32)
    p["fc_w"] = xavier((1, D_MODEL))
    p["fc_b"] = jnp.zeros((1,), jnp.float32)
    return p


def _ln_rows(x, g, b):
    mu = jnp.mean(x, axis=-1, keepdims=True)
    xc = x - mu
    var = jnp.mean(xc * xc, axis=-1, keepdims=True)
    return xc * lax.rsqrt(var + LN_EPS) * g + b


def reference_forward(x, params):
    # Pure-JAX f32 reference with the FULL multi-head attention (incl. the
    # singleton softmax) to validate every host-side fusion in the kernel path.
    hd = D_MODEL // NHEAD
    h = x @ params["emb_w"].T + params["emb_b"]
    for l in range(NUM_LAYERS):
        wq, wk, wv = jnp.split(params["in_proj_w"][l], 3, axis=0)
        bq, bk, bv = jnp.split(params["in_proj_b"][l], 3)
        q = h @ wq.T + bq
        k = h @ wk.T + bk
        v = h @ wv.T + bv
        qh = q.reshape(-1, NHEAD, hd)
        kh = k.reshape(-1, NHEAD, hd)
        vh = v.reshape(-1, NHEAD, hd)
        scores = jnp.sum(qh * kh, axis=-1, keepdims=True) / math.sqrt(hd)  # (B,H,1)
        w = jax.nn.softmax(scores, axis=-1)                                 # == 1
        attn = (w * vh).reshape(-1, D_MODEL)
        attn = attn @ params["out_w"][l].T + params["out_b"][l]
        h = _ln_rows(h + attn, params["ln1_g"][l], params["ln1_b"][l])
        ff = jax.nn.relu(h @ params["lin1_w"][l].T + params["lin1_b"][l])
        ff = ff @ params["lin2_w"][l].T + params["lin2_b"][l]
        h = _ln_rows(h + ff, params["ln2_g"][l], params["ln2_b"][l])
    out = h @ params["fc_w"].T + params["fc_b"]
    return out[:, 0]


if __name__ == "__main__":
    key = jax.random.PRNGKey(0)
    pkey, xkey = jax.random.split(key)
    params = init_params(pkey)

    # B = 640 -> 2 grid steps (even, v7x-friendly) x 2 inner 256-lane sub-tiles,
    # with batch padding: exercises every path in the wrapper/kernel.
    B = 640
    x = jax.random.normal(xkey, (B, INPUT_DIM), jnp.float32)

    ref = reference_forward(x, params)
    fwd = jax.jit(transformer_forward)

    # f32-matmul path: tight check of the fused-attention / folded-bias /
    # one-pass-LN / in-kernel-transpose algorithm.
    prepped_f32 = prepare_params(params, matmul_dtype=jnp.float32)
    out_f32 = jax.block_until_ready(fwd(x, prepped_f32))
    assert out_f32.shape == (B,), out_f32.shape
    assert jnp.allclose(out_f32, ref, atol=2e-4, rtol=2e-4), (
        float(jnp.max(jnp.abs(out_f32 - ref))))

    # Default path: bf16 MXU inputs for the 64/128-wide layer matmuls,
    # f32 embedding / accumulation / LayerNorm.
    prepped = prepare_params(params)
    out = jax.block_until_ready(fwd(x, prepped))
    assert out.shape == (B,), out.shape
    assert jnp.allclose(out, ref, atol=1e-1, rtol=1e-1), (
        float(jnp.max(jnp.abs(out - ref))))

    print("KERNEL_OK")
</pallas_src>

<mosaic_0001>
module attributes {stable_mosaic.version = 11 : i64} {
  func.func @transformer_kernel(%arg0: i32, %arg1: memref<512x11xf32, #tpu.memory_space<vmem>>, %arg2: memref<11x128xf32, #tpu.memory_space<vmem>>, %arg3: memref<1x64x64xf32, #tpu.memory_space<vmem>>, %arg4: memref<2x128x64xf32, #tpu.memory_space<vmem>>, %arg5: memref<2x64x128xf32, #tpu.memory_space<vmem>>, %arg6: memref<2x128x1xf32, #tpu.memory_space<vmem>>, %arg7: memref<12x64x1xf32, #tpu.memory_space<vmem>>, %arg8: memref<1x64xf32, #tpu.memory_space<vmem>>, %arg9: memref<1x1xf32, #tpu.memory_space<vmem>>, %arg10: memref<1x512xf32, #tpu.memory_space<vmem>>) attributes {dimension_semantics = [#tpu.dimension_semantics<parallel>], iteration_bounds = array<i64: 2>, scalar_prefetch = 0 : i64, scratch_operands = 0 : i64, tpu.core_type = #tpu.core_type<tc>, window_params = [{transform_indices = @transform_0, window_bounds = array<i64: 512, 11>}, {pipeline_mode = #tpu.pipeline_mode<synchronous>, transform_indices = @transform_1, window_bounds = array<i64: 11, 128>}, {pipeline_mode = #tpu.pipeline_mode<synchronous>, transform_indices = @transform_2, window_bounds = array<i64: 1, 64, 64>}, {pipeline_mode = #tpu.pipeline_mode<synchronous>, transform_indices = @transform_3, window_bounds = array<i64: 2, 128, 64>}, {pipeline_mode = #tpu.pipeline_mode<synchronous>, transform_indices = @transform_4, window_bounds = array<i64: 2, 64, 128>}, {pipeline_mode = #tpu.pipeline_mode<synchronous>, transform_indices = @transform_5, window_bounds = array<i64: 2, 128, 1>}, {pipeline_mode = #tpu.pipeline_mode<synchronous>, transform_indices = @transform_6, window_bounds = array<i64: 12, 64, 1>}, {pipeline_mode = #tpu.pipeline_mode<synchronous>, transform_indices = @transform_7, window_bounds = array<i64: 1, 64>}, {pipeline_mode = #tpu.pipeline_mode<synchronous>, transform_indices = @transform_8, window_bounds = array<i64: 1, 1>}, {transform_indices = @transform_9, window_bounds = array<i64: 1, 512>}]} {
    %c0_i32 = arith.constant 0 : i32
    %c2_i32 = arith.constant 2 : i32
    %0 = arith.addi %c0_i32, %c2_i32 : i32
    %c1_i32 = arith.constant 1 : i32
    scf.for %arg11 = %c0_i32 to %0 step %c1_i32  : i32 {
      %c256_i32 = arith.constant 256 : i32
      %1 = arith.muli %arg11, %c256_i32 : i32
      %2 = tpu.assume_multiple %1, 256 : i32
      %3 = arith.index_cast %2 : i32 to index
      %c0 = arith.constant 0 : index
      %4 = vector.load %arg1[%3, %c0] : memref<512x11xf32, #tpu.memory_space<vmem>>, vector<256x11xf32>
      %c0_1 = arith.constant 0 : index
      %c0_2 = arith.constant 0 : index
      %5 = vector.load %arg2[%c0_1, %c0_2] : memref<11x128xf32, #tpu.memory_space<vmem>>, vector<11x128xf32>
      %cst = arith.constant dense<0.000000e+00> : vector<256x128xf32>
      %6 = tpu.matmul %4, %5, %cst {dimension_numbers = #tpu.dot_dimension_numbers<[1], [0], [0], [1], [0, 0, 1, 1], [], []>} : vector<256x11xf32>, vector<11x128xf32>, vector<256x128xf32> -> vector<256x128xf32>
      %7 = tpu.transpose %6, [1, 0] : vector<256x128xf32> -> vector<128x256xf32>
      %8 = vector.extract_strided_slice %7 {offsets = [0, 0], sizes = [64, 256], strides = [1, 1]} : vector<128x256xf32> to vector<64x256xf32>
      %c0_3 = arith.constant 0 : index
      %c0_4 = arith.constant 0 : index
      %c0_5 = arith.constant 0 : index
      %9 = vector.load %arg7[%c0_3, %c0_4, %c0_5] : memref<12x64x1xf32, #tpu.memory_space<vmem>>, vector<1x64x1xf32>
      %10 = vector.shape_cast %9 : vector<1x64x1xf32> to vector<64x1xf32>
      %c1 = arith.constant 1 : index
      %c0_6 = arith.constant 0 : index
      %c0_7 = arith.constant 0 : index
      %11 = vector.load %arg7[%c1, %c0_6, %c0_7] : memref<12x64x1xf32, #tpu.memory_space<vmem>>, vector<1x64x1xf32>
      %12 = vector.shape_cast %11 : vector<1x64x1xf32> to vector<64x1xf32>
      %c2 = arith.constant 2 : index
      %c0_8 = arith.constant 0 : index
      %c0_9 = arith.constant 0 : index
      %13 = vector.load %arg7[%c2, %c0_8, %c0_9] : memref<12x64x1xf32, #tpu.memory_space<vmem>>, vector<1x64x1xf32>
      %14 = vector.shape_cast %13 : vector<1x64x1xf32> to vector<64x1xf32>
      %c3 = arith.constant 3 : index
      %c0_10 = arith.constant 0 : index
      %c0_11 = arith.constant 0 : index
      %15 = vector.load %arg7[%c3, %c0_10, %c0_11] : memref<12x64x1xf32, #tpu.memory_space<vmem>>, vector<1x64x1xf32>
      %16 = vector.shape_cast %15 : vector<1x64x1xf32> to vector<64x1xf32>
      %c4 = arith.constant 4 : index
      %c0_12 = arith.constant 0 : index
      %c0_13 = arith.constant 0 : index
      %17 = vector.load %arg7[%c4, %c0_12, %c0_13] : memref<12x64x1xf32, #tpu.memory_space<vmem>>, vector<1x64x1xf32>
      %18 = vector.shape_cast %17 : vector<1x64x1xf32> to vector<64x1xf32>
      %c5 = arith.constant 5 : index
      %c0_14 = arith.constant 0 : index
      %c0_15 = arith.constant 0 : index
      %19 = vector.load %arg7[%c5, %c0_14, %c0_15] : memref<12x64x1xf32, #tpu.memory_space<vmem>>, vector<1x64x1xf32>
      %20 = vector.shape_cast %19 : vector<1x64x1xf32> to vector<64x1xf32>
      %21 = vector.broadcast %10 : vector<64x1xf32> to vector<64x256xf32>
      %22 = arith.addf %8, %21 : vector<64x256xf32>
      %cst_16 = arith.constant dense<0.000000e+00> : vector<256xf32>
      %23 = vector.multi_reduction <add>, %22, %cst_16 [0] : vector<64x256xf32> to vector<256xf32>
      %24 = vector.shape_cast %23 : vector<256xf32> to vector<1x256xf32>
      %cst_17 = arith.constant 6.400000e+01 : f32
      %25 = vector.broadcast %cst_17 : f32 to vector<1x256xf32>
      %26 = arith.divf %24, %25 : vector<1x256xf32>
      %27 = arith.mulf %22, %22 : vector<64x256xf32>
      %cst_18 = arith.constant dense<0.000000e+00> : vector<256xf32>
      %28 = vector.multi_reduction <add>, %27, %cst_18 [0] : vector<64x256xf32> to vector<256xf32>
      %29 = vector.shape_cast %28 : vector<256xf32> to vector<1x256xf32>
      %cst_19 = arith.constant 6.400000e+01 : f32
      %30 = vector.broadcast %cst_19 : f32 to vector<1x256xf32>
      %31 = arith.divf %29, %30 : vector<1x256xf32>
      %32 = arith.mulf %26, %26 : vector<1x256xf32>
      %33 = arith.subf %31, %32 : vector<1x256xf32>
      %cst_20 = arith.constant 9.99999974E-6 : f32
      %34 = vector.broadcast %cst_20 : f32 to vector<1x256xf32>
      %35 = arith.addf %33, %34 : vector<1x256xf32>
      %36 = math.rsqrt %35 : vector<1x256xf32>
      %37 = vector.broadcast %26 : vector<1x256xf32> to vector<64x256xf32>
      %38 = arith.subf %22, %37 : vector<64x256xf32>
      %39 = vector.broadcast %36 : vector<1x256xf32> to vector<64x256xf32>
      %40 = arith.mulf %38, %39 : vector<64x256xf32>
      %41 = vector.broadcast %14 : vector<64x1xf32> to vector<64x256xf32>
      %42 = arith.mulf %40, %41 : vector<64x256xf32>
      %43 = vector.broadcast %16 : vector<64x1xf32> to vector<64x256xf32>
      %44 = arith.addf %42, %43 : vector<64x256xf32>
      %c0_21 = arith.constant 0 : index
      %c0_22 = arith.constant 0 : index
      %c0_23 = arith.constant 0 : index
      %45 = vector.load %arg4[%c0_21, %c0_22, %c0_23] : memref<2x128x64xf32, #tpu.memory_space<vmem>>, vector<1x128x64xf32>
      %46 = vector.shape_cast %45 : vector<1x128x64xf32> to vector<128x64xf32>
      %cst_24 = arith.constant dense<0.000000e+00> : vector<128x256xf32>
      %47 = tpu.matmul %46, %44, %cst_24 {dimension_numbers = #tpu.dot_dimension_numbers<[1], [0], [0], [1], [0, 0, 1, 1], [], []>} : vector<128x64xf32>, vector<64x256xf32>, vector<128x256xf32> -> vector<128x256xf32>
      %c0_25 = arith.constant 0 : index
      %c0_26 = arith.constant 0 : index
      %c0_27 = arith.constant 0 : index
      %48 = vector.load %arg6[%c0_25, %c0_26, %c0_27] : memref<2x128x1xf32, #tpu.memory_space<vmem>>, vector<1x128x1xf32>
      %49 = vector.shape_cast %48 : vector<1x128x1xf32> to vector<128x1xf32>
      %50 = vector.broadcast %49 : vector<128x1xf32> to vector<128x256xf32>
      %51 = arith.addf %47, %50 : vector<128x256xf32>
      %cst_28 = arith.constant 0.000000e+00 : f32
      %52 = vector.broadcast %cst_28 : f32 to vector<128x256xf32>
      %53 = arith.maximumf %51, %52 : vector<128x256xf32>
      %c0_29 = arith.constant 0 : index
      %c0_30 = arith.constant 0 : index
      %c0_31 = arith.constant 0 : index
      %54 = vector.load %arg5[%c0_29, %c0_30, %c0_31] : memref<2x64x128xf32, #tpu.memory_space<vmem>>, vector<1x64x128xf32>
      %55 = vector.shape_cast %54 : vector<1x64x128xf32> to vector<64x128xf32>
      %cst_32 = arith.constant dense<0.000000e+00> : vector<64x256xf32>
      %56 = tpu.matmul %55, %53, %cst_32 {dimension_numbers = #tpu.dot_dimension_numbers<[1], [0], [0], [1], [0, 0, 1, 1], [], []>} : vector<64x128xf32>, vector<128x256xf32>, vector<64x256xf32> -> vector<64x256xf32>
      %57 = vector.broadcast %12 : vector<64x1xf32> to vector<64x256xf32>
      %58 = arith.addf %56, %57 : vector<64x256xf32>
      %59 = arith.addf %44, %58 : vector<64x256xf32>
      %cst_33 = arith.constant dense<0.000000e+00> : vector<256xf32>
      %60 = vector.multi_reduction <add>, %59, %cst_33 [0] : vector<64x256xf32> to vector<256xf32>
      %61 = vector.shape_cast %60 : vector<256xf32> to vector<1x256xf32>
      %cst_34 = arith.constant 6.400000e+01 : f32
      %62 = vector.broadcast %cst_34 : f32 to vector<1x256xf32>
      %63 = arith.divf %61, %62 : vector<1x256xf32>
      %64 = arith.mulf %59, %59 : vector<64x256xf32>
      %cst_35 = arith.constant dense<0.000000e+00> : vector<256xf32>
      %65 = vector.multi_reduction <add>, %64, %cst_35 [0] : vector<64x256xf32> to vector<256xf32>
      %66 = vector.shape_cast %65 : vector<256xf32> to vector<1x256xf32>
      %cst_36 = arith.constant 6.400000e+01 : f32
      %67 = vector.broadcast %cst_36 : f32 to vector<1x256xf32>
      %68 = arith.divf %66, %67 : vector<1x256xf32>
      %69 = arith.mulf %63, %63 : vector<1x256xf32>
      %70 = arith.subf %68, %69 : vector<1x256xf32>
      %cst_37 = arith.constant 9.99999974E-6 : f32
      %71 = vector.broadcast %cst_37 : f32 to vector<1x256xf32>
      %72 = arith.addf %70, %71 : vector<1x256xf32>
      %73 = math.rsqrt %72 : vector<1x256xf32>
      %74 = vector.broadcast %63 : vector<1x256xf32> to vector<64x256xf32>
      %75 = arith.subf %59, %74 : vector<64x256xf32>
      %76 = vector.broadcast %73 : vector<1x256xf32> to vector<64x256xf32>
      %77 = arith.mulf %75, %76 : vector<64x256xf32>
      %78 = vector.broadcast %18 : vector<64x1xf32> to vector<64x256xf32>
      %79 = arith.mulf %77, %78 : vector<64x256xf32>
      %80 = vector.broadcast %20 : vector<64x1xf32> to vector<64x256xf32>
      %81 = arith.addf %79, %80 : vector<64x256xf32>
      %c6 = arith.constant 6 : index
      %c0_38 = arith.constant 0 : index
      %c0_39 = arith.constant 0 : index
      %82 = vector.load %arg7[%c6, %c0_38, %c0_39] : memref<12x64x1xf32, #tpu.memory_space<vmem>>, vector<1x64x1xf32>
      %83 = vector.shape_cast %82 : vector<1x64x1xf32> to vector<64x1xf32>
      %c7 = arith.constant 7 : index
      %c0_40 = arith.constant 0 : index
      %c0_41 = arith.constant 0 : index
      %84 = vector.load %arg7[%c7, %c0_40, %c0_41] : memref<12x64x1xf32, #tpu.memory_space<vmem>>, vector<1x64x1xf32>
      %85 = vector.shape_cast %84 : vector<1x64x1xf32> to vector<64x1xf32>
      %c8 = arith.constant 8 : index
      %c0_42 = arith.constant 0 : index
      %c0_43 = arith.constant 0 : index
      %86 = vector.load %arg7[%c8, %c0_42, %c0_43] : memref<12x64x1xf32, #tpu.memory_space<vmem>>, vector<1x64x1xf32>
      %87 = vector.shape_cast %86 : vector<1x64x1xf32> to vector<64x1xf32>
      %c9 = arith.constant 9 : index
      %c0_44 = arith.constant 0 : index
      %c0_45 = arith.constant 0 : index
      %88 = vector.load %arg7[%c9, %c0_44, %c0_45] : memref<12x64x1xf32, #tpu.memory_space<vmem>>, vector<1x64x1xf32>
      %89 = vector.shape_cast %88 : vector<1x64x1xf32> to vector<64x1xf32>
      %c10 = arith.constant 10 : index
      %c0_46 = arith.constant 0 : index
      %c0_47 = arith.constant 0 : index
      %90 = vector.load %arg7[%c10, %c0_46, %c0_47] : memref<12x64x1xf32, #tpu.memory_space<vmem>>, vector<1x64x1xf32>
      %91 = vector.shape_cast %90 : vector<1x64x1xf32> to vector<64x1xf32>
      %c11 = arith.constant 11 : index
      %c0_48 = arith.constant 0 : index
      %c0_49 = arith.constant 0 : index
      %92 = vector.load %arg7[%c11, %c0_48, %c0_49] : memref<12x64x1xf32, #tpu.memory_space<vmem>>, vector<1x64x1xf32>
      %93 = vector.shape_cast %92 : vector<1x64x1xf32> to vector<64x1xf32>
      %c0_50 = arith.constant 0 : index
      %c0_51 = arith.constant 0 : index
      %c0_52 = arith.constant 0 : index
      %94 = vector.load %arg3[%c0_50, %c0_51, %c0_52] : memref<1x64x64xf32, #tpu.memory_space<vmem>>, vector<1x64x64xf32>
      %95 = vector.shape_cast %94 : vector<1x64x64xf32> to vector<64x64xf32>
      %cst_53 = arith.constant dense<0.000000e+00> : vector<64x256xf32>
      %96 = tpu.matmul %95, %81, %cst_53 {dimension_numbers = #tpu.dot_dimension_numbers<[1], [0], [0], [1], [0, 0, 1, 1], [], []>} : vector<64x64xf32>, vector<64x256xf32>, vector<64x256xf32> -> vector<64x256xf32>
      %97 = vector.broadcast %83 : vector<64x1xf32> to vector<64x256xf32>
      %98 = arith.addf %96, %97 : vector<64x256xf32>
      %cst_54 = arith.constant dense<0.000000e+00> : vector<256xf32>
      %99 = vector.multi_reduction <add>, %98, %cst_54 [0] : vector<64x256xf32> to vector<256xf32>
      %100 = vector.shape_cast %99 : vector<256xf32> to vector<1x256xf32>
      %cst_55 = arith.constant 6.400000e+01 : f32
      %101 = vector.broadcast %cst_55 : f32 to vector<1x256xf32>
      %102 = arith.divf %100, %101 : vector<1x256xf32>
      %103 = arith.mulf %98, %98 : vector<64x256xf32>
      %cst_56 = arith.constant dense<0.000000e+00> : vector<256xf32>
      %104 = vector.multi_reduction <add>, %103, %cst_56 [0] : vector<64x256xf32> to vector<256xf32>
      %105 = vector.shape_cast %104 : vector<256xf32> to vector<1x256xf32>
      %cst_57 = arith.constant 6.400000e+01 : f32
      %106 = vector.broadcast %cst_57 : f32 to vector<1x256xf32>
      %107 = arith.divf %105, %106 : vector<1x256xf32>
      %108 = arith.mulf %102, %102 : vector<1x256xf32>
      %109 = arith.subf %107, %108 : vector<1x256xf32>
      %cst_58 = arith.constant 9.99999974E-6 : f32
      %110 = vector.broadcast %cst_58 : f32 to vector<1x256xf32>
      %111 = arith.addf %109, %110 : vector<1x256xf32>
      %112 = math.rsqrt %111 : vector<1x256xf32>
      %113 = vector.broadcast %102 : vector<1x256xf32> to vector<64x256xf32>
      %114 = arith.subf %98, %113 : vector<64x256xf32>
      %115 = vector.broadcast %112 : vector<1x256xf32> to vector<64x256xf32>
      %116 = arith.mulf %114, %115 : vector<64x256xf32>
      %117 = vector.broadcast %87 : vector<64x1xf32> to vector<64x256xf32>
      %118 = arith.mulf %116, %117 : vector<64x256xf32>
      %119 = vector.broadcast %89 : vector<64x1xf32> to vector<64x256xf32>
      %120 = arith.addf %118, %119 : vector<64x256xf32>
      %c1_59 = arith.constant 1 : index
      %c0_60 = arith.constant 0 : index
      %c0_61 = arith.constant 0 : index
      %121 = vector.load %arg4[%c1_59, %c0_60, %c0_61] : memref<2x128x64xf32, #tpu.memory_space<vmem>>, vector<1x128x64xf32>
      %122 = vector.shape_cast %121 : vector<1x128x64xf32> to vector<128x64xf32>
      %cst_62 = arith.constant dense<0.000000e+00> : vector<128x256xf32>
      %123 = tpu.matmul %122, %120, %cst_62 {dimension_numbers = #tpu.dot_dimension_numbers<[1], [0], [0], [1], [0, 0, 1, 1], [], []>} : vector<128x64xf32>, vector<64x256xf32>, vector<128x256xf32> -> vector<128x256xf32>
      %c1_63 = arith.constant 1 : index
      %c0_64 = arith.constant 0 : index
      %c0_65 = arith.constant 0 : index
      %124 = vector.load %arg6[%c1_63, %c0_64, %c0_65] : memref<2x128x1xf32, #tpu.memory_space<vmem>>, vector<1x128x1xf32>
      %125 = vector.shape_cast %124 : vector<1x128x1xf32> to vector<128x1xf32>
      %126 = vector.broadcast %125 : vector<128x1xf32> to vector<128x256xf32>
      %127 = arith.addf %123, %126 : vector<128x256xf32>
      %cst_66 = arith.constant 0.000000e+00 : f32
      %128 = vector.broadcast %cst_66 : f32 to vector<128x256xf32>
      %129 = arith.maximumf %127, %128 : vector<128x256xf32>
      %c1_67 = arith.constant 1 : index
      %c0_68 = arith.constant 0 : index
      %c0_69 = arith.constant 0 : index
      %130 = vector.load %arg5[%c1_67, %c0_68, %c0_69] : memref<2x64x128xf32, #tpu.memory_space<vmem>>, vector<1x64x128xf32>
      %131 = vector.shape_cast %130 : vector<1x64x128xf32> to vector<64x128xf32>
      %cst_70 = arith.constant dense<0.000000e+00> : vector<64x256xf32>
      %132 = tpu.matmul %131, %129, %cst_70 {dimension_numbers = #tpu.dot_dimension_numbers<[1], [0], [0], [1], [0, 0, 1, 1], [], []>} : vector<64x128xf32>, vector<128x256xf32>, vector<64x256xf32> -> vector<64x256xf32>
      %133 = vector.broadcast %85 : vector<64x1xf32> to vector<64x256xf32>
      %134 = arith.addf %132, %133 : vector<64x256xf32>
      %135 = arith.addf %120, %134 : vector<64x256xf32>
      %cst_71 = arith.constant dense<0.000000e+00> : vector<256xf32>
      %136 = vector.multi_reduction <add>, %135, %cst_71 [0] : vector<64x256xf32> to vector<256xf32>
      %137 = vector.shape_cast %136 : vector<256xf32> to vector<1x256xf32>
      %cst_72 = arith.constant 6.400000e+01 : f32
      %138 = vector.broadcast %cst_72 : f32 to vector<1x256xf32>
      %139 = arith.divf %137, %138 : vector<1x256xf32>
      %140 = arith.mulf %135, %135 : vector<64x256xf32>
      %cst_73 = arith.constant dense<0.000000e+00> : vector<256xf32>
      %141 = vector.multi_reduction <add>, %140, %cst_73 [0] : vector<64x256xf32> to vector<256xf32>
      %142 = vector.shape_cast %141 : vector<256xf32> to vector<1x256xf32>
      %cst_74 = arith.constant 6.400000e+01 : f32
      %143 = vector.broadcast %cst_74 : f32 to vector<1x256xf32>
      %144 = arith.divf %142, %143 : vector<1x256xf32>
      %145 = arith.mulf %139, %139 : vector<1x256xf32>
      %146 = arith.subf %144, %145 : vector<1x256xf32>
      %cst_75 = arith.constant 9.99999974E-6 : f32
      %147 = vector.broadcast %cst_75 : f32 to vector<1x256xf32>
      %148 = arith.addf %146, %147 : vector<1x256xf32>
      %149 = math.rsqrt %148 : vector<1x256xf32>
      %150 = vector.broadcast %139 : vector<1x256xf32> to vector<64x256xf32>
      %151 = arith.subf %135, %150 : vector<64x256xf32>
      %152 = vector.broadcast %149 : vector<1x256xf32> to vector<64x256xf32>
      %153 = arith.mulf %151, %152 : vector<64x256xf32>
      %154 = vector.broadcast %91 : vector<64x1xf32> to vector<64x256xf32>
      %155 = arith.mulf %153, %154 : vector<64x256xf32>
      %156 = vector.broadcast %93 : vector<64x1xf32> to vector<64x256xf32>
      %157 = arith.addf %155, %156 : vector<64x256xf32>
      %c0_76 = arith.constant 0 : index
      %c0_77 = arith.constant 0 : index
      %158 = vector.load %arg8[%c0_76, %c0_77] : memref<1x64xf32, #tpu.memory_space<vmem>>, vector<1x64xf32>
      %cst_78 = arith.constant dense<0.000000e+00> : vector<1x256xf32>
      %159 = tpu.matmul %158, %157, %cst_78 {dimension_numbers = #tpu.dot_dimension_numbers<[1], [0], [0], [1], [0, 0, 1, 1], [], []>} : vector<1x64xf32>, vector<64x256xf32>, vector<1x256xf32> -> vector<1x256xf32>
      %c0_79 = arith.constant 0 : index
      %c0_80 = arith.constant 0 : index
      %160 = vector.load %arg9[%c0_79, %c0_80] : memref<1x1xf32, #tpu.memory_space<vmem>>, vector<1x1xf32>
      %161 = vector.broadcast %160 : vector<1x1xf32> to vector<1x256xf32>
      %162 = arith.addf %159, %161 : vector<1x256xf32>
      %c0_81 = arith.constant 0 : index
      %163 = arith.index_cast %2 : i32 to index
      %164 = vector.load %arg10[%c0_81, %163] : memref<1x512xf32, #tpu.memory_space<vmem>>, vector<1x256xf32>
      tpu.vector_store %arg10[%c0_81, %163], %162 {strides = array<i32>} : memref<1x512xf32, #tpu.memory_space<vmem>>, vector<1x256xf32>,
    }
    %c2_i32_0 = arith.constant 2 : i32
    return
  }
  func.func @transform_0(%arg0: i32) -> (i32, i32) {
    %c0_i32 = arith.constant 0 : i32
    %c0_i32_0 = arith.constant 0 : i32
    return %arg0, %c0_i32 : i32, i32
  }
  func.func @transform_1(%arg0: i32) -> (i32, i32) {
    %c0_i32 = arith.constant 0 : i32
    %c0_i32_0 = arith.constant 0 : i32
    %c0_i32_1 = arith.constant 0 : i32
    return %c0_i32, %c0_i32_0 : i32, i32
  }
  func.func @transform_2(%arg0: i32) -> (i32, i32, i32) {
    %c0_i32 = arith.constant 0 : i32
    %c0_i32_0 = arith.constant 0 : i32
    %c0_i32_1 = arith.constant 0 : i32
    %c0_i32_2 = arith.constant 0 : i32
    return %c0_i32, %c0_i32_0, %c0_i32_1 : i32, i32, i32
  }
  func.func @transform_3(%arg0: i32) -> (i32, i32, i32) {
    %c0_i32 = arith.constant 0 : i32
    %c0_i32_0 = arith.constant 0 : i32
    %c0_i32_1 = arith.constant 0 : i32
    %c0_i32_2 = arith.constant 0 : i32
    return %c0_i32, %c0_i32_0, %c0_i32_1 : i32, i32, i32
  }
  func.func @transform_4(%arg0: i32) -> (i32, i32, i32) {
    %c0_i32 = arith.constant 0 : i32
    %c0_i32_0 = arith.constant 0 : i32
    %c0_i32_1 = arith.constant 0 : i32
    %c0_i32_2 = arith.constant 0 : i32
    return %c0_i32, %c0_i32_0, %c0_i32_1 : i32, i32, i32
  }
  func.func @transform_5(%arg0: i32) -> (i32, i32, i32) {
    %c0_i32 = arith.constant 0 : i32
    %c0_i32_0 = arith.constant 0 : i32
    %c0_i32_1 = arith.constant 0 : i32
    %c0_i32_2 = arith.constant 0 : i32
    return %c0_i32, %c0_i32_0, %c0_i32_1 : i32, i32, i32
  }
  func.func @transform_6(%arg0: i32) -> (i32, i32, i32) {
    %c0_i32 = arith.constant 0 : i32
    %c0_i32_0 = arith.constant 0 : i32
    %c0_i32_1 = arith.constant 0 : i32
    %c0_i32_2 = arith.constant 0 : i32
    return %c0_i32, %c0_i32_0, %c0_i32_1 : i32, i32, i32
  }
  func.func @transform_7(%arg0: i32) -> (i32, i32) {
    %c0_i32 = arith.constant 0 : i32
    %c0_i32_0 = arith.constant 0 : i32
    %c0_i32_1 = arith.constant 0 : i32
    return %c0_i32, %c0_i32_0 : i32, i32
  }
  func.func @transform_8(%arg0: i32) -> (i32, i32) {
    %c0_i32 = arith.constant 0 : i32
    %c0_i32_0 = arith.constant 0 : i32
    %c0_i32_1 = arith.constant 0 : i32
    return %c0_i32, %c0_i32_0 : i32, i32
  }
  func.func @transform_9(%arg0: i32) -> (i32, i32) {
    %c0_i32 = arith.constant 0 : i32
    %c0_i32_0 = arith.constant 0 : i32
    return %c0_i32, %arg0 : i32, i32
  }
}

</mosaic_0001>

<llo_original>
// kernel: transformer_forward.1
$region0: #{transformer_forward.1}
  #allocation0 [shape = 'u32[]', space=smem, size = 0x4, offset = 0x4, fixed_abs, tag = 'smem constant byte address 0x4 - core index']
  #allocation1 [shape = 'u32[144,128]{1,0:T(1,128)}', space=vmem, size = 0x12000, scoped, tag = 'internal scratch']
  #allocation2 [shape = 'f32[1,1]{1,0:T(1,128)S(1)}', space=vmem, size = 0x200, scoped, tag = 'scoped memory for transformer_forward.1']
  %s0 = inlined_call_operand.vmem [shape: f32[1024,11], index: 0, kind: input, shape index: {}]
  %s1 = inlined_call_operand.vmem [shape: f32[11,128], index: 1, kind: input, shape index: {}]
  %s2 = inlined_call_operand.vmem [shape: f32[1,64,64], index: 2, kind: input, shape index: {}]
  %s3 = inlined_call_operand.vmem [shape: f32[2,128,64], index: 3, kind: input, shape index: {}]
  %s4 = inlined_call_operand.vmem [shape: f32[2,64,128], index: 4, kind: input, shape index: {}]
  %s5 = inlined_call_operand.vmem [shape: f32[2,128,1], index: 5, kind: input, shape index: {}]
  %s6 = inlined_call_operand.vmem [shape: f32[12,64,1], index: 6, kind: input, shape index: {}]
  %s7 = inlined_call_operand.vmem [shape: f32[1,64], index: 7, kind: input, shape index: {}]
  %s8 = inlined_call_operand.<no memory space> [shape: f32[1,1], index: 8, kind: input, shape index: {}]
  %s9 = inlined_call_operand.vmem [shape: f32[1,1024], index: 9, kind: output, shape index: {}]
  %s10 = sld [smem:[#allocation0]]
  $region76: #{transformer_forward.1} parent=0
    _
  %s12 = ssub.s32 1, %s10
  %s13 = scalar_select 0, %s12, %s10
  %v14 = vstv %s8
  %15 = vst [vmem:[#allocation2] sm:$0x1] %v14
  loop: start=0, step=1, limit=4
  $region2: #{transformer_forward.1} parent=0 // loop_pre_header
    _
  $region3: #{transformer_forward.1} parent=0 // loop_header
    %s17 = sphi 0, %s21
    %p18 = scmp.ge.s32.totalorder %s17, 4
    %s27 = sphi 0, %s29
    %s30 = sphi 0, %s27
    %s31 = sphi 0, %s30
    %s47 = sphi 0, %s31
    %s51 = sphi 0, %s51
    %s53 = sphi 0, %s51
    %s54 = sphi 0, %s53
    %s68 = sphi 0, %s54
    %s72 = sphi 0, %s72
    %s74 = sphi 0, %s72
    %s75 = sphi 0, %s74
    %s89 = sphi 0, %s75
    %s93 = sphi 0, %s93
    %s95 = sphi 0, %s93
    %s96 = sphi 0, %s95
    %s110 = sphi 0, %s96
    %s114 = sphi 0, %s114
    %s116 = sphi 0, %s114
    %s117 = sphi 0, %s116
    %s131 = sphi 0, %s117
    %s135 = sphi 0, %s135
    %s137 = sphi 0, %s135
    %s138 = sphi 0, %s137
    %s152 = sphi 0, %s138
    %s156 = sphi 0, %s156
    %s158 = sphi 0, %s156
    %s159 = sphi 0, %s158
    %s173 = sphi 0, %s159
    %s177 = sphi 0, %s177
    %s179 = sphi 0, %s177
    %s180 = sphi 0, %s179
    %s194 = sphi 0, %s180
    %s198 = sphi 0, %s198
    %s200 = sphi 0, %s198
    %s201 = sphi 0, %s200
    %s215 = sphi 0, %s201
    %s221 = sphi 0, %s223
    %s224 = sphi 0, %s221
    %s225 = sphi 0, %s224
    %s241 = sphi 0, %s225
  $region4: #{transformer_forward.1} parent=0 // loop_header_branch
    %20 = sbr.rel (%p18) target = $region8
  $region5: #{transformer_forward.1} parent=0 // loop_body
    %s22 = ssub.s32 %s17, 1
    %s23 = ssub.s32 %s17, 2
    %s24 = sadd.s32 %s17, 1
    %s25 = ssub.s32 %s17, %s24
    %p26 = scmp.eq.s32.totalorder %s25, 0
    %s28 = sadd.s32 %s27, 1
    %s29 = scalar_select %p26, %s27, %s28
    %p32 = pneg %p26
    %p33 = scmp.eq.s32.totalorder %s17, 1
    %p34 = por %p32, %p33
    %p35 = scmp.ne.s32.totalorder %s27, %s30
    %p36 = scmp.eq.s32.totalorder %s17, 0
    %p37 = por %p35, %p36
    %p38 = scmp.ne.s32.totalorder %s27, %s30
    %p39 = scmp.eq.s32.totalorder %s22, 1
    %p40 = por %p38, %p39
    %p41 = scmp.ne.s32.totalorder %s30, %s31
    %p42 = scmp.eq.s32.totalorder %s22, 0
    %p43 = por %p41, %p42
    %p44 = scmp.ne.s32.totalorder %s30, %s31
    %p45 = scmp.eq.s32.totalorder %s23, 1
    %p46 = por %p44, %p45
    %p48 = scmp.ne.s32.totalorder %s31, %s47
    %p49 = scmp.eq.s32.totalorder %s23, 0
    %p50 = por %p48, %p49
    %s52 = sadd.s32 %s51, 1
    %p55 = scmp.eq.s32.totalorder %s17, 1
    %p56 = scmp.ne.s32.totalorder %s51, %s53
    %p57 = scmp.eq.s32.totalorder %s17, 0
    %p58 = por %p56, %p57
    %p59 = scmp.ne.s32.totalorder %s51, %s53
    %p60 = scmp.eq.s32.totalorder %s22, 1
    %p61 = por %p59, %p60
    %p62 = scmp.ne.s32.totalorder %s53, %s54
    %p63 = scmp.eq.s32.totalorder %s22, 0
    %p64 = por %p62, %p63
    %p65 = scmp.ne.s32.totalorder %s53, %s54
    %p66 = scmp.eq.s32.totalorder %s23, 1
    %p67 = por %p65, %p66
    %p69 = scmp.ne.s32.totalorder %s54, %s68
    %p70 = scmp.eq.s32.totalorder %s23, 0
    %p71 = por %p69, %p70
    %s73 = sadd.s32 %s72, 1
    %p76 = scmp.eq.s32.totalorder %s17, 1
    %p77 = scmp.ne.s32.totalorder %s72, %s74
    %p78 = scmp.eq.s32.totalorder %s17, 0
    %p79 = por %p77, %p78
    %p80 = scmp.ne.s32.totalorder %s72, %s74
    %p81 = scmp.eq.s32.totalorder %s22, 1
    %p82 = por %p80, %p81
    %p83 = scmp.ne.s32.totalorder %s74, %s75
    %p84 = scmp.eq.s32.totalorder %s22, 0
    %p85 = por %p83, %p84
    %p86 = scmp.ne.s32.totalorder %s74, %s75
    %p87 = scmp.eq.s32.totalorder %s23, 1
    %p88 = por %p86, %p87
    %p90 = scmp.ne.s32.totalorder %s75, %s89
    %p91 = scmp.eq.s32.totalorder %s23, 0
    %p92 = por %p90, %p91
    %s94 = sadd.s32 %s93, 1
    %p97 = scmp.eq.s32.totalorder %s17, 1
    %p98 = scmp.ne.s32.totalorder %s93, %s95
    %p99 = scmp.eq.s32.totalorder %s17, 0
    %p100 = por %p98, %p99
    %p101 = scmp.ne.s32.totalorder %s93, %s95
    %p102 = scmp.eq.s32.totalorder %s22, 1
    %p103 = por %p101, %p102
    %p104 = scmp.ne.s32.totalorder %s95, %s96
    %p105 = scmp.eq.s32.totalorder %s22, 0
    %p106 = por %p104, %p105
    %p107 = scmp.ne.s32.totalorder %s95, %s96
    %p108 = scmp.eq.s32.totalorder %s23, 1
    %p109 = por %p107, %p108
    %p111 = scmp.ne.s32.totalorder %s96, %s110
    %p112 = scmp.eq.s32.totalorder %s23, 0
    %p113 = por %p111, %p112
    %s115 = sadd.s32 %s114, 1
    %p118 = scmp.eq.s32.totalorder %s17, 1
    %p119 = scmp.ne.s32.totalorder %s114, %s116
    %p120 = scmp.eq.s32.totalorder %s17, 0
    %p121 = por %p119, %p120
    %p122 = scmp.ne.s32.totalorder %s114, %s116
    %p123 = scmp.eq.s32.totalorder %s22, 1
    %p124 = por %p122, %p123
    %p125 = scmp.ne.s32.totalorder %s116, %s117
    %p126 = scmp.eq.s32.totalorder %s22, 0
    %p127 = por %p125, %p126
    %p128 = scmp.ne.s32.totalorder %s116, %s117
    %p129 = scmp.eq.s32.totalorder %s23, 1
    %p130 = por %p128, %p129
    %p132 = scmp.ne.s32.totalorder %s117, %s131
    %p133 = scmp.eq.s32.totalorder %s23, 0
    %p134 = por %p132, %p133
    %s136 = sadd.s32 %s135, 1
    %p139 = scmp.eq.s32.totalorder %s17, 1
    %p140 = scmp.ne.s32.totalorder %s135, %s137
    %p141 = scmp.eq.s32.totalorder %s17, 0
    %p142 = por %p140, %p141
    %p143 = scmp.ne.s32.totalorder %s135, %s137
    %p144 = scmp.eq.s32.totalorder %s22, 1
    %p145 = por %p143, %p144
    %p146 = scmp.ne.s32.totalorder %s137, %s138
    %p147 = scmp.eq.s32.totalorder %s22, 0
    %p148 = por %p146, %p147
    %p149 = scmp.ne.s32.totalorder %s137, %s138
    %p150 = scmp.eq.s32.totalorder %s23, 1
    %p151 = por %p149, %p150
    %p153 = scmp.ne.s32.totalorder %s138, %s152
    %p154 = scmp.eq.s32.totalorder %s23, 0
    %p155 = por %p153, %p154
    %s157 = sadd.s32 %s156, 1
    %p160 = scmp.eq.s32.totalorder %s17, 1
    %p161 = scmp.ne.s32.totalorder %s156, %s158
    %p162 = scmp.eq.s32.totalorder %s17, 0
    %p163 = por %p161, %p162
    %p164 = scmp.ne.s32.totalorder %s156, %s158
    %p165 = scmp.eq.s32.totalorder %s22, 1
    %p166 = por %p164, %p165
    %p167 = scmp.ne.s32.totalorder %s158, %s159
    %p168 = scmp.eq.s32.totalorder %s22, 0
    %p169 = por %p167, %p168
    %p170 = scmp.ne.s32.totalorder %s158, %s159
    %p171 = scmp.eq.s32.totalorder %s23, 1
    %p172 = por %p170, %p171
    %p174 = scmp.ne.s32.totalorder %s159, %s173
    %p175 = scmp.eq.s32.totalorder %s23, 0
    %p176 = por %p174, %p175
    %s178 = sadd.s32 %s177, 1
    %p181 = scmp.eq.s32.totalorder %s17, 1
    %p182 = scmp.ne.s32.totalorder %s177, %s179
    %p183 = scmp.eq.s32.totalorder %s17, 0
    %p184 = por %p182, %p183
    %p185 = scmp.ne.s32.totalorder %s177, %s179
    %p186 = scmp.eq.s32.totalorder %s22, 1
    %p187 = por %p185, %p186
    %p188 = scmp.ne.s32.totalorder %s179, %s180
    %p189 = scmp.eq.s32.totalorder %s22, 0
    %p190 = por %p188, %p189
    %p191 = scmp.ne.s32.totalorder %s179, %s180
    %p192 = scmp.eq.s32.totalorder %s23, 1
    %p193 = por %p191, %p192
    %p195 = scmp.ne.s32.totalorder %s180, %s194
    %p196 = scmp.eq.s32.totalorder %s23, 0
    %p197 = por %p195, %p196
    %s199 = sadd.s32 %s198, 1
    %p202 = scmp.eq.s32.totalorder %s17, 1
    %p203 = scmp.ne.s32.totalorder %s198, %s200
    %p204 = scmp.eq.s32.totalorder %s17, 0
    %p205 = por %p203, %p204
    %p206 = scmp.ne.s32.totalorder %s198, %s200
    %p207 = scmp.eq.s32.totalorder %s22, 1
    %p208 = por %p206, %p207
    %p209 = scmp.ne.s32.totalorder %s200, %s201
    %p210 = scmp.eq.s32.totalorder %s22, 0
    %p211 = por %p209, %p210
    %p212 = scmp.ne.s32.totalorder %s200, %s201
    %p213 = scmp.eq.s32.totalorder %s23, 1
    %p214 = por %p212, %p213
    %p216 = scmp.ne.s32.totalorder %s201, %s215
    %p217 = scmp.eq.s32.totalorder %s23, 0
    %p218 = por %p216, %p217
    %s219 = ssub.s32 %s17, %s24
    %p220 = scmp.eq.s32.totalorder %s219, 0
    %s222 = sadd.s32 %s221, 1
    %s223 = scalar_select %p220, %s221, %s222
    %p226 = pneg %p220
    %p227 = scmp.eq.s32.totalorder %s17, 1
    %p228 = por %p226, %p227
    %p229 = scmp.ne.s32.totalorder %s221, %s224
    %p230 = scmp.eq.s32.totalorder %s17, 0
    %p231 = por %p229, %p230
    %p232 = scmp.ne.s32.totalorder %s221, %s224
    %p233 = scmp.eq.s32.totalorder %s22, 1
    %p234 = por %p232, %p233
    %p235 = scmp.ne.s32.totalorder %s224, %s225
    %p236 = scmp.eq.s32.totalorder %s22, 0
    %p237 = por %p235, %p236
    %p238 = scmp.ne.s32.totalorder %s224, %s225
    %p239 = scmp.eq.s32.totalorder %s23, 1
    %p240 = por %p238, %p239
    %p242 = scmp.ne.s32.totalorder %s225, %s241
    %p243 = scmp.eq.s32.totalorder %s23, 0
    %p244 = por %p242, %p243
    %p245 = scmp.le.s32.totalorder 1, %s17
    %p246 = scmp.lt.s32.totalorder %s17, 3
    %p247 = pnand %p245, %p246
    %p248 = pneg %p247
    // Predicated region
    $region9: #{transformer_forward.1} parent=5 // pred_check
      _
    $region10: #{transformer_forward.1} parent=5 // pred_check_branch
      %250 = sbr.rel (%p247) target = $region12
    $region11: #{transformer_forward.1} parent=5 // pred_region
      %s251 = ssub.s32 %s17, 1
      // Predicated region
      $region13: #{transformer_forward.1} parent=11 // pred_check
        %p252 = pneg %p64
      $region14: #{transformer_forward.1} parent=11 // pred_check_branch
        %254 = sbr.rel (%p252) target = $region16
      $region15: #{transformer_forward.1} parent=11 // pred_region
        _
      $region16: #{transformer_forward.1} parent=11 // pred_fallthru
        _
      // Predicated region
      $region17: #{transformer_forward.1} parent=11 // pred_check
        %p255 = pneg %p85
      $region18: #{transformer_forward.1} parent=11 // pred_check_branch
        %257 = sbr.rel (%p255) target = $region20
      $region19: #{transformer_forward.1} parent=11 // pred_region
        _
      $region20: #{transformer_forward.1} parent=11 // pred_fallthru
        _
      // Predicated region
      $region21: #{transformer_forward.1} parent=11 // pred_check
        %p258 = pneg %p106
      $region22: #{transformer_forward.1} parent=11 // pred_check_branch
        %260 = sbr.rel (%p258) target = $region24
      $region23: #{transformer_forward.1} parent=11 // pred_region
        _
      $region24: #{transformer_forward.1} parent=11 // pred_fallthru
        _
      // Predicated region
      $region25: #{transformer_forward.1} parent=11 // pred_check
        %p261 = pneg %p127
      $region26: #{transformer_forward.1} parent=11 // pred_check_branch
        %263 = sbr.rel (%p261) target = $region28
      $region27: #{transformer_forward.1} parent=11 // pred_region
        _
      $region28: #{transformer_forward.1} parent=11 // pred_fallthru
        _
      // Predicated region
      $region29: #{transformer_forward.1} parent=11 // pred_check
        %p264 = pneg %p148
      $region30: #{transformer_forward.1} parent=11 // pred_check_branch
        %266 = sbr.rel (%p264) target = $region32
      $region31: #{transformer_forward.1} parent=11 // pred_region
        _
      $region32: #{transformer_forward.1} parent=11 // pred_fallthru
        _
      // Predicated region
      $region33: #{transformer_forward.1} parent=11 // pred_check
        %p267 = pneg %p169
      $region34: #{transformer_forward.1} parent=11 // pred_check_branch
        %269 = sbr.rel (%p267) target = $region36
      $region35: #{transformer_forward.1} parent=11 // pred_region
        _
      $region36: #{transformer_forward.1} parent=11 // pred_fallthru
        _
      // Predicated region
      $region37: #{transformer_forward.1} parent=11 // pred_check
        %p270 = pneg %p190
      $region38: #{transformer_forward.1} parent=11 // pred_check_branch
        %272 = sbr.rel (%p270) target = $region40
      $region39: #{transformer_forward.1} parent=11 // pred_region
        _
      $region40: #{transformer_forward.1} parent=11 // pred_fallthru
        _
      // Predicated region
      $region41: #{transformer_forward.1} parent=11 // pred_check
        %p273 = pneg %p211
      $region42: #{transformer_forward.1} parent=11 // pred_check_branch
        %275 = sbr.rel (%p273) target = $region44
      $region43: #{transformer_forward.1} parent=11 // pred_region
        _
      $region44: #{transformer_forward.1} parent=11 // pred_fallthru
        _
    $region12: #{transformer_forward.1} parent=5 // pred_fallthru
      _
    %p276 = scmp.lt.s32.totalorder %s17, 2
    // Predicated region
    $region45: #{transformer_forward.1} parent=5 // pred_check
      %p277 = pneg %p276
    $region46: #{transformer_forward.1} parent=5 // pred_check_branch
      %279 = sbr.rel (%p277) target = $region48
    $region47: #{transformer_forward.1} parent=5 // pred_region
      // Predicated region
      $region49: #{transformer_forward.1} parent=47 // pred_check
        %p280 = pneg %p37
      $region50: #{transformer_forward.1} parent=47 // pred_check_branch
        %282 = sbr.rel (%p280) target = $region52
      $region51: #{transformer_forward.1} parent=47 // pred_region
        %s283 = smul.u32 64, %s17
        %p284 = scmp.lt.s32.totalorder %s283, 127
        %s285 = scalar_select %p284, %s283, 127
        %s286 = smul.addr %s285, 8
        %s287 = scalar_lea.vmem %s0, %s286
        %s288 = smul.u32 64, %s17
      $region52: #{transformer_forward.1} parent=47 // pred_fallthru
        _
    $region48: #{transformer_forward.1} parent=5 // pred_fallthru
      _
    %p289 = scmp.le.s32.totalorder 1, %s17
    %p290 = scmp.lt.s32.totalorder %s17, 3
    %p291 = pnand %p289, %p290
    %p292 = pneg %p291
    // Predicated region
    $region53: #{transformer_forward.1} parent=5 // pred_check
      _
    $region54: #{transformer_forward.1} parent=5 // pred_check_branch
      %294 = sbr.rel (%p291) target = $region56
    $region55: #{transformer_forward.1} parent=5 // pred_region
      %s295 = ssub.s32 %s17, 1
      %s296 = smul.u32 64, %s22
      %p297 = scmp.lt.s32.totalorder %s296, 127
      %s298 = scalar_select %p297, %s296, 127
      %s299 = smul.addr %s298, 8
      %s300 = scalar_lea.vmem %s0, %s299
      %p301 = pneg %p43
      %p302 = pneg %p40
      %p303 = pneg %p64
      %p304 = pneg %p61
      %p305 = pneg %p85
      %p306 = pneg %p82
      %p307 = pneg %p106
      %p308 = pneg %p103
      %p309 = pneg %p127
      %p310 = pneg %p124
      %p311 = pneg %p148
      %p312 = pneg %p145
      %p313 = pneg %p169
      %p314 = pneg %p166
      %p315 = pneg %p190
      %p316 = pneg %p187
      %p317 = pneg %p211
      %p318 = pneg %p208
      %p319 = pneg %p237
      %p320 = pneg %p234
      %s321 = smul.u32 4, %s22
      %p322 = scmp.lt.s32.totalorder %s321, 7
      %s323 = scalar_select %p322, %s321, 7
      %s324 = scalar_lea.vmem %s9, %s323
      %s325 = smul.u32 64, %s22
      %p326 = scmp.lt.s32.totalorder %s325, 127
      %s327 = scalar_select %p326, %s325, 127
      %s328 = smul.addr %s327, 8
      %s329 = scalar_lea.vmem %s0, %s328
      %s330 = smul.u32 64, %s22
      %s331 = smul.u32 4, %s22
      %p332 = scmp.lt.s32.totalorder %s331, 7
      %s333 = scalar_select %p332, %s331, 7
      %s334 = scalar_lea.vmem %s9, %s333
      %s335 = smul.u32 4, %s22
      loop: start=0, step=1, limit=2
      $region57: #{transformer_forward.1} parent=55 // loop_pre_header
        _
      $region58: #{transformer_forward.1} parent=55 // loop_header
        %s337 = sphi 0, %s341
        %p338 = scmp.ge.s32.totalorder %s337, 2
      $region59: #{transformer_forward.1} parent=55 // loop_header_branch
        %340 = sbr.rel (%p338) target = $region63
      $region60: #{transformer_forward.1} parent=55 // loop_body
        %s342 = smul.u32 %s337, 256
        %s343 = scalar_lea.vmem %s329, %s342
        %v344 = vld [vmem:[%s343] sm:$0xff]
        %v345 = vld [vmem:[%s343 + $0x8] sm:$0xff]
        %v346 = vld [vmem:[%s343 + $0x10] sm:$0xff]
        %v347 = vld [vmem:[%s343 + $0x18] sm:$0xff]
        %v348 = vld [vmem:[%s343 + $0x20] sm:$0xff]
        %v349 = vld [vmem:[%s343 + $0x28] sm:$0xff]
        %v350 = vld [vmem:[%s343 + $0x30] sm:$0xff]
        %v351 = vld [vmem:[%s343 + $0x38] sm:$0xff]
        %v352 = vld [vmem:[%s343 + $0x40] sm:$0xff]
        %v353 = vld [vmem:[%s343 + $0x48] sm:$0xff]
        %v354 = vld [vmem:[%s343 + $0x50] sm:$0xff]
        %v355 = vld [vmem:[%s343 + $0x58] sm:$0xff]
        %v356 = vld [vmem:[%s343 + $0x60] sm:$0xff]
        %v357 = vld [vmem:[%s343 + $0x68] sm:$0xff]
        %v358 = vld [vmem:[%s343 + $0x70] sm:$0xff]
        %v359 = vld [vmem:[%s343 + $0x78] sm:$0xff]
        %v360 = vld [vmem:[%s343 + $0x80] sm:$0xff]
        %v361 = vld [vmem:[%s343 + $0x88] sm:$0xff]
        %v362 = vld [vmem:[%s343 + $0x90] sm:$0xff]
        %v363 = vld [vmem:[%s343 + $0x98] sm:$0xff]
        %v364 = vld [vmem:[%s343 + $0xa0] sm:$0xff]
        %v365 = vld [vmem:[%s343 + $0xa8] sm:$0xff]
        %v366 = vld [vmem:[%s343 + $0xb0] sm:$0xff]
        %v367 = vld [vmem:[%s343 + $0xb8] sm:$0xff]
        %v368 = vld [vmem:[%s343 + $0xc0] sm:$0xff]
        %v369 = vld [vmem:[%s343 + $0xc8] sm:$0xff]
        %v370 = vld [vmem:[%s343 + $0xd0] sm:$0xff]
        %v371 = vld [vmem:[%s343 + $0xd8] sm:$0xff]
        %v372 = vld [vmem:[%s343 + $0xe0] sm:$0xff]
        %v373 = vld [vmem:[%s343 + $0xe8] sm:$0xff]
        %v374 = vld [vmem:[%s343 + $0xf0] sm:$0xff]
        %v375 = vld [vmem:[%s343 + $0xf8] sm:$0xff]
        %v376 = vld [vmem:[%s1] sm:$0xff]
        %v377 = vld [vmem:[%s1 + $0x8] sm:$0x7]
        %vm378 = vcmask 89088
        %v380 = vsel %vm378, %v344, 0
        %v383 = vsel %vm378, %v345, 0
        %v386 = vsel %vm378, %v346, 0
        %v389 = vsel %vm378, %v347, 0
        %v392 = vsel %vm378, %v348, 0
        %v395 = vsel %vm378, %v349, 0
        %v398 = vsel %vm378, %v350, 0
        %v401 = vsel %vm378, %v351, 0
        %v404 = vsel %vm378, %v352, 0
        %v407 = vsel %vm378, %v353, 0
        %v410 = vsel %vm378, %v354, 0
        %v413 = vsel %vm378, %v355, 0
        %v416 = vsel %vm378, %v356, 0
        %v419 = vsel %vm378, %v357, 0
        %v422 = vsel %vm378, %v358, 0
        %v425 = vsel %vm378, %v359, 0
        %v428 = vsel %vm378, %v360, 0
        %v431 = vsel %vm378, %v361, 0
        %v434 = vsel %vm378, %v362, 0
        %v437 = vsel %vm378, %v363, 0
        %v440 = vsel %vm378, %v364, 0
        %v443 = vsel %vm378, %v365, 0
        %v446 = vsel %vm378, %v366, 0
        %v449 = vsel %vm378, %v367, 0
        %v452 = vsel %vm378, %v368, 0
        %v455 = vsel %vm378, %v369, 0
        %v458 = vsel %vm378, %v370, 0
        %v461 = vsel %vm378, %v371, 0
        %v464 = vsel %vm378, %v372, 0
        %v467 = vsel %vm378, %v373, 0
        %v470 = vsel %vm378, %v374, 0
        %v473 = vsel %vm378, %v375, 0
        %vm475 = vcmask 1042432
        %v477 = vsel %vm475, %v377, 0
        %479 = vmatprep.subr.mxu0 0.0
        %480 = vmatpush1.msra.mxu0 %v376
        %481 = vmatprep.subr.mxu0 0.0
        %482 = vmatpush1.msra.mxu0 %v477
        %483 = vmatprep.subr.mxu0 0.0
        %484 = vmatpush1.msra.mxu0 0.0
        %485 = vmatprep.subr.mxu0 0.0
        %486 = vmatpush1.msra.mxu0 0.0
        %487 = vmatprep.subr.mxu0 0.0
        %488 = vmatpush1.msra.mxu0 0.0
        %489 = vmatprep.subr.mxu0 0.0
        %490 = vmatpush1.msra.mxu0 0.0
        %491 = vmatprep.subr.mxu0 0.0
        %492 = vmatpush1.msra.mxu0 0.0
        %493 = vmatprep.subr.mxu0 0.0
        %494 = vmatpush1.msra.mxu0 0.0
        %495 = vmatprep.subr.mxu0 0.0
        %496 = vmatpush1.msra.mxu0 0.0
        %497 = vmatprep.subr.mxu0 0.0
        %498 = vmatpush1.msra.mxu0 0.0
        %499 = vmatprep.subr.mxu0 0.0
        %500 = vmatpush1.msra.mxu0 0.0
        %501 = vmatprep.subr.mxu0 0.0
        %502 = vmatpush1.msra.mxu0 0.0
        %503 = vmatprep.subr.mxu0 0.0
        %504 = vmatpush1.msra.mxu0 0.0
        %505 = vmatprep.subr.mxu0 0.0
        %506 = vmatpush1.msra.mxu0 0.0
        %507 = vmatprep.subr.mxu0 0.0
        %508 = vmatpush1.msra.mxu0 0.0
        %509 = vmatprep.subr.mxu0 0.0
        %510 = vmatpush1.msra.mxu0 0.0
        %511 = vmatprep.subr.mxu0 0.0
        %512 = vmatpush1.msra.mxu0 0.0
        %513 = vmatprep.subr.mxu0 0.0
        %514 = vmatpush1.msra.mxu0 0.0
        %515 = vmatprep.subr.mxu0 0.0
        %516 = vmatpush1.msra.mxu0 0.0
        %517 = vmatprep.subr.mxu0 0.0
        %518 = vmatpush1.msra.mxu0 0.0
        %519 = vmatprep.subr.mxu0 0.0
        %520 = vmatpush1.msra.mxu0 0.0
        %521 = vmatprep.subr.mxu0 0.0
        %522 = vmatpush1.msra.mxu0 0.0
        %523 = vmatprep.subr.mxu0 0.0
        %524 = vmatpush1.msra.mxu0 0.0
        %525 = vmatprep.subr.mxu0 0.0
        %526 = vmatpush1.msra.mxu0 0.0
        %527 = vmatprep.subr.mxu0 0.0
        %528 = vmatpush1.msra.mxu0 0.0
        %529 = vmatprep.subr.mxu0 0.0
        %530 = vmatpush1.msra.mxu0 0.0
        %531 = vmatprep.subr.mxu0 0.0
        %532 = vmatpush1.msra.mxu0 0.0
        %533 = vmatprep.subr.mxu0 0.0
        %534 = vmatpush1.msra.mxu0 0.0
        %535 = vmatprep.subr.mxu0 0.0
        %536 = vmatpush1.msra.mxu0 0.0
        %537 = vmatprep.subr.mxu0 0.0
        %538 = vmatpush1.msra.mxu0 0.0
        %539 = vmatprep.subr.mxu0 0.0
        %540 = vmatpush1.msra.mxu0 0.0
        %541 = vmatprep.subr.mxu0 0.0
        %542 = vmatpush1.msra.mxu0 0.0
        %543 = vmatprep.mubr.f32.mxu0 0.0
        %544 = vmatmul.mubr.f32.gmra.mrb[0].mxu0 %v380
        %v545 = vpop.f32.mrb[0].mxu0
        %v546 = vadd.f32 0.0, %v545
        %v547 = vpop.f32.mrb[0].mxu0
        %548 = vmatprep.mubr.f32.mxu0 0.0
        %549 = vmatmul.mubr.f32.gmra.mrb[0].mxu0 %v383
        %v550 = vpop.f32.mrb[0].mxu0
        %v551 = vadd.f32 0.0, %v550
        %v552 = vpop.f32.mrb[0].mxu0
        %553 = vmatprep.mubr.f32.mxu0 0.0
        %554 = vmatmul.mubr.f32.gmra.mrb[0].mxu0 %v386
        %v555 = vpop.f32.mrb[0].mxu0
        %v556 = vadd.f32 0.0, %v555
        %v557 = vpop.f32.mrb[0].mxu0
        %558 = vmatprep.mubr.f32.mxu0 0.0
        %559 = vmatmul.mubr.f32.gmra.mrb[0].mxu0 %v389
        %v560 = vpop.f32.mrb[0].mxu0
        %v561 = vadd.f32 0.0, %v560
        %v562 = vpop.f32.mrb[0].mxu0
        %563 = vmatprep.mubr.f32.mxu0 0.0
        %564 = vmatmul.mubr.f32.gmra.mrb[0].mxu0 %v392
        %v565 = vpop.f32.mrb[0].mxu0
        %v566 = vadd.f32 0.0, %v565
        %v567 = vpop.f32.mrb[0].mxu0
        %568 = vmatprep.mubr.f32.mxu0 0.0
        %569 = vmatmul.mubr.f32.gmra.mrb[0].mxu0 %v395
        %v570 = vpop.f32.mrb[0].mxu0
        %v571 = vadd.f32 0.0, %v570
        %v572 = vpop.f32.mrb[0].mxu0
        %573 = vmatprep.mubr.f32.mxu0 0.0
        %574 = vmatmul.mubr.f32.gmra.mrb[0].mxu0 %v398
        %v575 = vpop.f32.mrb[0].mxu0
        %v576 = vadd.f32 0.0, %v575
        %v577 = vpop.f32.mrb[0].mxu0
        %578 = vmatprep.mubr.f32.mxu0 0.0
        %579 = vmatmul.mubr.f32.gmra.mrb[0].mxu0 %v401
        %v580 = vpop.f32.mrb[0].mxu0
        %v581 = vadd.f32 0.0, %v580
        %v582 = vpop.f32.mrb[0].mxu0
        %583 = vmatprep.mubr.f32.mxu0 0.0
        %584 = vmatmul.mubr.f32.gmra.mrb[0].mxu0 %v404
        %v585 = vpop.f32.mrb[0].mxu0
        %v586 = vadd.f32 0.0, %v585
        %v587 = vpop.f32.mrb[0].mxu0
        %588 = vmatprep.mubr.f32.mxu0 0.0
        %589 = vmatmul.mubr.f32.gmra.mrb[0].mxu0 %v407
        %v590 = vpop.f32.mrb[0].mxu0
        %v591 = vadd.f32 0.0, %v590
        %v592 = vpop.f32.mrb[0].mxu0
        %593 = vmatprep.mubr.f32.mxu0 0.0
        %594 = vmatmul.mubr.f32.gmra.mrb[0].mxu0 %v410
        %v595 = vpop.f32.mrb[0].mxu0
        %v596 = vadd.f32 0.0, %v595
        %v597 = vpop.f32.mrb[0].mxu0
        %598 = vmatprep.mubr.f32.mxu0 0.0
        %599 = vmatmul.mubr.f32.gmra.mrb[0].mxu0 %v413
        %v600 = vpop.f32.mrb[0].mxu0
        %v601 = vadd.f32 0.0, %v600
        %v602 = vpop.f32.mrb[0].mxu0
        %603 = vmatprep.mubr.f32.mxu0 0.0
        %604 = vmatmul.mubr.f32.gmra.mrb[0].mxu0 %v416
        %v605 = vpop.f32.mrb[0].mxu0
        %v606 = vadd.f32 0.0, %v605
        %v607 = vpop.f32.mrb[0].mxu0
        %608 = vmatprep.mubr.f32.mxu0 0.0
        %609 = vmatmul.mubr.f32.gmra.mrb[0].mxu0 %v419
        %v610 = vpop.f32.mrb[0].mxu0
        %v611 = vadd.f32 0.0, %v610
        %v612 = vpop.f32.mrb[0].mxu0
        %613 = vmatprep.mubr.f32.mxu0 0.0
        %614 = vmatmul.mubr.f32.gmra.mrb[0].mxu0 %v422
        %v615 = vpop.f32.mrb[0].mxu0
        %v616 = vadd.f32 0.0, %v615
        %v617 = vpop.f32.mrb[0].mxu0
        %618 = vmatprep.mubr.f32.mxu0 0.0
        %619 = vmatmul.mubr.f32.gmra.mrb[0].mxu0 %v425
        %v620 = vpop.f32.mrb[0].mxu0
        %v621 = vadd.f32 0.0, %v620
        %v622 = vpop.f32.mrb[0].mxu0
        %623 = vmatprep.mubr.f32.mxu0 0.0
        %624 = vmatmul.mubr.f32.gmra.mrb[0].mxu0 %v428
        %v625 = vpop.f32.mrb[0].mxu0
        %v626 = vadd.f32 0.0, %v625
        %v627 = vpop.f32.mrb[0].mxu0
        %628 = vmatprep.mubr.f32.mxu0 0.0
        %629 = vmatmul.mubr.f32.gmra.mrb[0].mxu0 %v431
        %v630 = vpop.f32.mrb[0].mxu0
        %v631 = vadd.f32 0.0, %v630
        %v632 = vpop.f32.mrb[0].mxu0
        %633 = vmatprep.mubr.f32.mxu0 0.0
        %634 = vmatmul.mubr.f32.gmra.mrb[0].mxu0 %v434
        %v635 = vpop.f32.mrb[0].mxu0
        %v636 = vadd.f32 0.0, %v635
        %v637 = vpop.f32.mrb[0].mxu0
        %638 = vmatprep.mubr.f32.mxu0 0.0
        %639 = vmatmul.mubr.f32.gmra.mrb[0].mxu0 %v437
        %v640 = vpop.f32.mrb[0].mxu0
        %v641 = vadd.f32 0.0, %v640
        %v642 = vpop.f32.mrb[0].mxu0
        %643 = vmatprep.mubr.f32.mxu0 0.0
        %644 = vmatmul.mubr.f32.gmra.mrb[0].mxu0 %v440
        %v645 = vpop.f32.mrb[0].mxu0
        %v646 = vadd.f32 0.0, %v645
        %v647 = vpop.f32.mrb[0].mxu0
        %648 = vmatprep.mubr.f32.mxu0 0.0
        %649 = vmatmul.mubr.f32.gmra.mrb[0].mxu0 %v443
        %v650 = vpop.f32.mrb[0].mxu0
        %v651 = vadd.f32 0.0, %v650
        %v652 = vpop.f32.mrb[0].mxu0
        %653 = vmatprep.mubr.f32.mxu0 0.0
        %654 = vmatmul.mubr.f32.gmra.mrb[0].mxu0 %v446
        %v655 = vpop.f32.mrb[0].mxu0
        %v656 = vadd.f32 0.0, %v655
        %v657 = vpop.f32.mrb[0].mxu0
        %658 = vmatprep.mubr.f32.mxu0 0.0
        %659 = vmatmul.mubr.f32.gmra.mrb[0].mxu0 %v449
        %v660 = vpop.f32.mrb[0].mxu0
        %v661 = vadd.f32 0.0, %v660
        %v662 = vpop.f32.mrb[0].mxu0
        %663 = vmatprep.mubr.f32.mxu0 0.0
        %664 = vmatmul.mubr.f32.gmra.mrb[0].mxu0 %v452
        %v665 = vpop.f32.mrb[0].mxu0
        %v666 = vadd.f32 0.0, %v665
        %v667 = vpop.f32.mrb[0].mxu0
        %668 = vmatprep.mubr.f32.mxu0 0.0
        %669 = vmatmul.mubr.f32.gmra.mrb[0].mxu0 %v455
        %v670 = vpop.f32.mrb[0].mxu0
        %v671 = vadd.f32 0.0, %v670
        %v672 = vpop.f32.mrb[0].mxu0
        %673 = vmatprep.mubr.f32.mxu0 0.0
        %674 = vmatmul.mubr.f32.gmra.mrb[0].mxu0 %v458
        %v675 = vpop.f32.mrb[0].mxu0
        %v676 = vadd.f32 0.0, %v675
        %v677 = vpop.f32.mrb[0].mxu0
        %678 = vmatprep.mubr.f32.mxu0 0.0
        %679 = vmatmul.mubr.f32.gmra.mrb[0].mxu0 %v461
        %v680 = vpop.f32.mrb[0].mxu0
        %v681 = vadd.f32 0.0, %v680
        %v682 = vpop.f32.mrb[0].mxu0
        %683 = vmatprep.mubr.f32.mxu0 0.0
        %684 = vmatmul.mubr.f32.gmra.mrb[0].mxu0 %v464
        %v685 = vpop.f32.mrb[0].mxu0
        %v686 = vadd.f32 0.0, %v685
        %v687 = vpop.f32.mrb[0].mxu0
        %688 = vmatprep.mubr.f32.mxu0 0.0
        %689 = vmatmul.mubr.f32.gmra.mrb[0].mxu0 %v467
        %v690 = vpop.f32.mrb[0].mxu0
        %v691 = vadd.f32 0.0, %v690
        %v692 = vpop.f32.mrb[0].mxu0
        %693 = vmatprep.mubr.f32.mxu0 0.0
        %694 = vmatmul.mubr.f32.gmra.mrb[0].mxu0 %v470
        %v695 = vpop.f32.mrb[0].mxu0
        %v696 = vadd.f32 0.0, %v695
        %v697 = vpop.f32.mrb[0].mxu0
        %698 = vmatprep.mubr.f32.mxu0 0.0
        %699 = vmatmul.mubr.f32.gmra.mrb[0].mxu0 %v473
        %v700 = vpop.f32.mrb[0].mxu0
        %v701 = vadd.f32 0.0, %v700
        %v702 = vpop.f32.mrb[0].mxu0
        %703 = vdwg.mxu0
        %704 = vxpose.xlu0.b32.start [1/16] %v546, 128
        %705 = vxpose.xlu0.b32.cont [2/16] %v551, 128
        %706 = vxpose.xlu0.b32.cont [3/16] %v556, 128
        %707 = vxpose.xlu0.b32.cont [4/16] %v561, 128
        %708 = vxpose.xlu0.b32.cont [5/16] %v566, 128
        %709 = vxpose.xlu0.b32.cont [6/16] %v571, 128
        %710 = vxpose.xlu0.b32.cont [7/16] %v576, 128
        %711 = vxpose.xlu0.b32.cont [8/16] %v581, 128
        %712 = vxpose.xlu0.b32.cont [9/16] %v586, 128
        %713 = vxpose.xlu0.b32.cont [10/16] %v591, 128
        %714 = vxpose.xlu0.b32.cont [11/16] %v596, 128
        %715 = vxpose.xlu0.b32.cont [12/16] %v601, 128
        %716 = vxpose.xlu0.b32.cont [13/16] %v606, 128
        %717 = vxpose.xlu0.b32.cont [14/16] %v611, 128
        %718 = vxpose.xlu0.b32.cont [15/16] %v616, 128
        %719 = vxpose.xlu0.b32.end [16/16] %v621, 128
        %v720 = vpop.trf.xlu0
        %v721 = vpop.trf.xlu0
        %v722 = vpop.trf.xlu0
        %v723 = vpop.trf.xlu0
        %v724 = vpop.trf.xlu0
        %v725 = vpop.trf.xlu0
        %v726 = vpop.trf.xlu0
        %v727 = vpop.trf.xlu0
        %v728 = vpop.trf.xlu0
        %v729 = vpop.trf.xlu0
        %v730 = vpop.trf.xlu0
        %v731 = vpop.trf.xlu0
        %v732 = vpop.trf.xlu0
        %v733 = vpop.trf.xlu0
        %v734 = vpop.trf.xlu0
        %v735 = vpop.trf.xlu0
        %736 = vxpose.xlu0.b32.start [1/16] %v626, 128
        %737 = vxpose.xlu0.b32.cont [2/16] %v631, 128
        %738 = vxpose.xlu0.b32.cont [3/16] %v636, 128
        %739 = vxpose.xlu0.b32.cont [4/16] %v641, 128
        %740 = vxpose.xlu0.b32.cont [5/16] %v646, 128
        %741 = vxpose.xlu0.b32.cont [6/16] %v651, 128
        %742 = vxpose.xlu0.b32.cont [7/16] %v656, 128
        %743 = vxpose.xlu0.b32.cont [8/16] %v661, 128
        %744 = vxpose.xlu0.b32.cont [9/16] %v666, 128
        %745 = vxpose.xlu0.b32.cont [10/16] %v671, 128
        %746 = vxpose.xlu0.b32.cont [11/16] %v676, 128
        %747 = vxpose.xlu0.b32.cont [12/16] %v681, 128
        %748 = vxpose.xlu0.b32.cont [13/16] %v686, 128
        %749 = vxpose.xlu0.b32.cont [14/16] %v691, 128
        %750 = vxpose.xlu0.b32.cont [15/16] %v696, 128
        %751 = vxpose.xlu0.b32.end [16/16] %v701, 128
        %v752 = vpop.trf.xlu0
        %v753 = vpop.trf.xlu0
        %v754 = vpop.trf.xlu0
        %v755 = vpop.trf.xlu0
        %v756 = vpop.trf.xlu0
        %v757 = vpop.trf.xlu0
        %v758 = vpop.trf.xlu0
        %v759 = vpop.trf.xlu0
        %v760 = vpop.trf.xlu0
        %v761 = vpop.trf.xlu0
        %v762 = vpop.trf.xlu0
        %v763 = vpop.trf.xlu0
        %v764 = vpop.trf.xlu0
        %v765 = vpop.trf.xlu0
        %v766 = vpop.trf.xlu0
        %v767 = vpop.trf.xlu0
        %v768 = vld [vmem:[%s6] sm:$0xff]
        %v769 = vld [vmem:[%s6 + $0x8] sm:$0xff]
        %v770 = vld [vmem:[%s6 + $0x10] sm:$0xff]
        %v771 = vld [vmem:[%s6 + $0x18] sm:$0xff]
        %v772 = vld [vmem:[%s6 + $0x20] sm:$0xff]
        %v773 = vld [vmem:[%s6 + $0x28] sm:$0xff]
        %v774 = vld [vmem:[%s6 + $0x30] sm:$0xff]
        %v775 = vld [vmem:[%s6 + $0x38] sm:$0xff]
        %s776 = scalar_lea.vmem %s6, 64
        %v777 = vld [vmem:[%s776] sm:$0xff]
        %v778 = vld [vmem:[%s776 + $0x8] sm:$0xff]
        %v779 = vld [vmem:[%s776 + $0x10] sm:$0xff]
        %v780 = vld [vmem:[%s776 + $0x18] sm:$0xff]
        %v781 = vld [vmem:[%s776 + $0x20] sm:$0xff]
        %v782 = vld [vmem:[%s776 + $0x28] sm:$0xff]
        %v783 = vld [vmem:[%s776 + $0x30] sm:$0xff]
        %v784 = vld [vmem:[%s776 + $0x38] sm:$0xff]
        %s785 = scalar_lea.vmem %s6, 128
        %v786 = vld [vmem:[%s785] sm:$0xff]
        %v787 = vld [vmem:[%s785 + $0x8] sm:$0xff]
        %v788 = vld [vmem:[%s785 + $0x10] sm:$0xff]
        %v789 = vld [vmem:[%s785 + $0x18] sm:$0xff]
        %v790 = vld [vmem:[%s785 + $0x20] sm:$0xff]
        %v791 = vld [vmem:[%s785 + $0x28] sm:$0xff]
        %v792 = vld [vmem:[%s785 + $0x30] sm:$0xff]
        %v793 = vld [vmem:[%s785 + $0x38] sm:$0xff]
        %s794 = scalar_lea.vmem %s6, 192
        %v795 = vld [vmem:[%s794] sm:$0xff]
        %v796 = vld [vmem:[%s794 + $0x8] sm:$0xff]
        %v797 = vld [vmem:[%s794 + $0x10] sm:$0xff]
        %v798 = vld [vmem:[%s794 + $0x18] sm:$0xff]
        %v799 = vld [vmem:[%s794 + $0x20] sm:$0xff]
        %v800 = vld [vmem:[%s794 + $0x28] sm:$0xff]
        %v801 = vld [vmem:[%s794 + $0x30] sm:$0xff]
        %v802 = vld [vmem:[%s794 + $0x38] sm:$0xff]
        %s803 = scalar_lea.vmem %s6, 256
        %v804 = vld [vmem:[%s803] sm:$0xff]
        %v805 = vld [vmem:[%s803 + $0x8] sm:$0xff]
        %v806 = vld [vmem:[%s803 + $0x10] sm:$0xff]
        %v807 = vld [vmem:[%s803 + $0x18] sm:$0xff]
        %v808 = vld [vmem:[%s803 + $0x20] sm:$0xff]
        %v809 = vld [vmem:[%s803 + $0x28] sm:$0xff]
        %v810 = vld [vmem:[%s803 + $0x30] sm:$0xff]
        %v811 = vld [vmem:[%s803 + $0x38] sm:$0xff]
        %s812 = scalar_lea.vmem %s6, 320
        %v813 = vld [vmem:[%s812] sm:$0xff]
        %v814 = vld [vmem:[%s812 + $0x8] sm:$0xff]
        %v815 = vld [vmem:[%s812 + $0x10] sm:$0xff]
        %v816 = vld [vmem:[%s812 + $0x18] sm:$0xff]
        %v817 = vld [vmem:[%s812 + $0x20] sm:$0xff]
        %v818 = vld [vmem:[%s812 + $0x28] sm:$0xff]
        %v819 = vld [vmem:[%s812 + $0x30] sm:$0xff]
        %v820 = vld [vmem:[%s812 + $0x38] sm:$0xff]
        %822 = vset.pattern.permute.xlu0 0
        %823 = vperm.xlu0 %822, %v768
        %v824 = vpop.permute.xlu0 %823
        %827 = vset.pattern.permute.xlu0 0
        %828 = vperm.xlu0 %827, %v769
        %v829 = vpop.permute.xlu0 %828
        %832 = vset.pattern.permute.xlu0 0
        %833 = vperm.xlu0 %832, %v770
        %v834 = vpop.permute.xlu0 %833
        %837 = vset.pattern.permute.xlu0 0
        %838 = vperm.xlu0 %837, %v771
        %v839 = vpop.permute.xlu0 %838
        %842 = vset.pattern.permute.xlu0 0
        %843 = vperm.xlu0 %842, %v772
        %v844 = vpop.permute.xlu0 %843
        %847 = vset.pattern.permute.xlu0 0
        %848 = vperm.xlu0 %847, %v773
        %v849 = vpop.permute.xlu0 %848
        %852 = vset.pattern.permute.xlu0 0
        %853 = vperm.xlu0 %852, %v774
        %v854 = vpop.permute.xlu0 %853
        %857 = vset.pattern.permute.xlu0 0
        %858 = vperm.xlu0 %857, %v775
        %v859 = vpop.permute.xlu0 %858
        %v861 = vadd.f32 %v720, %v824
        %v862 = vadd.f32 %v752, %v824
        %v863 = vadd.f32 %v721, %v829
        %v864 = vadd.f32 %v753, %v829
        %v865 = vadd.f32 %v722, %v834
        %v866 = vadd.f32 %v754, %v834
        %v867 = vadd.f32 %v723, %v839
        %v868 = vadd.f32 %v755, %v839
        %v869 = vadd.f32 %v724, %v844
        %v870 = vadd.f32 %v756, %v844
        %v871 = vadd.f32 %v725, %v849
        %v872 = vadd.f32 %v757, %v849
        %v873 = vadd.f32 %v726, %v854
        %v874 = vadd.f32 %v758, %v854
        %v875 = vadd.f32 %v727, %v859
        %v876 = vadd.f32 %v759, %v859
        %v877 = vadd.f32 %v861, %v863
        %v878 = vadd.f32 %v877, %v865
        %v879 = vadd.f32 %v878, %v867
        %v880 = vadd.f32 %v879, %v869
        %v881 = vadd.f32 %v880, %v871
        %v882 = vadd.f32 %v881, %v873
        %v883 = vadd.f32 %v882, %v875
        %v884 = vrot.slane %v883, 4
        %v885 = vadd.f32 %v883, %v884
        %v886 = vrot.slane %v885, 2
        %v887 = vadd.f32 %v885, %v886
        %v888 = vrot.slane %v887, 1
        %v889 = vadd.f32 %v887, %v888
        %v890 = vadd.f32 %v862, %v864
        %v891 = vadd.f32 %v890, %v866
        %v892 = vadd.f32 %v891, %v868
        %v893 = vadd.f32 %v892, %v870
        %v894 = vadd.f32 %v893, %v872
        %v895 = vadd.f32 %v894, %v874
        %v896 = vadd.f32 %v895, %v876
        %v897 = vrot.slane %v896, 4
        %v898 = vadd.f32 %v896, %v897
        %v899 = vrot.slane %v898, 2
        %v900 = vadd.f32 %v898, %v899
        %v901 = vrot.slane %v900, 1
        %v902 = vadd.f32 %v900, %v901
        %v903 = vrcp.pop 64.0
        %v904 = vmul.f32 %v889, %v903
        %v905 = vmul.f32 %v902, %v903
        %v906 = vmul.f32 %v861, %v861
        %v907 = vmul.f32 %v862, %v862
        %v908 = vmul.f32 %v863, %v863
        %v909 = vmul.f32 %v864, %v864
        %v910 = vmul.f32 %v865, %v865
        %v911 = vmul.f32 %v866, %v866
        %v912 = vmul.f32 %v867, %v867
        %v913 = vmul.f32 %v868, %v868
        %v914 = vmul.f32 %v869, %v869
        %v915 = vmul.f32 %v870, %v870
        %v916 = vmul.f32 %v871, %v871
        %v917 = vmul.f32 %v872, %v872
        %v918 = vmul.f32 %v873, %v873
        %v919 = vmul.f32 %v874, %v874
        %v920 = vmul.f32 %v875, %v875
        %v921 = vmul.f32 %v876, %v876
        %v922 = vadd.f32 %v906, %v908
        %v923 = vadd.f32 %v922, %v910
        %v924 = vadd.f32 %v923, %v912
        %v925 = vadd.f32 %v924, %v914
        %v926 = vadd.f32 %v925, %v916
        %v927 = vadd.f32 %v926, %v918
        %v928 = vadd.f32 %v927, %v920
        %v929 = vrot.slane %v928, 4
        %v930 = vadd.f32 %v928, %v929
        %v931 = vrot.slane %v930, 2
        %v932 = vadd.f32 %v930, %v931
        %v933 = vrot.slane %v932, 1
        %v934 = vadd.f32 %v932, %v933
        %v935 = vadd.f32 %v907, %v909
        %v936 = vadd.f32 %v935, %v911
        %v937 = vadd.f32 %v936, %v913
        %v938 = vadd.f32 %v937, %v915
        %v939 = vadd.f32 %v938, %v917
        %v940 = vadd.f32 %v939, %v919
        %v941 = vadd.f32 %v940, %v921
        %v942 = vrot.slane %v941, 4
        %v943 = vadd.f32 %v941, %v942
        %v944 = vrot.slane %v943, 2
        %v945 = vadd.f32 %v943, %v944
        %v946 = vrot.slane %v945, 1
        %v947 = vadd.f32 %v945, %v946
        %v948 = vmul.f32 %v934, %v903
        %v949 = vmul.f32 %v947, %v903
        %v950 = vmul.f32 %v904, %v904
        %v951 = vmul.f32 %v905, %v905
        %v952 = vsub.f32 %v948, %v950
        %v953 = vsub.f32 %v949, %v951
        %v954 = vadd.f32 %v952, 1e-05
        %v955 = vadd.f32 %v953, 1e-05
        %v956 = vrsqrt.pop %v954
        %v957 = vrsqrt.pop %v955
        %v958 = vsub.f32 %v861, %v904
        %v959 = vsub.f32 %v862, %v905
        %v960 = vsub.f32 %v863, %v904
        %v961 = vsub.f32 %v864, %v905
        %v962 = vsub.f32 %v865, %v904
        %v963 = vsub.f32 %v866, %v905
        %v964 = vsub.f32 %v867, %v904
        %v965 = vsub.f32 %v868, %v905
        %v966 = vsub.f32 %v869, %v904
        %v967 = vsub.f32 %v870, %v905
        %v968 = vsub.f32 %v871, %v904
        %v969 = vsub.f32 %v872, %v905
        %v970 = vsub.f32 %v873, %v904
        %v971 = vsub.f32 %v874, %v905
        %v972 = vsub.f32 %v875, %v904
        %v973 = vsub.f32 %v876, %v905
        %v974 = vmul.f32 %v958, %v956
        %v975 = vmul.f32 %v959, %v957
        %v976 = vmul.f32 %v960, %v956
        %v977 = vmul.f32 %v961, %v957
        %v978 = vmul.f32 %v962, %v956
        %v979 = vmul.f32 %v963, %v957
        %v980 = vmul.f32 %v964, %v956
        %v981 = vmul.f32 %v965, %v957
        %v982 = vmul.f32 %v966, %v956
        %v983 = vmul.f32 %v967, %v957
        %v984 = vmul.f32 %v968, %v956
        %v985 = vmul.f32 %v969, %v957
        %v986 = vmul.f32 %v970, %v956
        %v987 = vmul.f32 %v971, %v957
        %v988 = vmul.f32 %v972, %v956
        %v989 = vmul.f32 %v973, %v957
        %991 = vset.pattern.permute.xlu0 0
        %992 = vperm.xlu0 %991, %v786
        %v993 = vpop.permute.xlu0 %992
        %996 = vset.pattern.permute.xlu0 0
        %997 = vperm.xlu0 %996, %v787
        %v998 = vpop.permute.xlu0 %997
        %1001 = vset.pattern.permute.xlu0 0
        %1002 = vperm.xlu0 %1001, %v788
        %v1003 = vpop.permute.xlu0 %1002
        %1006 = vset.pattern.permute.xlu0 0
        %1007 = vperm.xlu0 %1006, %v789
        %v1008 = vpop.permute.xlu0 %1007
        %1011 = vset.pattern.permute.xlu0 0
        %1012 = vperm.xlu0 %1011, %v790
        %v1013 = vpop.permute.xlu0 %1012
        %1016 = vset.pattern.permute.xlu0 0
        %1017 = vperm.xlu0 %1016, %v791
        %v1018 = vpop.permute.xlu0 %1017
        %1021 = vset.pattern.permute.xlu0 0
        %1022 = vperm.xlu0 %1021, %v792
        %v1023 = vpop.permute.xlu0 %1022
        %1026 = vset.pattern.permute.xlu0 0
        %1027 = vperm.xlu0 %1026, %v793
        %v1028 = vpop.permute.xlu0 %1027
        %v1030 = vmul.f32 %v974, %v993
        %v1031 = vmul.f32 %v975, %v993
        %v1032 = vmul.f32 %v976, %v998
        %v1033 = vmul.f32 %v977, %v998
        %v1034 = vmul.f32 %v978, %v1003
        %v1035 = vmul.f32 %v979, %v1003
        %v1036 = vmul.f32 %v980, %v1008
        %v1037 = vmul.f32 %v981, %v1008
        %v1038 = vmul.f32 %v982, %v1013
        %v1039 = vmul.f32 %v983, %v1013
        %v1040 = vmul.f32 %v984, %v1018
        %v1041 = vmul.f32 %v985, %v1018
        %v1042 = vmul.f32 %v986, %v1023
        %v1043 = vmul.f32 %v987, %v1023
        %v1044 = vmul.f32 %v988, %v1028
        %v1045 = vmul.f32 %v989, %v1028
        %1047 = vset.pattern.permute.xlu0 0
        %1048 = vperm.xlu0 %1047, %v795
        %v1049 = vpop.permute.xlu0 %1048
        %1052 = vset.pattern.permute.xlu0 0
        %1053 = vperm.xlu0 %1052, %v796
        %v1054 = vpop.permute.xlu0 %1053
        %1057 = vset.pattern.permute.xlu0 0
        %1058 = vperm.xlu0 %1057, %v797
        %v1059 = vpop.permute.xlu0 %1058
        %1062 = vset.pattern.permute.xlu0 0
        %1063 = vperm.xlu0 %1062, %v798
        %v1064 = vpop.permute.xlu0 %1063
        %1067 = vset.pattern.permute.xlu0 0
        %1068 = vperm.xlu0 %1067, %v799
        %v1069 = vpop.permute.xlu0 %1068
        %1072 = vset.pattern.permute.xlu0 0
        %1073 = vperm.xlu0 %1072, %v800
        %v1074 = vpop.permute.xlu0 %1073
        %1077 = vset.pattern.permute.xlu0 0
        %1078 = vperm.xlu0 %1077, %v801
        %v1079 = vpop.permute.xlu0 %1078
        %1082 = vset.pattern.permute.xlu0 0
        %1083 = vperm.xlu0 %1082, %v802
        %v1084 = vpop.permute.xlu0 %1083
        %v1086 = vadd.f32 %v1030, %v1049
        %v1087 = vadd.f32 %v1031, %v1049
        %v1088 = vadd.f32 %v1032, %v1054
        %v1089 = vadd.f32 %v1033, %v1054
        %v1090 = vadd.f32 %v1034, %v1059
        %v1091 = vadd.f32 %v1035, %v1059
        %v1092 = vadd.f32 %v1036, %v1064
        %v1093 = vadd.f32 %v1037, %v1064
        %v1094 = vadd.f32 %v1038, %v1069
        %v1095 = vadd.f32 %v1039, %v1069
        %v1096 = vadd.f32 %v1040, %v1074
        %v1097 = vadd.f32 %v1041, %v1074
        %v1098 = vadd.f32 %v1042, %v1079
        %v1099 = vadd.f32 %v1043, %v1079
        %v1100 = vadd.f32 %v1044, %v1084
        %v1101 = vadd.f32 %v1045, %v1084
        %v1102 = vld [vmem:[%s3] sm:$0xff]
        %v1103 = vld [vmem:[%s3 + $0x8] sm:$0xff]
        %v1104 = vld [vmem:[%s3 + $0x10] sm:$0xff]
        %v1105 = vld [vmem:[%s3 + $0x18] sm:$0xff]
        %v1106 = vld [vmem:[%s3 + $0x20] sm:$0xff]
        %v1107 = vld [vmem:[%s3 + $0x28] sm:$0xff]
        %v1108 = vld [vmem:[%s3 + $0x30] sm:$0xff]
        %v1109 = vld [vmem:[%s3 + $0x38] sm:$0xff]
        %v1110 = vld [vmem:[%s3 + $0x40] sm:$0xff]
        %v1111 = vld [vmem:[%s3 + $0x48] sm:$0xff]
        %v1112 = vld [vmem:[%s3 + $0x50] sm:$0xff]
        %v1113 = vld [vmem:[%s3 + $0x58] sm:$0xff]
        %v1114 = vld [vmem:[%s3 + $0x60] sm:$0xff]
        %v1115 = vld [vmem:[%s3 + $0x68] sm:$0xff]
        %v1116 = vld [vmem:[%s3 + $0x70] sm:$0xff]
        %v1117 = vld [vmem:[%s3 + $0x78] sm:$0xff]
        %v1118 = vld [vmem:[%s5] sm:$0xff]
        %v1119 = vld [vmem:[%s5 + $0x8] sm:$0xff]
        %v1120 = vld [vmem:[%s5 + $0x10] sm:$0xff]
        %v1121 = vld [vmem:[%s5 + $0x18] sm:$0xff]
        %v1122 = vld [vmem:[%s5 + $0x20] sm:$0xff]
        %v1123 = vld [vmem:[%s5 + $0x28] sm:$0xff]
        %v1124 = vld [vmem:[%s5 + $0x30] sm:$0xff]
        %v1125 = vld [vmem:[%s5 + $0x38] sm:$0xff]
        %v1126 = vld [vmem:[%s5 + $0x40] sm:$0xff]
        %v1127 = vld [vmem:[%s5 + $0x48] sm:$0xff]
        %v1128 = vld [vmem:[%s5 + $0x50] sm:$0xff]
        %v1129 = vld [vmem:[%s5 + $0x58] sm:$0xff]
        %v1130 = vld [vmem:[%s5 + $0x60] sm:$0xff]
        %v1131 = vld [vmem:[%s5 + $0x68] sm:$0xff]
        %v1132 = vld [vmem:[%s5 + $0x70] sm:$0xff]
        %v1133 = vld [vmem:[%s5 + $0x78] sm:$0xff]
        %1135 = vset.pattern.permute.xlu0 0
        %1136 = vperm.xlu0 %1135, %v1118
        %v1137 = vpop.permute.xlu0 %1136
        %1140 = vset.pattern.permute.xlu0 0
        %1141 = vperm.xlu0 %1140, %v1119
        %v1142 = vpop.permute.xlu0 %1141
        %1145 = vset.pattern.permute.xlu0 0
        %1146 = vperm.xlu0 %1145, %v1120
        %v1147 = vpop.permute.xlu0 %1146
        %1150 = vset.pattern.permute.xlu0 0
        %1151 = vperm.xlu0 %1150, %v1121
        %v1152 = vpop.permute.xlu0 %1151
        %1155 = vset.pattern.permute.xlu0 0
        %1156 = vperm.xlu0 %1155, %v1122
        %v1157 = vpop.permute.xlu0 %1156
        %1160 = vset.pattern.permute.xlu0 0
        %1161 = vperm.xlu0 %1160, %v1123
        %v1162 = vpop.permute.xlu0 %1161
        %1165 = vset.pattern.permute.xlu0 0
        %1166 = vperm.xlu0 %1165, %v1124
        %v1167 = vpop.permute.xlu0 %1166
        %1170 = vset.pattern.permute.xlu0 0
        %1171 = vperm.xlu0 %1170, %v1125
        %v1172 = vpop.permute.xlu0 %1171
        %1175 = vset.pattern.permute.xlu0 0
        %1176 = vperm.xlu0 %1175, %v1126
        %v1177 = vpop.permute.xlu0 %1176
        %1180 = vset.pattern.permute.xlu0 0
        %1181 = vperm.xlu0 %1180, %v1127
        %v1182 = vpop.permute.xlu0 %1181
        %1185 = vset.pattern.permute.xlu0 0
        %1186 = vperm.xlu0 %1185, %v1128
        %v1187 = vpop.permute.xlu0 %1186
        %1190 = vset.pattern.permute.xlu0 0
        %1191 = vperm.xlu0 %1190, %v1129
        %v1192 = vpop.permute.xlu0 %1191
        %1195 = vset.pattern.permute.xlu0 0
        %1196 = vperm.xlu0 %1195, %v1130
        %v1197 = vpop.permute.xlu0 %1196
        %1200 = vset.pattern.permute.xlu0 0
        %1201 = vperm.xlu0 %1200, %v1131
        %v1202 = vpop.permute.xlu0 %1201
        %1205 = vset.pattern.permute.xlu0 0
        %1206 = vperm.xlu0 %1205, %v1132
        %v1207 = vpop.permute.xlu0 %1206
        %1210 = vset.pattern.permute.xlu0 0
        %1211 = vperm.xlu0 %1210, %v1133
        %v1212 = vpop.permute.xlu0 %1211
        %vm1214 = vcmask 523264
        %v1216 = vsel %vm1214, %v1102, 0
        %v1219 = vsel %vm1214, %v1103, 0
        %v1222 = vsel %vm1214, %v1104, 0
        %v1225 = vsel %vm1214, %v1105, 0
        %v1228 = vsel %vm1214, %v1106, 0
        %v1231 = vsel %vm1214, %v1107, 0
        %v1234 = vsel %vm1214, %v1108, 0
        %v1237 = vsel %vm1214, %v1109, 0
        %v1240 = vsel %vm1214, %v1110, 0
        %v1243 = vsel %vm1214, %v1111, 0
        %v1246 = vsel %vm1214, %v1112, 0
        %v1249 = vsel %vm1214, %v1113, 0
        %v1252 = vsel %vm1214, %v1114, 0
        %v1255 = vsel %vm1214, %v1115, 0
        %v1258 = vsel %vm1214, %v1116, 0
        %v1261 = vsel %vm1214, %v1117, 0
        %1263 = vmatprep.subr.mxu0 %v1087
        %1264 = vmatpush1.msra.mxu0 %v1086
        %1265 = vmatprep.subr.mxu0 %v1089
        %1266 = vmatpush1.msra.mxu0 %v1088
        %1267 = vmatprep.subr.mxu0 %v1091
        %1268 = vmatpush1.msra.mxu0 %v1090
        %1269 = vmatprep.subr.mxu0 %v1093
        %1270 = vmatpush1.msra.mxu0 %v1092
        %1271 = vmatprep.subr.mxu0 %v1095
        %1272 = vmatpush1.msra.mxu0 %v1094
        %1273 = vmatprep.subr.mxu0 %v1097
        %1274 = vmatpush1.msra.mxu0 %v1096
        %1275 = vmatprep.subr.mxu0 %v1099
        %1276 = vmatpush1.msra.mxu0 %v1098
        %1277 = vmatprep.subr.mxu0 %v1101
        %1278 = vmatpush1.msra.mxu0 %v1100
        %1279 = vmatprep.subr.mxu0 0.0
        %1280 = vmatpush1.msra.mxu0 0.0
        %1281 = vmatprep.subr.mxu0 0.0
        %1282 = vmatpush1.msra.mxu0 0.0
        %1283 = vmatprep.subr.mxu0 0.0
        %1284 = vmatpush1.msra.mxu0 0.0
        %1285 = vmatprep.subr.mxu0 0.0
        %1286 = vmatpush1.msra.mxu0 0.0
        %1287 = vmatprep.subr.mxu0 0.0
        %1288 = vmatpush1.msra.mxu0 0.0
        %1289 = vmatprep.subr.mxu0 0.0
        %1290 = vmatpush1.msra.mxu0 0.0
        %1291 = vmatprep.subr.mxu0 0.0
        %1292 = vmatpush1.msra.mxu0 0.0
        %1293 = vmatprep.subr.mxu0 0.0
        %1294 = vmatpush1.msra.mxu0 0.0
        %1295 = vmatprep.subr.mxu0 0.0
        %1296 = vmatpush1.msra.mxu0 0.0
        %1297 = vmatprep.subr.mxu0 0.0
        %1298 = vmatpush1.msra.mxu0 0.0
        %1299 = vmatprep.subr.mxu0 0.0
        %1300 = vmatpush1.msra.mxu0 0.0
        %1301 = vmatprep.subr.mxu0 0.0
        %1302 = vmatpush1.msra.mxu0 0.0
        %1303 = vmatprep.subr.mxu0 0.0
        %1304 = vmatpush1.msra.mxu0 0.0
        %1305 = vmatprep.subr.mxu0 0.0
        %1306 = vmatpush1.msra.mxu0 0.0
        %1307 = vmatprep.subr.mxu0 0.0
        %1308 = vmatpush1.msra.mxu0 0.0
        %1309 = vmatprep.subr.mxu0 0.0
        %1310 = vmatpush1.msra.mxu0 0.0
        %1311 = vmatprep.subr.mxu0 0.0
        %1312 = vmatpush1.msra.mxu0 0.0
        %1313 = vmatprep.subr.mxu0 0.0
        %1314 = vmatpush1.msra.mxu0 0.0
        %1315 = vmatprep.subr.mxu0 0.0
        %1316 = vmatpush1.msra.mxu0 0.0
        %1317 = vmatprep.subr.mxu0 0.0
        %1318 = vmatpush1.msra.mxu0 0.0
        %1319 = vmatprep.subr.mxu0 0.0
        %1320 = vmatpush1.msra.mxu0 0.0
        %1321 = vmatprep.subr.mxu0 0.0
        %1322 = vmatpush1.msra.mxu0 0.0
        %1323 = vmatprep.subr.mxu0 0.0
        %1324 = vmatpush1.msra.mxu0 0.0
        %1325 = vmatprep.subr.mxu0 0.0
        %1326 = vmatpush1.msra.mxu0 0.0
        %1327 = vmatprep.mubr.f32.mxu0 0.0
        %1328 = vmatmul.mubr.f32.gmra.mrb[0].mxu0 %v1216
        %v1329 = vpop.f32.mrb[0].mxu0
        %v1330 = vadd.f32 %v1137, %v1329
        %v1331 = vpop.f32.mrb[0].mxu0
        %v1332 = vadd.f32 %v1137, %v1331
        %1333 = vmatprep.mubr.f32.mxu0 0.0
        %1334 = vmatmul.mubr.f32.gmra.mrb[0].mxu0 %v1219
        %v1335 = vpop.f32.mrb[0].mxu0
        %v1336 = vadd.f32 %v1142, %v1335
        %v1337 = vpop.f32.mrb[0].mxu0
        %v1338 = vadd.f32 %v1142, %v1337
        %1339 = vmatprep.mubr.f32.mxu0 0.0
        %1340 = vmatmul.mubr.f32.gmra.mrb[0].mxu0 %v1222
        %v1341 = vpop.f32.mrb[0].mxu0
        %v1342 = vadd.f32 %v1147, %v1341
        %v1343 = vpop.f32.mrb[0].mxu0
        %v1344 = vadd.f32 %v1147, %v1343
        %1345 = vmatprep.mubr.f32.mxu0 0.0
        %1346 = vmatmul.mubr.f32.gmra.mrb[0].mxu0 %v1225
        %v1347 = vpop.f32.mrb[0].mxu0
        %v1348 = vadd.f32 %v1152, %v1347
        %v1349 = vpop.f32.mrb[0].mxu0
        %v1350 = vadd.f32 %v1152, %v1349
        %1351 = vmatprep.mubr.f32.mxu0 0.0
        %1352 = vmatmul.mubr.f32.gmra.mrb[0].mxu0 %v1228
        %v1353 = vpop.f32.mrb[0].mxu0
        %v1354 = vadd.f32 %v1157, %v1353
        %v1355 = vpop.f32.mrb[0].mxu0
        %v1356 = vadd.f32 %v1157, %v1355
        %1357 = vmatprep.mubr.f32.mxu0 0.0
        %1358 = vmatmul.mubr.f32.gmra.mrb[0].mxu0 %v1231
        %v1359 = vpop.f32.mrb[0].mxu0
        %v1360 = vadd.f32 %v1162, %v1359
        %v1361 = vpop.f32.mrb[0].mxu0
        %v1362 = vadd.f32 %v1162, %v1361
        %1363 = vmatprep.mubr.f32.mxu0 0.0
        %1364 = vmatmul.mubr.f32.gmra.mrb[0].mxu0 %v1234
        %v1365 = vpop.f32.mrb[0].mxu0
        %v1366 = vadd.f32 %v1167, %v1365
        %v1367 = vpop.f32.mrb[0].mxu0
        %v1368 = vadd.f32 %v1167, %v1367
        %1369 = vmatprep.mubr.f32.mxu0 0.0
        %1370 = vmatmul.mubr.f32.gmra.mrb[0].mxu0 %v1237
        %v1371 = vpop.f32.mrb[0].mxu0
        %v1372 = vadd.f32 %v1172, %v1371
        %v1373 = vpop.f32.mrb[0].mxu0
        %v1374 = vadd.f32 %v1172, %v1373
        %1375 = vmatprep.mubr.f32.mxu0 0.0
        %1376 = vmatmul.mubr.f32.gmra.mrb[0].mxu0 %v1240
        %v1377 = vpop.f32.mrb[0].mxu0
        %v1378 = vadd.f32 %v1177, %v1377
        %v1379 = vpop.f32.mrb[0].mxu0
        %v1380 = vadd.f32 %v1177, %v1379
        %1381 = vmatprep.mubr.f32.mxu0 0.0
        %1382 = vmatmul.mubr.f32.gmra.mrb[0].mxu0 %v1243
        %v1383 = vpop.f32.mrb[0].mxu0
        %v1384 = vadd.f32 %v1182, %v1383
        %v1385 = vpop.f32.mrb[0].mxu0
        %v1386 = vadd.f32 %v1182, %v1385
        %1387 = vmatprep.mubr.f32.mxu0 0.0
        %1388 = vmatmul.mubr.f32.gmra.mrb[0].mxu0 %v1246
        %v1389 = vpop.f32.mrb[0].mxu0
        %v1390 = vadd.f32 %v1187, %v1389
        %v1391 = vpop.f32.mrb[0].mxu0
        %v1392 = vadd.f32 %v1187, %v1391
        %1393 = vmatprep.mubr.f32.mxu0 0.0
        %1394 = vmatmul.mubr.f32.gmra.mrb[0].mxu0 %v1249
        %v1395 = vpop.f32.mrb[0].mxu0
        %v1396 = vadd.f32 %v1192, %v1395
        %v1397 = vpop.f32.mrb[0].mxu0
        %v1398 = vadd.f32 %v1192, %v1397
        %1399 = vmatprep.mubr.f32.mxu0 0.0
        %1400 = vmatmul.mubr.f32.gmra.mrb[0].mxu0 %v1252
        %v1401 = vpop.f32.mrb[0].mxu0
        %v1402 = vadd.f32 %v1197, %v1401
        %v1403 = vpop.f32.mrb[0].mxu0
        %v1404 = vadd.f32 %v1197, %v1403
        %1405 = vmatprep.mubr.f32.mxu0 0.0
        %1406 = vmatmul.mubr.f32.gmra.mrb[0].mxu0 %v1255
        %v1407 = vpop.f32.mrb[0].mxu0
        %v1408 = vadd.f32 %v1202, %v1407
        %v1409 = vpop.f32.mrb[0].mxu0
        %v1410 = vadd.f32 %v1202, %v1409
        %1411 = vmatprep.mubr.f32.mxu0 0.0
        %1412 = vmatmul.mubr.f32.gmra.mrb[0].mxu0 %v1258
        %v1413 = vpop.f32.mrb[0].mxu0
        %v1414 = vadd.f32 %v1207, %v1413
        %v1415 = vpop.f32.mrb[0].mxu0
        %v1416 = vadd.f32 %v1207, %v1415
        %1417 = vmatprep.mubr.f32.mxu0 0.0
        %1418 = vmatmul.mubr.f32.gmra.mrb[0].mxu0 %v1261
        %v1419 = vpop.f32.mrb[0].mxu0
        %v1420 = vadd.f32 %v1212, %v1419
        %v1421 = vpop.f32.mrb[0].mxu0
        %v1422 = vadd.f32 %v1212, %v1421
        %1423 = vdwg.mxu0
        %v1424 = vmax.f32 %v1330, 0.0
        %v1425 = vmax.f32 %v1332, 0.0
        %v1426 = vmax.f32 %v1336, 0.0
        %v1427 = vmax.f32 %v1338, 0.0
        %v1428 = vmax.f32 %v1342, 0.0
        %v1429 = vmax.f32 %v1344, 0.0
        %v1430 = vmax.f32 %v1348, 0.0
        %v1431 = vmax.f32 %v1350, 0.0
        %v1432 = vmax.f32 %v1354, 0.0
        %v1433 = vmax.f32 %v1356, 0.0
        %v1434 = vmax.f32 %v1360, 0.0
        %v1435 = vmax.f32 %v1362, 0.0
        %v1436 = vmax.f32 %v1366, 0.0
        %v1437 = vmax.f32 %v1368, 0.0
        %v1438 = vmax.f32 %v1372, 0.0
        %v1439 = vmax.f32 %v1374, 0.0
        %v1440 = vmax.f32 %v1378, 0.0
        %v1441 = vmax.f32 %v1380, 0.0
        %v1442 = vmax.f32 %v1384, 0.0
        %v1443 = vmax.f32 %v1386, 0.0
        %v1444 = vmax.f32 %v1390, 0.0
        %v1445 = vmax.f32 %v1392, 0.0
        %v1446 = vmax.f32 %v1396, 0.0
        %v1447 = vmax.f32 %v1398, 0.0
        %v1448 = vmax.f32 %v1402, 0.0
        %v1449 = vmax.f32 %v1404, 0.0
        %v1450 = vmax.f32 %v1408, 0.0
        %v1451 = vmax.f32 %v1410, 0.0
        %v1452 = vmax.f32 %v1414, 0.0
        %v1453 = vmax.f32 %v1416, 0.0
        %v1454 = vmax.f32 %v1420, 0.0
        %v1455 = vmax.f32 %v1422, 0.0
        %v1456 = vld [vmem:[%s4] sm:$0xff]
        %v1457 = vld [vmem:[%s4 + $0x8] sm:$0xff]
        %v1458 = vld [vmem:[%s4 + $0x10] sm:$0xff]
        %v1459 = vld [vmem:[%s4 + $0x18] sm:$0xff]
        %v1460 = vld [vmem:[%s4 + $0x20] sm:$0xff]
        %v1461 = vld [vmem:[%s4 + $0x28] sm:$0xff]
        %v1462 = vld [vmem:[%s4 + $0x30] sm:$0xff]
        %v1463 = vld [vmem:[%s4 + $0x38] sm:$0xff]
        %1465 = vset.pattern.permute.xlu0 0
        %1466 = vperm.xlu0 %1465, %v777
        %v1467 = vpop.permute.xlu0 %1466
        %1470 = vset.pattern.permute.xlu0 0
        %1471 = vperm.xlu0 %1470, %v778
        %v1472 = vpop.permute.xlu0 %1471
        %1475 = vset.pattern.permute.xlu0 0
        %1476 = vperm.xlu0 %1475, %v779
        %v1477 = vpop.permute.xlu0 %1476
        %1480 = vset.pattern.permute.xlu0 0
        %1481 = vperm.xlu0 %1480, %v780
        %v1482 = vpop.permute.xlu0 %1481
        %1485 = vset.pattern.permute.xlu0 0
        %1486 = vperm.xlu0 %1485, %v781
        %v1487 = vpop.permute.xlu0 %1486
        %1490 = vset.pattern.permute.xlu0 0
        %1491 = vperm.xlu0 %1490, %v782
        %v1492 = vpop.permute.xlu0 %1491
        %1495 = vset.pattern.permute.xlu0 0
        %1496 = vperm.xlu0 %1495, %v783
        %v1497 = vpop.permute.xlu0 %1496
        %1500 = vset.pattern.permute.xlu0 0
        %1501 = vperm.xlu0 %1500, %v784
        %v1502 = vpop.permute.xlu0 %1501
        %1504 = vmatprep.subr.mxu0 %v1425
        %1505 = vmatpush1.msra.mxu0 %v1424
        %1506 = vmatprep.subr.mxu0 %v1427
        %1507 = vmatpush1.msra.mxu0 %v1426
        %1508 = vmatprep.subr.mxu0 %v1429
        %1509 = vmatpush1.msra.mxu0 %v1428
        %1510 = vmatprep.subr.mxu0 %v1431
        %1511 = vmatpush1.msra.mxu0 %v1430
        %1512 = vmatprep.subr.mxu0 %v1433
        %1513 = vmatpush1.msra.mxu0 %v1432
        %1514 = vmatprep.subr.mxu0 %v1435
        %1515 = vmatpush1.msra.mxu0 %v1434
        %1516 = vmatprep.subr.mxu0 %v1437
        %1517 = vmatpush1.msra.mxu0 %v1436
        %1518 = vmatprep.subr.mxu0 %v1439
        %1519 = vmatpush1.msra.mxu0 %v1438
        %1520 = vmatprep.subr.mxu0 %v1441
        %1521 = vmatpush1.msra.mxu0 %v1440
        %1522 = vmatprep.subr.mxu0 %v1443
        %1523 = vmatpush1.msra.mxu0 %v1442
        %1524 = vmatprep.subr.mxu0 %v1445
        %1525 = vmatpush1.msra.mxu0 %v1444
        %1526 = vmatprep.subr.mxu0 %v1447
        %1527 = vmatpush1.msra.mxu0 %v1446
        %1528 = vmatprep.subr.mxu0 %v1449
        %1529 = vmatpush1.msra.mxu0 %v1448
        %1530 = vmatprep.subr.mxu0 %v1451
        %1531 = vmatpush1.msra.mxu0 %v1450
        %1532 = vmatprep.subr.mxu0 %v1453
        %1533 = vmatpush1.msra.mxu0 %v1452
        %1534 = vmatprep.subr.mxu0 %v1455
        %1535 = vmatpush1.msra.mxu0 %v1454
        %1536 = vmatprep.subr.mxu0 0.0
        %1537 = vmatpush1.msra.mxu0 0.0
        %1538 = vmatprep.subr.mxu0 0.0
        %1539 = vmatpush1.msra.mxu0 0.0
        %1540 = vmatprep.subr.mxu0 0.0
        %1541 = vmatpush1.msra.mxu0 0.0
        %1542 = vmatprep.subr.mxu0 0.0
        %1543 = vmatpush1.msra.mxu0 0.0
        %1544 = vmatprep.subr.mxu0 0.0
        %1545 = vmatpush1.msra.mxu0 0.0
        %1546 = vmatprep.subr.mxu0 0.0
        %1547 = vmatpush1.msra.mxu0 0.0
        %1548 = vmatprep.subr.mxu0 0.0
        %1549 = vmatpush1.msra.mxu0 0.0
        %1550 = vmatprep.subr.mxu0 0.0
        %1551 = vmatpush1.msra.mxu0 0.0
        %1552 = vmatprep.subr.mxu0 0.0
        %1553 = vmatpush1.msra.mxu0 0.0
        %1554 = vmatprep.subr.mxu0 0.0
        %1555 = vmatpush1.msra.mxu0 0.0
        %1556 = vmatprep.subr.mxu0 0.0
        %1557 = vmatpush1.msra.mxu0 0.0
        %1558 = vmatprep.subr.mxu0 0.0
        %1559 = vmatpush1.msra.mxu0 0.0
        %1560 = vmatprep.subr.mxu0 0.0
        %1561 = vmatpush1.msra.mxu0 0.0
        %1562 = vmatprep.subr.mxu0 0.0
        %1563 = vmatpush1.msra.mxu0 0.0
        %1564 = vmatprep.subr.mxu0 0.0
        %1565 = vmatpush1.msra.mxu0 0.0
        %1566 = vmatprep.subr.mxu0 0.0
        %1567 = vmatpush1.msra.mxu0 0.0
        %1568 = vmatprep.mubr.f32.mxu0 0.0
        %1569 = vmatmul.mubr.f32.gmra.mrb[0].mxu0 %v1456
        %v1570 = vpop.f32.mrb[0].mxu0
        %v1571 = vadd.f32 %v1467, %v1570
        %v1572 = vpop.f32.mrb[0].mxu0
        %v1573 = vadd.f32 %v1467, %v1572
        %1574 = vmatprep.mubr.f32.mxu0 0.0
        %1575 = vmatmul.mubr.f32.gmra.mrb[0].mxu0 %v1457
        %v1576 = vpop.f32.mrb[0].mxu0
        %v1577 = vadd.f32 %v1472, %v1576
        %v1578 = vpop.f32.mrb[0].mxu0
        %v1579 = vadd.f32 %v1472, %v1578
        %1580 = vmatprep.mubr.f32.mxu0 0.0
        %1581 = vmatmul.mubr.f32.gmra.mrb[0].mxu0 %v1458
        %v1582 = vpop.f32.mrb[0].mxu0
        %v1583 = vadd.f32 %v1477, %v1582
        %v1584 = vpop.f32.mrb[0].mxu0
        %v1585 = vadd.f32 %v1477, %v1584
        %1586 = vmatprep.mubr.f32.mxu0 0.0
        %1587 = vmatmul.mubr.f32.gmra.mrb[0].mxu0 %v1459
        %v1588 = vpop.f32.mrb[0].mxu0
        %v1589 = vadd.f32 %v1482, %v1588
        %v1590 = vpop.f32.mrb[0].mxu0
        %v1591 = vadd.f32 %v1482, %v1590
        %1592 = vmatprep.mubr.f32.mxu0 0.0
        %1593 = vmatmul.mubr.f32.gmra.mrb[0].mxu0 %v1460
        %v1594 = vpop.f32.mrb[0].mxu0
        %v1595 = vadd.f32 %v1487, %v1594
        %v1596 = vpop.f32.mrb[0].mxu0
        %v1597 = vadd.f32 %v1487, %v1596
        %1598 = vmatprep.mubr.f32.mxu0 0.0
        %1599 = vmatmul.mubr.f32.gmra.mrb[0].mxu0 %v1461
        %v1600 = vpop.f32.mrb[0].mxu0
        %v1601 = vadd.f32 %v1492, %v1600
        %v1602 = vpop.f32.mrb[0].mxu0
        %v1603 = vadd.f32 %v1492, %v1602
        %1604 = vmatprep.mubr.f32.mxu0 0.0
        %1605 = vmatmul.mubr.f32.gmra.mrb[0].mxu0 %v1462
        %v1606 = vpop.f32.mrb[0].mxu0
        %v1607 = vadd.f32 %v1497, %v1606
        %v1608 = vpop.f32.mrb[0].mxu0
        %v1609 = vadd.f32 %v1497, %v1608
        %1610 = vmatprep.mubr.f32.mxu0 0.0
        %1611 = vmatmul.mubr.f32.gmra.mrb[0].mxu0 %v1463
        %v1612 = vpop.f32.mrb[0].mxu0
        %v1613 = vadd.f32 %v1502, %v1612
        %v1614 = vpop.f32.mrb[0].mxu0
        %v1615 = vadd.f32 %v1502, %v1614
        %1616 = vdwg.mxu0
        %v1617 = vadd.f32 %v1086, %v1571
        %v1618 = vadd.f32 %v1087, %v1573
        %v1619 = vadd.f32 %v1088, %v1577
        %v1620 = vadd.f32 %v1089, %v1579
        %v1621 = vadd.f32 %v1090, %v1583
        %v1622 = vadd.f32 %v1091, %v1585
        %v1623 = vadd.f32 %v1092, %v1589
        %v1624 = vadd.f32 %v1093, %v1591
        %v1625 = vadd.f32 %v1094, %v1595
        %v1626 = vadd.f32 %v1095, %v1597
        %v1627 = vadd.f32 %v1096, %v1601
        %v1628 = vadd.f32 %v1097, %v1603
        %v1629 = vadd.f32 %v1098, %v1607
        %v1630 = vadd.f32 %v1099, %v1609
        %v1631 = vadd.f32 %v1100, %v1613
        %v1632 = vadd.f32 %v1101, %v1615
        %v1633 = vadd.f32 %v1617, %v1619
        %v1634 = vadd.f32 %v1633, %v1621
        %v1635 = vadd.f32 %v1634, %v1623
        %v1636 = vadd.f32 %v1635, %v1625
        %v1637 = vadd.f32 %v1636, %v1627
        %v1638 = vadd.f32 %v1637, %v1629
        %v1639 = vadd.f32 %v1638, %v1631
        %v1640 = vrot.slane %v1639, 4
        %v1641 = vadd.f32 %v1639, %v1640
        %v1642 = vrot.slane %v1641, 2
        %v1643 = vadd.f32 %v1641, %v1642
        %v1644 = vrot.slane %v1643, 1
        %v1645 = vadd.f32 %v1643, %v1644
        %v1646 = vadd.f32 %v1618, %v1620
        %v1647 = vadd.f32 %v1646, %v1622
        %v1648 = vadd.f32 %v1647, %v1624
        %v1649 = vadd.f32 %v1648, %v1626
        %v1650 = vadd.f32 %v1649, %v1628
        %v1651 = vadd.f32 %v1650, %v1630
        %v1652 = vadd.f32 %v1651, %v1632
        %v1653 = vrot.slane %v1652, 4
        %v1654 = vadd.f32 %v1652, %v1653
        %v1655 = vrot.slane %v1654, 2
        %v1656 = vadd.f32 %v1654, %v1655
        %v1657 = vrot.slane %v1656, 1
        %v1658 = vadd.f32 %v1656, %v1657
        %v1659 = vmul.f32 %v1645, %v903
        %v1660 = vmul.f32 %v1658, %v903
        %v1661 = vmul.f32 %v1617, %v1617
        %v1662 = vmul.f32 %v1618, %v1618
        %v1663 = vmul.f32 %v1619, %v1619
        %v1664 = vmul.f32 %v1620, %v1620
        %v1665 = vmul.f32 %v1621, %v1621
        %v1666 = vmul.f32 %v1622, %v1622
        %v1667 = vmul.f32 %v1623, %v1623
        %v1668 = vmul.f32 %v1624, %v1624
        %v1669 = vmul.f32 %v1625, %v1625
        %v1670 = vmul.f32 %v1626, %v1626
        %v1671 = vmul.f32 %v1627, %v1627
        %v1672 = vmul.f32 %v1628, %v1628
        %v1673 = vmul.f32 %v1629, %v1629
        %v1674 = vmul.f32 %v1630, %v1630
        %v1675 = vmul.f32 %v1631, %v1631
        %v1676 = vmul.f32 %v1632, %v1632
        %v1677 = vadd.f32 %v1661, %v1663
        %v1678 = vadd.f32 %v1677, %v1665
        %v1679 = vadd.f32 %v1678, %v1667
        %v1680 = vadd.f32 %v1679, %v1669
        %v1681 = vadd.f32 %v1680, %v1671
        %v1682 = vadd.f32 %v1681, %v1673
        %v1683 = vadd.f32 %v1682, %v1675
        %v1684 = vrot.slane %v1683, 4
        %v1685 = vadd.f32 %v1683, %v1684
        %v1686 = vrot.slane %v1685, 2
        %v1687 = vadd.f32 %v1685, %v1686
        %v1688 = vrot.slane %v1687, 1
        %v1689 = vadd.f32 %v1687, %v1688
        %v1690 = vadd.f32 %v1662, %v1664
        %v1691 = vadd.f32 %v1690, %v1666
        %v1692 = vadd.f32 %v1691, %v1668
        %v1693 = vadd.f32 %v1692, %v1670
        %v1694 = vadd.f32 %v1693, %v1672
        %v1695 = vadd.f32 %v1694, %v1674
        %v1696 = vadd.f32 %v1695, %v1676
        %v1697 = vrot.slane %v1696, 4
        %v1698 = vadd.f32 %v1696, %v1697
        %v1699 = vrot.slane %v1698, 2
        %v1700 = vadd.f32 %v1698, %v1699
        %v1701 = vrot.slane %v1700, 1
        %v1702 = vadd.f32 %v1700, %v1701
        %v1703 = vmul.f32 %v1689, %v903
        %v1704 = vmul.f32 %v1702, %v903
        %v1705 = vmul.f32 %v1659, %v1659
        %v1706 = vmul.f32 %v1660, %v1660
        %v1707 = vsub.f32 %v1703, %v1705
        %v1708 = vsub.f32 %v1704, %v1706
        %v1709 = vadd.f32 %v1707, 1e-05
        %v1710 = vadd.f32 %v1708, 1e-05
        %v1711 = vrsqrt.pop %v1709
        %v1712 = vrsqrt.pop %v1710
        %v1713 = vsub.f32 %v1617, %v1659
        %v1714 = vsub.f32 %v1618, %v1660
        %v1715 = vsub.f32 %v1619, %v1659
        %v1716 = vsub.f32 %v1620, %v1660
        %v1717 = vsub.f32 %v1621, %v1659
        %v1718 = vsub.f32 %v1622, %v1660
        %v1719 = vsub.f32 %v1623, %v1659
        %v1720 = vsub.f32 %v1624, %v1660
        %v1721 = vsub.f32 %v1625, %v1659
        %v1722 = vsub.f32 %v1626, %v1660
        %v1723 = vsub.f32 %v1627, %v1659
        %v1724 = vsub.f32 %v1628, %v1660
        %v1725 = vsub.f32 %v1629, %v1659
        %v1726 = vsub.f32 %v1630, %v1660
        %v1727 = vsub.f32 %v1631, %v1659
        %v1728 = vsub.f32 %v1632, %v1660
        %v1729 = vmul.f32 %v1713, %v1711
        %v1730 = vmul.f32 %v1714, %v1712
        %v1731 = vmul.f32 %v1715, %v1711
        %v1732 = vmul.f32 %v1716, %v1712
        %v1733 = vmul.f32 %v1717, %v1711
        %v1734 = vmul.f32 %v1718, %v1712
        %v1735 = vmul.f32 %v1719, %v1711
        %v1736 = vmul.f32 %v1720, %v1712
        %v1737 = vmul.f32 %v1721, %v1711
        %v1738 = vmul.f32 %v1722, %v1712
        %v1739 = vmul.f32 %v1723, %v1711
        %v1740 = vmul.f32 %v1724, %v1712
        %v1741 = vmul.f32 %v1725, %v1711
        %v1742 = vmul.f32 %v1726, %v1712
        %v1743 = vmul.f32 %v1727, %v1711
        %v1744 = vmul.f32 %v1728, %v1712
        %1746 = vset.pattern.permute.xlu0 0
        %1747 = vperm.xlu0 %1746, %v804
        %v1748 = vpop.permute.xlu0 %1747
        %1751 = vset.pattern.permute.xlu0 0
        %1752 = vperm.xlu0 %1751, %v805
        %v1753 = vpop.permute.xlu0 %1752
        %1756 = vset.pattern.permute.xlu0 0
        %1757 = vperm.xlu0 %1756, %v806
        %v1758 = vpop.permute.xlu0 %1757
        %1761 = vset.pattern.permute.xlu0 0
        %1762 = vperm.xlu0 %1761, %v807
        %v1763 = vpop.permute.xlu0 %1762
        %1766 = vset.pattern.permute.xlu0 0
        %1767 = vperm.xlu0 %1766, %v808
        %v1768 = vpop.permute.xlu0 %1767
        %1771 = vset.pattern.permute.xlu0 0
        %1772 = vperm.xlu0 %1771, %v809
        %v1773 = vpop.permute.xlu0 %1772
        %1776 = vset.pattern.permute.xlu0 0
        %1777 = vperm.xlu0 %1776, %v810
        %v1778 = vpop.permute.xlu0 %1777
        %1781 = vset.pattern.permute.xlu0 0
        %1782 = vperm.xlu0 %1781, %v811
        %v1783 = vpop.permute.xlu0 %1782
        %v1785 = vmul.f32 %v1729, %v1748
        %v1786 = vmul.f32 %v1730, %v1748
        %v1787 = vmul.f32 %v1731, %v1753
        %v1788 = vmul.f32 %v1732, %v1753
        %v1789 = vmul.f32 %v1733, %v1758
        %v1790 = vmul.f32 %v1734, %v1758
        %v1791 = vmul.f32 %v1735, %v1763
        %v1792 = vmul.f32 %v1736, %v1763
        %v1793 = vmul.f32 %v1737, %v1768
        %v1794 = vmul.f32 %v1738, %v1768
        %v1795 = vmul.f32 %v1739, %v1773
        %v1796 = vmul.f32 %v1740, %v1773
        %v1797 = vmul.f32 %v1741, %v1778
        %v1798 = vmul.f32 %v1742, %v1778
        %v1799 = vmul.f32 %v1743, %v1783
        %v1800 = vmul.f32 %v1744, %v1783
        %1802 = vset.pattern.permute.xlu0 0
        %1803 = vperm.xlu0 %1802, %v813
        %v1804 = vpop.permute.xlu0 %1803
        %1807 = vset.pattern.permute.xlu0 0
        %1808 = vperm.xlu0 %1807, %v814
        %v1809 = vpop.permute.xlu0 %1808
        %1812 = vset.pattern.permute.xlu0 0
        %1813 = vperm.xlu0 %1812, %v815
        %v1814 = vpop.permute.xlu0 %1813
        %1817 = vset.pattern.permute.xlu0 0
        %1818 = vperm.xlu0 %1817, %v816
        %v1819 = vpop.permute.xlu0 %1818
        %1822 = vset.pattern.permute.xlu0 0
        %1823 = vperm.xlu0 %1822, %v817
        %v1824 = vpop.permute.xlu0 %1823
        %1827 = vset.pattern.permute.xlu0 0
        %1828 = vperm.xlu0 %1827, %v818
        %v1829 = vpop.permute.xlu0 %1828
        %1832 = vset.pattern.permute.xlu0 0
        %1833 = vperm.xlu0 %1832, %v819
        %v1834 = vpop.permute.xlu0 %1833
        %1837 = vset.pattern.permute.xlu0 0
        %1838 = vperm.xlu0 %1837, %v820
        %v1839 = vpop.permute.xlu0 %1838
        %v1841 = vadd.f32 %v1785, %v1804
        %v1842 = vadd.f32 %v1786, %v1804
        %v1843 = vadd.f32 %v1787, %v1809
        %v1844 = vadd.f32 %v1788, %v1809
        %v1845 = vadd.f32 %v1789, %v1814
        %v1846 = vadd.f32 %v1790, %v1814
        %v1847 = vadd.f32 %v1791, %v1819
        %v1848 = vadd.f32 %v1792, %v1819
        %v1849 = vadd.f32 %v1793, %v1824
        %v1850 = vadd.f32 %v1794, %v1824
        %v1851 = vadd.f32 %v1795, %v1829
        %v1852 = vadd.f32 %v1796, %v1829
        %v1853 = vadd.f32 %v1797, %v1834
        %v1854 = vadd.f32 %v1798, %v1834
        %v1855 = vadd.f32 %v1799, %v1839
        %v1856 = vadd.f32 %v1800, %v1839
        %s1857 = scalar_lea.vmem %s6, 384
        %v1858 = vld [vmem:[%s1857] sm:$0xff]
        %v1859 = vld [vmem:[%s1857 + $0x8] sm:$0xff]
        %v1860 = vld [vmem:[%s1857 + $0x10] sm:$0xff]
        %v1861 = vld [vmem:[%s1857 + $0x18] sm:$0xff]
        %v1862 = vld [vmem:[%s1857 + $0x20] sm:$0xff]
        %v1863 = vld [vmem:[%s1857 + $0x28] sm:$0xff]
        %v1864 = vld [vmem:[%s1857 + $0x30] sm:$0xff]
        %v1865 = vld [vmem:[%s1857 + $0x38] sm:$0xff]
        %s1866 = scalar_lea.vmem %s6, 448
        %v1867 = vld [vmem:[%s1866] sm:$0xff]
        %v1868 = vld [vmem:[%s1866 + $0x8] sm:$0xff]
        %v1869 = vld [vmem:[%s1866 + $0x10] sm:$0xff]
        %v1870 = vld [vmem:[%s1866 + $0x18] sm:$0xff]
        %v1871 = vld [vmem:[%s1866 + $0x20] sm:$0xff]
        %v1872 = vld [vmem:[%s1866 + $0x28] sm:$0xff]
        %v1873 = vld [vmem:[%s1866 + $0x30] sm:$0xff]
        %v1874 = vld [vmem:[%s1866 + $0x38] sm:$0xff]
        %s1875 = scalar_lea.vmem %s6, 512
        %v1876 = vld [vmem:[%s1875] sm:$0xff]
        %v1877 = vld [vmem:[%s1875 + $0x8] sm:$0xff]
        %v1878 = vld [vmem:[%s1875 + $0x10] sm:$0xff]
        %v1879 = vld [vmem:[%s1875 + $0x18] sm:$0xff]
        %v1880 = vld [vmem:[%s1875 + $0x20] sm:$0xff]
        %v1881 = vld [vmem:[%s1875 + $0x28] sm:$0xff]
        %v1882 = vld [vmem:[%s1875 + $0x30] sm:$0xff]
        %v1883 = vld [vmem:[%s1875 + $0x38] sm:$0xff]
        %s1884 = scalar_lea.vmem %s6, 576
        %v1885 = vld [vmem:[%s1884] sm:$0xff]
        %v1886 = vld [vmem:[%s1884 + $0x8] sm:$0xff]
        %v1887 = vld [vmem:[%s1884 + $0x10] sm:$0xff]
        %v1888 = vld [vmem:[%s1884 + $0x18] sm:$0xff]
        %v1889 = vld [vmem:[%s1884 + $0x20] sm:$0xff]
        %v1890 = vld [vmem:[%s1884 + $0x28] sm:$0xff]
        %v1891 = vld [vmem:[%s1884 + $0x30] sm:$0xff]
        %v1892 = vld [vmem:[%s1884 + $0x38] sm:$0xff]
        %s1893 = scalar_lea.vmem %s6, 640
        %v1894 = vld [vmem:[%s1893] sm:$0xff]
        %v1895 = vld [vmem:[%s1893 + $0x8] sm:$0xff]
        %v1896 = vld [vmem:[%s1893 + $0x10] sm:$0xff]
        %v1897 = vld [vmem:[%s1893 + $0x18] sm:$0xff]
        %v1898 = vld [vmem:[%s1893 + $0x20] sm:$0xff]
        %v1899 = vld [vmem:[%s1893 + $0x28] sm:$0xff]
        %v1900 = vld [vmem:[%s1893 + $0x30] sm:$0xff]
        %v1901 = vld [vmem:[%s1893 + $0x38] sm:$0xff]
        %s1902 = scalar_lea.vmem %s6, 704
        %v1903 = vld [vmem:[%s1902] sm:$0xff]
        %v1904 = vld [vmem:[%s1902 + $0x8] sm:$0xff]
        %v1905 = vld [vmem:[%s1902 + $0x10] sm:$0xff]
        %v1906 = vld [vmem:[%s1902 + $0x18] sm:$0xff]
        %v1907 = vld [vmem:[%s1902 + $0x20] sm:$0xff]
        %v1908 = vld [vmem:[%s1902 + $0x28] sm:$0xff]
        %v1909 = vld [vmem:[%s1902 + $0x30] sm:$0xff]
        %v1910 = vld [vmem:[%s1902 + $0x38] sm:$0xff]
        %v1911 = vld [vmem:[%s2] sm:$0xff]
        %v1912 = vld [vmem:[%s2 + $0x8] sm:$0xff]
        %v1913 = vld [vmem:[%s2 + $0x10] sm:$0xff]
        %v1914 = vld [vmem:[%s2 + $0x18] sm:$0xff]
        %v1915 = vld [vmem:[%s2 + $0x20] sm:$0xff]
        %v1916 = vld [vmem:[%s2 + $0x28] sm:$0xff]
        %v1917 = vld [vmem:[%s2 + $0x30] sm:$0xff]
        %v1918 = vld [vmem:[%s2 + $0x38] sm:$0xff]
        %1920 = vset.pattern.permute.xlu0 0
        %1921 = vperm.xlu0 %1920, %v1858
        %v1922 = vpop.permute.xlu0 %1921
        %1925 = vset.pattern.permute.xlu0 0
        %1926 = vperm.xlu0 %1925, %v1859
        %v1927 = vpop.permute.xlu0 %1926
        %1930 = vset.pattern.permute.xlu0 0
        %1931 = vperm.xlu0 %1930, %v1860
        %v1932 = vpop.permute.xlu0 %1931
        %1935 = vset.pattern.permute.xlu0 0
        %1936 = vperm.xlu0 %1935, %v1861
        %v1937 = vpop.permute.xlu0 %1936
        %1940 = vset.pattern.permute.xlu0 0
        %1941 = vperm.xlu0 %1940, %v1862
        %v1942 = vpop.permute.xlu0 %1941
        %1945 = vset.pattern.permute.xlu0 0
        %1946 = vperm.xlu0 %1945, %v1863
        %v1947 = vpop.permute.xlu0 %1946
        %1950 = vset.pattern.permute.xlu0 0
        %1951 = vperm.xlu0 %1950, %v1864
        %v1952 = vpop.permute.xlu0 %1951
        %1955 = vset.pattern.permute.xlu0 0
        %1956 = vperm.xlu0 %1955, %v1865
        %v1957 = vpop.permute.xlu0 %1956
        %v1960 = vsel %vm1214, %v1911, 0
        %v1963 = vsel %vm1214, %v1912, 0
        %v1966 = vsel %vm1214, %v1913, 0
        %v1969 = vsel %vm1214, %v1914, 0
        %v1972 = vsel %vm1214, %v1915, 0
        %v1975 = vsel %vm1214, %v1916, 0
        %v1978 = vsel %vm1214, %v1917, 0
        %v1981 = vsel %vm1214, %v1918, 0
        %1983 = vmatprep.subr.mxu0 %v1842
        %1984 = vmatpush1.msra.mxu0 %v1841
        %1985 = vmatprep.subr.mxu0 %v1844
        %1986 = vmatpush1.msra.mxu0 %v1843
        %1987 = vmatprep.subr.mxu0 %v1846
        %1988 = vmatpush1.msra.mxu0 %v1845
        %1989 = vmatprep.subr.mxu0 %v1848
        %1990 = vmatpush1.msra.mxu0 %v1847
        %1991 = vmatprep.subr.mxu0 %v1850
        %1992 = vmatpush1.msra.mxu0 %v1849
        %1993 = vmatprep.subr.mxu0 %v1852
        %1994 = vmatpush1.msra.mxu0 %v1851
        %1995 = vmatprep.subr.mxu0 %v1854
        %1996 = vmatpush1.msra.mxu0 %v1853
        %1997 = vmatprep.subr.mxu0 %v1856
        %1998 = vmatpush1.msra.mxu0 %v1855
        %1999 = vmatprep.subr.mxu0 0.0
        %2000 = vmatpush1.msra.mxu0 0.0
        %2001 = vmatprep.subr.mxu0 0.0
        %2002 = vmatpush1.msra.mxu0 0.0
        %2003 = vmatprep.subr.mxu0 0.0
        %2004 = vmatpush1.msra.mxu0 0.0
        %2005 = vmatprep.subr.mxu0 0.0
        %2006 = vmatpush1.msra.mxu0 0.0
        %2007 = vmatprep.subr.mxu0 0.0
        %2008 = vmatpush1.msra.mxu0 0.0
        %2009 = vmatprep.subr.mxu0 0.0
        %2010 = vmatpush1.msra.mxu0 0.0
        %2011 = vmatprep.subr.mxu0 0.0
        %2012 = vmatpush1.msra.mxu0 0.0
        %2013 = vmatprep.subr.mxu0 0.0
        %2014 = vmatpush1.msra.mxu0 0.0
        %2015 = vmatprep.subr.mxu0 0.0
        %2016 = vmatpush1.msra.mxu0 0.0
        %2017 = vmatprep.subr.mxu0 0.0
        %2018 = vmatpush1.msra.mxu0 0.0
        %2019 = vmatprep.subr.mxu0 0.0
        %2020 = vmatpush1.msra.mxu0 0.0
        %2021 = vmatprep.subr.mxu0 0.0
        %2022 = vmatpush1.msra.mxu0 0.0
        %2023 = vmatprep.subr.mxu0 0.0
        %2024 = vmatpush1.msra.mxu0 0.0
        %2025 = vmatprep.subr.mxu0 0.0
        %2026 = vmatpush1.msra.mxu0 0.0
        %2027 = vmatprep.subr.mxu0 0.0
        %2028 = vmatpush1.msra.mxu0 0.0
        %2029 = vmatprep.subr.mxu0 0.0
        %2030 = vmatpush1.msra.mxu0 0.0
        %2031 = vmatprep.subr.mxu0 0.0
        %2032 = vmatpush1.msra.mxu0 0.0
        %2033 = vmatprep.subr.mxu0 0.0
        %2034 = vmatpush1.msra.mxu0 0.0
        %2035 = vmatprep.subr.mxu0 0.0
        %2036 = vmatpush1.msra.mxu0 0.0
        %2037 = vmatprep.subr.mxu0 0.0
        %2038 = vmatpush1.msra.mxu0 0.0
        %2039 = vmatprep.subr.mxu0 0.0
        %2040 = vmatpush1.msra.mxu0 0.0
        %2041 = vmatprep.subr.mxu0 0.0
        %2042 = vmatpush1.msra.mxu0 0.0
        %2043 = vmatprep.subr.mxu0 0.0
        %2044 = vmatpush1.msra.mxu0 0.0
        %2045 = vmatprep.subr.mxu0 0.0
        %2046 = vmatpush1.msra.mxu0 0.0
        %2047 = vmatprep.mubr.f32.mxu0 0.0
        %2048 = vmatmul.mubr.f32.gmra.mrb[0].mxu0 %v1960
        %v2049 = vpop.f32.mrb[0].mxu0
        %v2050 = vadd.f32 %v1922, %v2049
        %v2051 = vpop.f32.mrb[0].mxu0
        %v2052 = vadd.f32 %v1922, %v2051
        %2053 = vmatprep.mubr.f32.mxu0 0.0
        %2054 = vmatmul.mubr.f32.gmra.mrb[0].mxu0 %v1963
        %v2055 = vpop.f32.mrb[0].mxu0
        %v2056 = vadd.f32 %v1927, %v2055
        %v2057 = vpop.f32.mrb[0].mxu0
        %v2058 = vadd.f32 %v1927, %v2057
        %2059 = vmatprep.mubr.f32.mxu0 0.0
        %2060 = vmatmul.mubr.f32.gmra.mrb[0].mxu0 %v1966
        %v2061 = vpop.f32.mrb[0].mxu0
        %v2062 = vadd.f32 %v1932, %v2061
        %v2063 = vpop.f32.mrb[0].mxu0
        %v2064 = vadd.f32 %v1932, %v2063
        %2065 = vmatprep.mubr.f32.mxu0 0.0
        %2066 = vmatmul.mubr.f32.gmra.mrb[0].mxu0 %v1969
        %v2067 = vpop.f32.mrb[0].mxu0
        %v2068 = vadd.f32 %v1937, %v2067
        %v2069 = vpop.f32.mrb[0].mxu0
        %v2070 = vadd.f32 %v1937, %v2069
        %2071 = vmatprep.mubr.f32.mxu0 0.0
        %2072 = vmatmul.mubr.f32.gmra.mrb[0].mxu0 %v1972
        %v2073 = vpop.f32.mrb[0].mxu0
        %v2074 = vadd.f32 %v1942, %v2073
        %v2075 = vpop.f32.mrb[0].mxu0
        %v2076 = vadd.f32 %v1942, %v2075
        %2077 = vmatprep.mubr.f32.mxu0 0.0
        %2078 = vmatmul.mubr.f32.gmra.mrb[0].mxu0 %v1975
        %v2079 = vpop.f32.mrb[0].mxu0
        %v2080 = vadd.f32 %v1947, %v2079
        %v2081 = vpop.f32.mrb[0].mxu0
        %v2082 = vadd.f32 %v1947, %v2081
        %2083 = vmatprep.mubr.f32.mxu0 0.0
        %2084 = vmatmul.mubr.f32.gmra.mrb[0].mxu0 %v1978
        %v2085 = vpop.f32.mrb[0].mxu0
        %v2086 = vadd.f32 %v1952, %v2085
        %v2087 = vpop.f32.mrb[0].mxu0
        %v2088 = vadd.f32 %v1952, %v2087
        %2089 = vmatprep.mubr.f32.mxu0 0.0
        %2090 = vmatmul.mubr.f32.gmra.mrb[0].mxu0 %v1981
        %v2091 = vpop.f32.mrb[0].mxu0
        %v2092 = vadd.f32 %v1957, %v2091
        %v2093 = vpop.f32.mrb[0].mxu0
        %v2094 = vadd.f32 %v1957, %v2093
        %2095 = vdwg.mxu0
        %v2096 = vadd.f32 %v2050, %v2056
        %v2097 = vadd.f32 %v2096, %v2062
        %v2098 = vadd.f32 %v2097, %v2068
        %v2099 = vadd.f32 %v2098, %v2074
        %v2100 = vadd.f32 %v2099, %v2080
        %v2101 = vadd.f32 %v2100, %v2086
        %v2102 = vadd.f32 %v2101, %v2092
        %v2103 = vrot.slane %v2102, 4
        %v2104 = vadd.f32 %v2102, %v2103
        %v2105 = vrot.slane %v2104, 2
        %v2106 = vadd.f32 %v2104, %v2105
        %v2107 = vrot.slane %v2106, 1
        %v2108 = vadd.f32 %v2106, %v2107
        %v2109 = vadd.f32 %v2052, %v2058
        %v2110 = vadd.f32 %v2109, %v2064
        %v2111 = vadd.f32 %v2110, %v2070
        %v2112 = vadd.f32 %v2111, %v2076
        %v2113 = vadd.f32 %v2112, %v2082
        %v2114 = vadd.f32 %v2113, %v2088
        %v2115 = vadd.f32 %v2114, %v2094
        %v2116 = vrot.slane %v2115, 4
        %v2117 = vadd.f32 %v2115, %v2116
        %v2118 = vrot.slane %v2117, 2
        %v2119 = vadd.f32 %v2117, %v2118
        %v2120 = vrot.slane %v2119, 1
        %v2121 = vadd.f32 %v2119, %v2120
        %v2122 = vmul.f32 %v2108, %v903
        %v2123 = vmul.f32 %v2121, %v903
        %v2124 = vmul.f32 %v2050, %v2050
        %v2125 = vmul.f32 %v2052, %v2052
        %v2126 = vmul.f32 %v2056, %v2056
        %v2127 = vmul.f32 %v2058, %v2058
        %v2128 = vmul.f32 %v2062, %v2062
        %v2129 = vmul.f32 %v2064, %v2064
        %v2130 = vmul.f32 %v2068, %v2068
        %v2131 = vmul.f32 %v2070, %v2070
        %v2132 = vmul.f32 %v2074, %v2074
        %v2133 = vmul.f32 %v2076, %v2076
        %v2134 = vmul.f32 %v2080, %v2080
        %v2135 = vmul.f32 %v2082, %v2082
        %v2136 = vmul.f32 %v2086, %v2086
        %v2137 = vmul.f32 %v2088, %v2088
        %v2138 = vmul.f32 %v2092, %v2092
        %v2139 = vmul.f32 %v2094, %v2094
        %v2140 = vadd.f32 %v2124, %v2126
        %v2141 = vadd.f32 %v2140, %v2128
        %v2142 = vadd.f32 %v2141, %v2130
        %v2143 = vadd.f32 %v2142, %v2132
        %v2144 = vadd.f32 %v2143, %v2134
        %v2145 = vadd.f32 %v2144, %v2136
        %v2146 = vadd.f32 %v2145, %v2138
        %v2147 = vrot.slane %v2146, 4
        %v2148 = vadd.f32 %v2146, %v2147
        %v2149 = vrot.slane %v2148, 2
        %v2150 = vadd.f32 %v2148, %v2149
        %v2151 = vrot.slane %v2150, 1
        %v2152 = vadd.f32 %v2150, %v2151
        %v2153 = vadd.f32 %v2125, %v2127
        %v2154 = vadd.f32 %v2153, %v2129
        %v2155 = vadd.f32 %v2154, %v2131
        %v2156 = vadd.f32 %v2155, %v2133
        %v2157 = vadd.f32 %v2156, %v2135
        %v2158 = vadd.f32 %v2157, %v2137
        %v2159 = vadd.f32 %v2158, %v2139
        %v2160 = vrot.slane %v2159, 4
        %v2161 = vadd.f32 %v2159, %v2160
        %v2162 = vrot.slane %v2161, 2
        %v2163 = vadd.f32 %v2161, %v2162
        %v2164 = vrot.slane %v2163, 1
        %v2165 = vadd.f32 %v2163, %v2164
        %v2166 = vmul.f32 %v2152, %v903
        %v2167 = vmul.f32 %v2165, %v903
        %v2168 = vmul.f32 %v2122, %v2122
        %v2169 = vmul.f32 %v2123, %v2123
        %v2170 = vsub.f32 %v2166, %v2168
        %v2171 = vsub.f32 %v2167, %v2169
        %v2172 = vadd.f32 %v2170, 1e-05
        %v2173 = vadd.f32 %v2171, 1e-05
        %v2174 = vrsqrt.pop %v2172
        %v2175 = vrsqrt.pop %v2173
        %v2176 = vsub.f32 %v2050, %v2122
        %v2177 = vsub.f32 %v2052, %v2123
        %v2178 = vsub.f32 %v2056, %v2122
        %v2179 = vsub.f32 %v2058, %v2123
        %v2180 = vsub.f32 %v2062, %v2122
        %v2181 = vsub.f32 %v2064, %v2123
        %v2182 = vsub.f32 %v2068, %v2122
        %v2183 = vsub.f32 %v2070, %v2123
        %v2184 = vsub.f32 %v2074, %v2122
        %v2185 = vsub.f32 %v2076, %v2123
        %v2186 = vsub.f32 %v2080, %v2122
        %v2187 = vsub.f32 %v2082, %v2123
        %v2188 = vsub.f32 %v2086, %v2122
        %v2189 = vsub.f32 %v2088, %v2123
        %v2190 = vsub.f32 %v2092, %v2122
        %v2191 = vsub.f32 %v2094, %v2123
        %v2192 = vmul.f32 %v2176, %v2174
        %v2193 = vmul.f32 %v2177, %v2175
        %v2194 = vmul.f32 %v2178, %v2174
        %v2195 = vmul.f32 %v2179, %v2175
        %v2196 = vmul.f32 %v2180, %v2174
        %v2197 = vmul.f32 %v2181, %v2175
        %v2198 = vmul.f32 %v2182, %v2174
        %v2199 = vmul.f32 %v2183, %v2175
        %v2200 = vmul.f32 %v2184, %v2174
        %v2201 = vmul.f32 %v2185, %v2175
        %v2202 = vmul.f32 %v2186, %v2174
        %v2203 = vmul.f32 %v2187, %v2175
        %v2204 = vmul.f32 %v2188, %v2174
        %v2205 = vmul.f32 %v2189, %v2175
        %v2206 = vmul.f32 %v2190, %v2174
        %v2207 = vmul.f32 %v2191, %v2175
        %2209 = vset.pattern.permute.xlu0 0
        %2210 = vperm.xlu0 %2209, %v1876
        %v2211 = vpop.permute.xlu0 %2210
        %2214 = vset.pattern.permute.xlu0 0
        %2215 = vperm.xlu0 %2214, %v1877
        %v2216 = vpop.permute.xlu0 %2215
        %2219 = vset.pattern.permute.xlu0 0
        %2220 = vperm.xlu0 %2219, %v1878
        %v2221 = vpop.permute.xlu0 %2220
        %2224 = vset.pattern.permute.xlu0 0
        %2225 = vperm.xlu0 %2224, %v1879
        %v2226 = vpop.permute.xlu0 %2225
        %2229 = vset.pattern.permute.xlu0 0
        %2230 = vperm.xlu0 %2229, %v1880
        %v2231 = vpop.permute.xlu0 %2230
        %2234 = vset.pattern.permute.xlu0 0
        %2235 = vperm.xlu0 %2234, %v1881
        %v2236 = vpop.permute.xlu0 %2235
        %2239 = vset.pattern.permute.xlu0 0
        %2240 = vperm.xlu0 %2239, %v1882
        %v2241 = vpop.permute.xlu0 %2240
        %2244 = vset.pattern.permute.xlu0 0
        %2245 = vperm.xlu0 %2244, %v1883
        %v2246 = vpop.permute.xlu0 %2245
        %v2248 = vmul.f32 %v2192, %v2211
        %v2249 = vmul.f32 %v2193, %v2211
        %v2250 = vmul.f32 %v2194, %v2216
        %v2251 = vmul.f32 %v2195, %v2216
        %v2252 = vmul.f32 %v2196, %v2221
        %v2253 = vmul.f32 %v2197, %v2221
        %v2254 = vmul.f32 %v2198, %v2226
        %v2255 = vmul.f32 %v2199, %v2226
        %v2256 = vmul.f32 %v2200, %v2231
        %v2257 = vmul.f32 %v2201, %v2231
        %v2258 = vmul.f32 %v2202, %v2236
        %v2259 = vmul.f32 %v2203, %v2236
        %v2260 = vmul.f32 %v2204, %v2241
        %v2261 = vmul.f32 %v2205, %v2241
        %v2262 = vmul.f32 %v2206, %v2246
        %v2263 = vmul.f32 %v2207, %v2246
        %2265 = vset.pattern.permute.xlu0 0
        %2266 = vperm.xlu0 %2265, %v1885
        %v2267 = vpop.permute.xlu0 %2266
        %2270 = vset.pattern.permute.xlu0 0
        %2271 = vperm.xlu0 %2270, %v1886
        %v2272 = vpop.permute.xlu0 %2271
        %2275 = vset.pattern.permute.xlu0 0
        %2276 = vperm.xlu0 %2275, %v1887
        %v2277 = vpop.permute.xlu0 %2276
        %2280 = vset.pattern.permute.xlu0 0
        %2281 = vperm.xlu0 %2280, %v1888
        %v2282 = vpop.permute.xlu0 %2281
        %2285 = vset.pattern.permute.xlu0 0
        %2286 = vperm.xlu0 %2285, %v1889
        %v2287 = vpop.permute.xlu0 %2286
        %2290 = vset.pattern.permute.xlu0 0
        %2291 = vperm.xlu0 %2290, %v1890
        %v2292 = vpop.permute.xlu0 %2291
        %2295 = vset.pattern.permute.xlu0 0
        %2296 = vperm.xlu0 %2295, %v1891
        %v2297 = vpop.permute.xlu0 %2296
        %2300 = vset.pattern.permute.xlu0 0
        %2301 = vperm.xlu0 %2300, %v1892
        %v2302 = vpop.permute.xlu0 %2301
        %v2304 = vadd.f32 %v2248, %v2267
        %v2305 = vadd.f32 %v2249, %v2267
        %v2306 = vadd.f32 %v2250, %v2272
        %v2307 = vadd.f32 %v2251, %v2272
        %v2308 = vadd.f32 %v2252, %v2277
        %v2309 = vadd.f32 %v2253, %v2277
        %v2310 = vadd.f32 %v2254, %v2282
        %v2311 = vadd.f32 %v2255, %v2282
        %v2312 = vadd.f32 %v2256, %v2287
        %v2313 = vadd.f32 %v2257, %v2287
        %v2314 = vadd.f32 %v2258, %v2292
        %v2315 = vadd.f32 %v2259, %v2292
        %v2316 = vadd.f32 %v2260, %v2297
        %v2317 = vadd.f32 %v2261, %v2297
        %v2318 = vadd.f32 %v2262, %v2302
        %v2319 = vadd.f32 %v2263, %v2302
        %s2320 = scalar_lea.vmem %s3, 128
        %v2321 = vld [vmem:[%s2320] sm:$0xff]
        %v2322 = vld [vmem:[%s2320 + $0x8] sm:$0xff]
        %v2323 = vld [vmem:[%s2320 + $0x10] sm:$0xff]
        %v2324 = vld [vmem:[%s2320 + $0x18] sm:$0xff]
        %v2325 = vld [vmem:[%s2320 + $0x20] sm:$0xff]
        %v2326 = vld [vmem:[%s2320 + $0x28] sm:$0xff]
        %v2327 = vld [vmem:[%s2320 + $0x30] sm:$0xff]
        %v2328 = vld [vmem:[%s2320 + $0x38] sm:$0xff]
        %v2329 = vld [vmem:[%s2320 + $0x40] sm:$0xff]
        %v2330 = vld [vmem:[%s2320 + $0x48] sm:$0xff]
        %v2331 = vld [vmem:[%s2320 + $0x50] sm:$0xff]
        %v2332 = vld [vmem:[%s2320 + $0x58] sm:$0xff]
        %v2333 = vld [vmem:[%s2320 + $0x60] sm:$0xff]
        %v2334 = vld [vmem:[%s2320 + $0x68] sm:$0xff]
        %v2335 = vld [vmem:[%s2320 + $0x70] sm:$0xff]
        %v2336 = vld [vmem:[%s2320 + $0x78] sm:$0xff]
        %s2337 = scalar_lea.vmem %s5, 128
        %v2338 = vld [vmem:[%s2337] sm:$0xff]
        %v2339 = vld [vmem:[%s2337 + $0x8] sm:$0xff]
        %v2340 = vld [vmem:[%s2337 + $0x10] sm:$0xff]
        %v2341 = vld [vmem:[%s2337 + $0x18] sm:$0xff]
        %v2342 = vld [vmem:[%s2337 + $0x20] sm:$0xff]
        %v2343 = vld [vmem:[%s2337 + $0x28] sm:$0xff]
        %v2344 = vld [vmem:[%s2337 + $0x30] sm:$0xff]
        %v2345 = vld [vmem:[%s2337 + $0x38] sm:$0xff]
        %v2346 = vld [vmem:[%s2337 + $0x40] sm:$0xff]
        %v2347 = vld [vmem:[%s2337 + $0x48] sm:$0xff]
        %v2348 = vld [vmem:[%s2337 + $0x50] sm:$0xff]
        %v2349 = vld [vmem:[%s2337 + $0x58] sm:$0xff]
        %v2350 = vld [vmem:[%s2337 + $0x60] sm:$0xff]
        %v2351 = vld [vmem:[%s2337 + $0x68] sm:$0xff]
        %v2352 = vld [vmem:[%s2337 + $0x70] sm:$0xff]
        %v2353 = vld [vmem:[%s2337 + $0x78] sm:$0xff]
        %2355 = vset.pattern.permute.xlu0 0
        %2356 = vperm.xlu0 %2355, %v2338
        %v2357 = vpop.permute.xlu0 %2356
        %2360 = vset.pattern.permute.xlu0 0
        %2361 = vperm.xlu0 %2360, %v2339
        %v2362 = vpop.permute.xlu0 %2361
        %2365 = vset.pattern.permute.xlu0 0
        %2366 = vperm.xlu0 %2365, %v2340
        %v2367 = vpop.permute.xlu0 %2366
        %2370 = vset.pattern.permute.xlu0 0
        %2371 = vperm.xlu0 %2370, %v2341
        %v2372 = vpop.permute.xlu0 %2371
        %2375 = vset.pattern.permute.xlu0 0
        %2376 = vperm.xlu0 %2375, %v2342
        %v2377 = vpop.permute.xlu0 %2376
        %2380 = vset.pattern.permute.xlu0 0
        %2381 = vperm.xlu0 %2380, %v2343
        %v2382 = vpop.permute.xlu0 %2381
        %2385 = vset.pattern.permute.xlu0 0
        %2386 = vperm.xlu0 %2385, %v2344
        %v2387 = vpop.permute.xlu0 %2386
        %2390 = vset.pattern.permute.xlu0 0
        %2391 = vperm.xlu0 %2390, %v2345
        %v2392 = vpop.permute.xlu0 %2391
        %2395 = vset.pattern.permute.xlu0 0
        %2396 = vperm.xlu0 %2395, %v2346
        %v2397 = vpop.permute.xlu0 %2396
        %2400 = vset.pattern.permute.xlu0 0
        %2401 = vperm.xlu0 %2400, %v2347
        %v2402 = vpop.permute.xlu0 %2401
        %2405 = vset.pattern.permute.xlu0 0
        %2406 = vperm.xlu0 %2405, %v2348
        %v2407 = vpop.permute.xlu0 %2406
        %2410 = vset.pattern.permute.xlu0 0
        %2411 = vperm.xlu0 %2410, %v2349
        %v2412 = vpop.permute.xlu0 %2411
        %2415 = vset.pattern.permute.xlu0 0
        %2416 = vperm.xlu0 %2415, %v2350
        %v2417 = vpop.permute.xlu0 %2416
        %2420 = vset.pattern.permute.xlu0 0
        %2421 = vperm.xlu0 %2420, %v2351
        %v2422 = vpop.permute.xlu0 %2421
        %2425 = vset.pattern.permute.xlu0 0
        %2426 = vperm.xlu0 %2425, %v2352
        %v2427 = vpop.permute.xlu0 %2426
        %2430 = vset.pattern.permute.xlu0 0
        %2431 = vperm.xlu0 %2430, %v2353
        %v2432 = vpop.permute.xlu0 %2431
        %v2435 = vsel %vm1214, %v2321, 0
        %v2438 = vsel %vm1214, %v2322, 0
        %v2441 = vsel %vm1214, %v2323, 0
        %v2444 = vsel %vm1214, %v2324, 0
        %v2447 = vsel %vm1214, %v2325, 0
        %v2450 = vsel %vm1214, %v2326, 0
        %v2453 = vsel %vm1214, %v2327, 0
        %v2456 = vsel %vm1214, %v2328, 0
        %v2459 = vsel %vm1214, %v2329, 0
        %v2462 = vsel %vm1214, %v2330, 0
        %v2465 = vsel %vm1214, %v2331, 0
        %v2468 = vsel %vm1214, %v2332, 0
        %v2471 = vsel %vm1214, %v2333, 0
        %v2474 = vsel %vm1214, %v2334, 0
        %v2477 = vsel %vm1214, %v2335, 0
        %v2480 = vsel %vm1214, %v2336, 0
        %2482 = vmatprep.subr.mxu0 %v2305
        %2483 = vmatpush1.msra.mxu0 %v2304
        %2484 = vmatprep.subr.mxu0 %v2307
        %2485 = vmatpush1.msra.mxu0 %v2306
        %2486 = vmatprep.subr.mxu0 %v2309
        %2487 = vmatpush1.msra.mxu0 %v2308
        %2488 = vmatprep.subr.mxu0 %v2311
        %2489 = vmatpush1.msra.mxu0 %v2310
        %2490 = vmatprep.subr.mxu0 %v2313
        %2491 = vmatpush1.msra.mxu0 %v2312
        %2492 = vmatprep.subr.mxu0 %v2315
        %2493 = vmatpush1.msra.mxu0 %v2314
        %2494 = vmatprep.subr.mxu0 %v2317
        %2495 = vmatpush1.msra.mxu0 %v2316
        %2496 = vmatprep.subr.mxu0 %v2319
        %2497 = vmatpush1.msra.mxu0 %v2318
        %2498 = vmatprep.subr.mxu0 0.0
        %2499 = vmatpush1.msra.mxu0 0.0
        %2500 = vmatprep.subr.mxu0 0.0
        %2501 = vmatpush1.msra.mxu0 0.0
        %2502 = vmatprep.subr.mxu0 0.0
        %2503 = vmatpush1.msra.mxu0 0.0
        %2504 = vmatprep.subr.mxu0 0.0
        %2505 = vmatpush1.msra.mxu0 0.0
        %2506 = vmatprep.subr.mxu0 0.0
        %2507 = vmatpush1.msra.mxu0 0.0
        %2508 = vmatprep.subr.mxu0 0.0
        %2509 = vmatpush1.msra.mxu0 0.0
        %2510 = vmatprep.subr.mxu0 0.0
        %2511 = vmatpush1.msra.mxu0 0.0
        %2512 = vmatprep.subr.mxu0 0.0
        %2513 = vmatpush1.msra.mxu0 0.0
        %2514 = vmatprep.subr.mxu0 0.0
        %2515 = vmatpush1.msra.mxu0 0.0
        %2516 = vmatprep.subr.mxu0 0.0
        %2517 = vmatpush1.msra.mxu0 0.0
        %2518 = vmatprep.subr.mxu0 0.0
        %2519 = vmatpush1.msra.mxu0 0.0
        %2520 = vmatprep.subr.mxu0 0.0
        %2521 = vmatpush1.msra.mxu0 0.0
        %2522 = vmatprep.subr.mxu0 0.0
        %2523 = vmatpush1.msra.mxu0 0.0
        %2524 = vmatprep.subr.mxu0 0.0
        %2525 = vmatpush1.msra.mxu0 0.0
        %2526 = vmatprep.subr.mxu0 0.0
        %2527 = vmatpush1.msra.mxu0 0.0
        %2528 = vmatprep.subr.mxu0 0.0
        %2529 = vmatpush1.msra.mxu0 0.0
        %2530 = vmatprep.subr.mxu0 0.0
        %2531 = vmatpush1.msra.mxu0 0.0
        %2532 = vmatprep.subr.mxu0 0.0
        %2533 = vmatpush1.msra.mxu0 0.0
        %2534 = vmatprep.subr.mxu0 0.0
        %2535 = vmatpush1.msra.mxu0 0.0
        %2536 = vmatprep.subr.mxu0 0.0
        %2537 = vmatpush1.msra.mxu0 0.0
        %2538 = vmatprep.subr.mxu0 0.0
        %2539 = vmatpush1.msra.mxu0 0.0
        %2540 = vmatprep.subr.mxu0 0.0
        %2541 = vmatpush1.msra.mxu0 0.0
        %2542 = vmatprep.subr.mxu0 0.0
        %2543 = vmatpush1.msra.mxu0 0.0
        %2544 = vmatprep.subr.mxu0 0.0
        %2545 = vmatpush1.msra.mxu0 0.0
        %2546 = vmatprep.mubr.f32.mxu0 0.0
        %2547 = vmatmul.mubr.f32.gmra.mrb[0].mxu0 %v2435
        %v2548 = vpop.f32.mrb[0].mxu0
        %v2549 = vadd.f32 %v2357, %v2548
        %v2550 = vpop.f32.mrb[0].mxu0
        %v2551 = vadd.f32 %v2357, %v2550
        %2552 = vmatprep.mubr.f32.mxu0 0.0
        %2553 = vmatmul.mubr.f32.gmra.mrb[0].mxu0 %v2438
        %v2554 = vpop.f32.mrb[0].mxu0
        %v2555 = vadd.f32 %v2362, %v2554
        %v2556 = vpop.f32.mrb[0].mxu0
        %v2557 = vadd.f32 %v2362, %v2556
        %2558 = vmatprep.mubr.f32.mxu0 0.0
        %2559 = vmatmul.mubr.f32.gmra.mrb[0].mxu0 %v2441
        %v2560 = vpop.f32.mrb[0].mxu0
        %v2561 = vadd.f32 %v2367, %v2560
        %v2562 = vpop.f32.mrb[0].mxu0
        %v2563 = vadd.f32 %v2367, %v2562
        %2564 = vmatprep.mubr.f32.mxu0 0.0
        %2565 = vmatmul.mubr.f32.gmra.mrb[0].mxu0 %v2444
        %v2566 = vpop.f32.mrb[0].mxu0
        %v2567 = vadd.f32 %v2372, %v2566
        %v2568 = vpop.f32.mrb[0].mxu0
        %v2569 = vadd.f32 %v2372, %v2568
        %2570 = vmatprep.mubr.f32.mxu0 0.0
        %2571 = vmatmul.mubr.f32.gmra.mrb[0].mxu0 %v2447
        %v2572 = vpop.f32.mrb[0].mxu0
        %v2573 = vadd.f32 %v2377, %v2572
        %v2574 = vpop.f32.mrb[0].mxu0
        %v2575 = vadd.f32 %v2377, %v2574
        %2576 = vmatprep.mubr.f32.mxu0 0.0
        %2577 = vmatmul.mubr.f32.gmra.mrb[0].mxu0 %v2450
        %v2578 = vpop.f32.mrb[0].mxu0
        %v2579 = vadd.f32 %v2382, %v2578
        %v2580 = vpop.f32.mrb[0].mxu0
        %v2581 = vadd.f32 %v2382, %v2580
        %2582 = vmatprep.mubr.f32.mxu0 0.0
        %2583 = vmatmul.mubr.f32.gmra.mrb[0].mxu0 %v2453
        %v2584 = vpop.f32.mrb[0].mxu0
        %v2585 = vadd.f32 %v2387, %v2584
        %v2586 = vpop.f32.mrb[0].mxu0
        %v2587 = vadd.f32 %v2387, %v2586
        %2588 = vmatprep.mubr.f32.mxu0 0.0
        %2589 = vmatmul.mubr.f32.gmra.mrb[0].mxu0 %v2456
        %v2590 = vpop.f32.mrb[0].mxu0
        %v2591 = vadd.f32 %v2392, %v2590
        %v2592 = vpop.f32.mrb[0].mxu0
        %v2593 = vadd.f32 %v2392, %v2592
        %2594 = vmatprep.mubr.f32.mxu0 0.0
        %2595 = vmatmul.mubr.f32.gmra.mrb[0].mxu0 %v2459
        %v2596 = vpop.f32.mrb[0].mxu0
        %v2597 = vadd.f32 %v2397, %v2596
        %v2598 = vpop.f32.mrb[0].mxu0
        %v2599 = vadd.f32 %v2397, %v2598
        %2600 = vmatprep.mubr.f32.mxu0 0.0
        %2601 = vmatmul.mubr.f32.gmra.mrb[0].mxu0 %v2462
        %v2602 = vpop.f32.mrb[0].mxu0
        %v2603 = vadd.f32 %v2402, %v2602
        %v2604 = vpop.f32.mrb[0].mxu0
        %v2605 = vadd.f32 %v2402, %v2604
        %2606 = vmatprep.mubr.f32.mxu0 0.0
        %2607 = vmatmul.mubr.f32.gmra.mrb[0].mxu0 %v2465
        %v2608 = vpop.f32.mrb[0].mxu0
        %v2609 = vadd.f32 %v2407, %v2608
        %v2610 = vpop.f32.mrb[0].mxu0
        %v2611 = vadd.f32 %v2407, %v2610
        %2612 = vmatprep.mubr.f32.mxu0 0.0
        %2613 = vmatmul.mubr.f32.gmra.mrb[0].mxu0 %v2468
        %v2614 = vpop.f32.mrb[0].mxu0
        %v2615 = vadd.f32 %v2412, %v2614
        %v2616 = vpop.f32.mrb[0].mxu0
        %v2617 = vadd.f32 %v2412, %v2616
        %2618 = vmatprep.mubr.f32.mxu0 0.0
        %2619 = vmatmul.mubr.f32.gmra.mrb[0].mxu0 %v2471
        %v2620 = vpop.f32.mrb[0].mxu0
        %v2621 = vadd.f32 %v2417, %v2620
        %v2622 = vpop.f32.mrb[0].mxu0
        %v2623 = vadd.f32 %v2417, %v2622
        %2624 = vmatprep.mubr.f32.mxu0 0.0
        %2625 = vmatmul.mubr.f32.gmra.mrb[0].mxu0 %v2474
        %v2626 = vpop.f32.mrb[0].mxu0
        %v2627 = vadd.f32 %v2422, %v2626
        %v2628 = vpop.f32.mrb[0].mxu0
        %v2629 = vadd.f32 %v2422, %v2628
        %2630 = vmatprep.mubr.f32.mxu0 0.0
        %2631 = vmatmul.mubr.f32.gmra.mrb[0].mxu0 %v2477
        %v2632 = vpop.f32.mrb[0].mxu0
        %v2633 = vadd.f32 %v2427, %v2632
        %v2634 = vpop.f32.mrb[0].mxu0
        %v2635 = vadd.f32 %v2427, %v2634
        %2636 = vmatprep.mubr.f32.mxu0 0.0
        %2637 = vmatmul.mubr.f32.gmra.mrb[0].mxu0 %v2480
        %v2638 = vpop.f32.mrb[0].mxu0
        %v2639 = vadd.f32 %v2432, %v2638
        %v2640 = vpop.f32.mrb[0].mxu0
        %v2641 = vadd.f32 %v2432, %v2640
        %2642 = vdwg.mxu0
        %v2643 = vmax.f32 %v2549, 0.0
        %v2644 = vmax.f32 %v2551, 0.0
        %v2645 = vmax.f32 %v2555, 0.0
        %v2646 = vmax.f32 %v2557, 0.0
        %v2647 = vmax.f32 %v2561, 0.0
        %v2648 = vmax.f32 %v2563, 0.0
        %v2649 = vmax.f32 %v2567, 0.0
        %v2650 = vmax.f32 %v2569, 0.0
        %v2651 = vmax.f32 %v2573, 0.0
        %v2652 = vmax.f32 %v2575, 0.0
        %v2653 = vmax.f32 %v2579, 0.0
        %v2654 = vmax.f32 %v2581, 0.0
        %v2655 = vmax.f32 %v2585, 0.0
        %v2656 = vmax.f32 %v2587, 0.0
        %v2657 = vmax.f32 %v2591, 0.0
        %v2658 = vmax.f32 %v2593, 0.0
        %v2659 = vmax.f32 %v2597, 0.0
        %v2660 = vmax.f32 %v2599, 0.0
        %v2661 = vmax.f32 %v2603, 0.0
        %v2662 = vmax.f32 %v2605, 0.0
        %v2663 = vmax.f32 %v2609, 0.0
        %v2664 = vmax.f32 %v2611, 0.0
        %v2665 = vmax.f32 %v2615, 0.0
        %v2666 = vmax.f32 %v2617, 0.0
        %v2667 = vmax.f32 %v2621, 0.0
        %v2668 = vmax.f32 %v2623, 0.0
        %v2669 = vmax.f32 %v2627, 0.0
        %v2670 = vmax.f32 %v2629, 0.0
        %v2671 = vmax.f32 %v2633, 0.0
        %v2672 = vmax.f32 %v2635, 0.0
        %v2673 = vmax.f32 %v2639, 0.0
        %v2674 = vmax.f32 %v2641, 0.0
        %s2675 = scalar_lea.vmem %s4, 64
        %v2676 = vld [vmem:[%s2675] sm:$0xff]
        %v2677 = vld [vmem:[%s2675 + $0x8] sm:$0xff]
        %v2678 = vld [vmem:[%s2675 + $0x10] sm:$0xff]
        %v2679 = vld [vmem:[%s2675 + $0x18] sm:$0xff]
        %v2680 = vld [vmem:[%s2675 + $0x20] sm:$0xff]
        %v2681 = vld [vmem:[%s2675 + $0x28] sm:$0xff]
        %v2682 = vld [vmem:[%s2675 + $0x30] sm:$0xff]
        %v2683 = vld [vmem:[%s2675 + $0x38] sm:$0xff]
        %2685 = vset.pattern.permute.xlu0 0
        %2686 = vperm.xlu0 %2685, %v1867
        %v2687 = vpop.permute.xlu0 %2686
        %2690 = vset.pattern.permute.xlu0 0
        %2691 = vperm.xlu0 %2690, %v1868
        %v2692 = vpop.permute.xlu0 %2691
        %2695 = vset.pattern.permute.xlu0 0
        %2696 = vperm.xlu0 %2695, %v1869
        %v2697 = vpop.permute.xlu0 %2696
        %2700 = vset.pattern.permute.xlu0 0
        %2701 = vperm.xlu0 %2700, %v1870
        %v2702 = vpop.permute.xlu0 %2701
        %2705 = vset.pattern.permute.xlu0 0
        %2706 = vperm.xlu0 %2705, %v1871
        %v2707 = vpop.permute.xlu0 %2706
        %2710 = vset.pattern.permute.xlu0 0
        %2711 = vperm.xlu0 %2710, %v1872
        %v2712 = vpop.permute.xlu0 %2711
        %2715 = vset.pattern.permute.xlu0 0
        %2716 = vperm.xlu0 %2715, %v1873
        %v2717 = vpop.permute.xlu0 %2716
        %2720 = vset.pattern.permute.xlu0 0
        %2721 = vperm.xlu0 %2720, %v1874
        %v2722 = vpop.permute.xlu0 %2721
        %2724 = vmatprep.subr.mxu0 %v2644
        %2725 = vmatpush1.msra.mxu0 %v2643
        %2726 = vmatprep.subr.mxu0 %v2646
        %2727 = vmatpush1.msra.mxu0 %v2645
        %2728 = vmatprep.subr.mxu0 %v2648
        %2729 = vmatpush1.msra.mxu0 %v2647
        %2730 = vmatprep.subr.mxu0 %v2650
        %2731 = vmatpush1.msra.mxu0 %v2649
        %2732 = vmatprep.subr.mxu0 %v2652
        %2733 = vmatpush1.msra.mxu0 %v2651
        %2734 = vmatprep.subr.mxu0 %v2654
        %2735 = vmatpush1.msra.mxu0 %v2653
        %2736 = vmatprep.subr.mxu0 %v2656
        %2737 = vmatpush1.msra.mxu0 %v2655
        %2738 = vmatprep.subr.mxu0 %v2658
        %2739 = vmatpush1.msra.mxu0 %v2657
        %2740 = vmatprep.subr.mxu0 %v2660
        %2741 = vmatpush1.msra.mxu0 %v2659
        %2742 = vmatprep.subr.mxu0 %v2662
        %2743 = vmatpush1.msra.mxu0 %v2661
        %2744 = vmatprep.subr.mxu0 %v2664
        %2745 = vmatpush1.msra.mxu0 %v2663
        %2746 = vmatprep.subr.mxu0 %v2666
        %2747 = vmatpush1.msra.mxu0 %v2665
        %2748 = vmatprep.subr.mxu0 %v2668
        %2749 = vmatpush1.msra.mxu0 %v2667
        %2750 = vmatprep.subr.mxu0 %v2670
        %2751 = vmatpush1.msra.mxu0 %v2669
        %2752 = vmatprep.subr.mxu0 %v2672
        %2753 = vmatpush1.msra.mxu0 %v2671
        %2754 = vmatprep.subr.mxu0 %v2674
        %2755 = vmatpush1.msra.mxu0 %v2673
        %2756 = vmatprep.subr.mxu0 0.0
        %2757 = vmatpush1.msra.mxu0 0.0
        %2758 = vmatprep.subr.mxu0 0.0
        %2759 = vmatpush1.msra.mxu0 0.0
        %2760 = vmatprep.subr.mxu0 0.0
        %2761 = vmatpush1.msra.mxu0 0.0
        %2762 = vmatprep.subr.mxu0 0.0
        %2763 = vmatpush1.msra.mxu0 0.0
        %2764 = vmatprep.subr.mxu0 0.0
        %2765 = vmatpush1.msra.mxu0 0.0
        %2766 = vmatprep.subr.mxu0 0.0
        %2767 = vmatpush1.msra.mxu0 0.0
        %2768 = vmatprep.subr.mxu0 0.0
        %2769 = vmatpush1.msra.mxu0 0.0
        %2770 = vmatprep.subr.mxu0 0.0
        %2771 = vmatpush1.msra.mxu0 0.0
        %2772 = vmatprep.subr.mxu0 0.0
        %2773 = vmatpush1.msra.mxu0 0.0
        %2774 = vmatprep.subr.mxu0 0.0
        %2775 = vmatpush1.msra.mxu0 0.0
        %2776 = vmatprep.subr.mxu0 0.0
        %2777 = vmatpush1.msra.mxu0 0.0
        %2778 = vmatprep.subr.mxu0 0.0
        %2779 = vmatpush1.msra.mxu0 0.0
        %2780 = vmatprep.subr.mxu0 0.0
        %2781 = vmatpush1.msra.mxu0 0.0
        %2782 = vmatprep.subr.mxu0 0.0
        %2783 = vmatpush1.msra.mxu0 0.0
        %2784 = vmatprep.subr.mxu0 0.0
        %2785 = vmatpush1.msra.mxu0 0.0
        %2786 = vmatprep.subr.mxu0 0.0
        %2787 = vmatpush1.msra.mxu0 0.0
        %2788 = vmatprep.mubr.f32.mxu0 0.0
        %2789 = vmatmul.mubr.f32.gmra.mrb[0].mxu0 %v2676
        %v2790 = vpop.f32.mrb[0].mxu0
        %v2791 = vadd.f32 %v2687, %v2790
        %v2792 = vpop.f32.mrb[0].mxu0
        %v2793 = vadd.f32 %v2687, %v2792
        %2794 = vmatprep.mubr.f32.mxu0 0.0
        %2795 = vmatmul.mubr.f32.gmra.mrb[0].mxu0 %v2677
        %v2796 = vpop.f32.mrb[0].mxu0
        %v2797 = vadd.f32 %v2692, %v2796
        %v2798 = vpop.f32.mrb[0].mxu0
        %v2799 = vadd.f32 %v2692, %v2798
        %2800 = vmatprep.mubr.f32.mxu0 0.0
        %2801 = vmatmul.mubr.f32.gmra.mrb[0].mxu0 %v2678
        %v2802 = vpop.f32.mrb[0].mxu0
        %v2803 = vadd.f32 %v2697, %v2802
        %v2804 = vpop.f32.mrb[0].mxu0
        %v2805 = vadd.f32 %v2697, %v2804
        %2806 = vmatprep.mubr.f32.mxu0 0.0
        %2807 = vmatmul.mubr.f32.gmra.mrb[0].mxu0 %v2679
        %v2808 = vpop.f32.mrb[0].mxu0
        %v2809 = vadd.f32 %v2702, %v2808
        %v2810 = vpop.f32.mrb[0].mxu0
        %v2811 = vadd.f32 %v2702, %v2810
        %2812 = vmatprep.mubr.f32.mxu0 0.0
        %2813 = vmatmul.mubr.f32.gmra.mrb[0].mxu0 %v2680
        %v2814 = vpop.f32.mrb[0].mxu0
        %v2815 = vadd.f32 %v2707, %v2814
        %v2816 = vpop.f32.mrb[0].mxu0
        %v2817 = vadd.f32 %v2707, %v2816
        %2818 = vmatprep.mubr.f32.mxu0 0.0
        %2819 = vmatmul.mubr.f32.gmra.mrb[0].mxu0 %v2681
        %v2820 = vpop.f32.mrb[0].mxu0
        %v2821 = vadd.f32 %v2712, %v2820
        %v2822 = vpop.f32.mrb[0].mxu0
        %v2823 = vadd.f32 %v2712, %v2822
        %2824 = vmatprep.mubr.f32.mxu0 0.0
        %2825 = vmatmul.mubr.f32.gmra.mrb[0].mxu0 %v2682
        %v2826 = vpop.f32.mrb[0].mxu0
        %v2827 = vadd.f32 %v2717, %v2826
        %v2828 = vpop.f32.mrb[0].mxu0
        %v2829 = vadd.f32 %v2717, %v2828
        %2830 = vmatprep.mubr.f32.mxu0 0.0
        %2831 = vmatmul.mubr.f32.gmra.mrb[0].mxu0 %v2683
        %v2832 = vpop.f32.mrb[0].mxu0
        %v2833 = vadd.f32 %v2722, %v2832
        %v2834 = vpop.f32.mrb[0].mxu0
        %v2835 = vadd.f32 %v2722, %v2834
        %2836 = vdwg.mxu0
        %v2837 = vadd.f32 %v2304, %v2791
        %v2838 = vadd.f32 %v2305, %v2793
        %v2839 = vadd.f32 %v2306, %v2797
        %v2840 = vadd.f32 %v2307, %v2799
        %v2841 = vadd.f32 %v2308, %v2803
        %v2842 = vadd.f32 %v2309, %v2805
        %v2843 = vadd.f32 %v2310, %v2809
        %v2844 = vadd.f32 %v2311, %v2811
        %v2845 = vadd.f32 %v2312, %v2815
        %v2846 = vadd.f32 %v2313, %v2817
        %v2847 = vadd.f32 %v2314, %v2821
        %v2848 = vadd.f32 %v2315, %v2823
        %v2849 = vadd.f32 %v2316, %v2827
        %v2850 = vadd.f32 %v2317, %v2829
        %v2851 = vadd.f32 %v2318, %v2833
        %v2852 = vadd.f32 %v2319, %v2835
        %v2853 = vadd.f32 %v2837, %v2839
        %v2854 = vadd.f32 %v2853, %v2841
        %v2855 = vadd.f32 %v2854, %v2843
        %v2856 = vadd.f32 %v2855, %v2845
        %v2857 = vadd.f32 %v2856, %v2847
        %v2858 = vadd.f32 %v2857, %v2849
        %v2859 = vadd.f32 %v2858, %v2851
        %v2860 = vrot.slane %v2859, 4
        %v2861 = vadd.f32 %v2859, %v2860
        %v2862 = vrot.slane %v2861, 2
        %v2863 = vadd.f32 %v2861, %v2862
        %v2864 = vrot.slane %v2863, 1
        %v2865 = vadd.f32 %v2863, %v2864
        %v2866 = vadd.f32 %v2838, %v2840
        %v2867 = vadd.f32 %v2866, %v2842
        %v2868 = vadd.f32 %v2867, %v2844
        %v2869 = vadd.f32 %v2868, %v2846
        %v2870 = vadd.f32 %v2869, %v2848
        %v2871 = vadd.f32 %v2870, %v2850
        %v2872 = vadd.f32 %v2871, %v2852
        %v2873 = vrot.slane %v2872, 4
        %v2874 = vadd.f32 %v2872, %v2873
        %v2875 = vrot.slane %v2874, 2
        %v2876 = vadd.f32 %v2874, %v2875
        %v2877 = vrot.slane %v2876, 1
        %v2878 = vadd.f32 %v2876, %v2877
        %v2879 = vmul.f32 %v2865, %v903
        %v2880 = vmul.f32 %v2878, %v903
        %v2881 = vmul.f32 %v2837, %v2837
        %v2882 = vmul.f32 %v2838, %v2838
        %v2883 = vmul.f32 %v2839, %v2839
        %v2884 = vmul.f32 %v2840, %v2840
        %v2885 = vmul.f32 %v2841, %v2841
        %v2886 = vmul.f32 %v2842, %v2842
        %v2887 = vmul.f32 %v2843, %v2843
        %v2888 = vmul.f32 %v2844, %v2844
        %v2889 = vmul.f32 %v2845, %v2845
        %v2890 = vmul.f32 %v2846, %v2846
        %v2891 = vmul.f32 %v2847, %v2847
        %v2892 = vmul.f32 %v2848, %v2848
        %v2893 = vmul.f32 %v2849, %v2849
        %v2894 = vmul.f32 %v2850, %v2850
        %v2895 = vmul.f32 %v2851, %v2851
        %v2896 = vmul.f32 %v2852, %v2852
        %v2897 = vadd.f32 %v2881, %v2883
        %v2898 = vadd.f32 %v2897, %v2885
        %v2899 = vadd.f32 %v2898, %v2887
        %v2900 = vadd.f32 %v2899, %v2889
        %v2901 = vadd.f32 %v2900, %v2891
        %v2902 = vadd.f32 %v2901, %v2893
        %v2903 = vadd.f32 %v2902, %v2895
        %v2904 = vrot.slane %v2903, 4
        %v2905 = vadd.f32 %v2903, %v2904
        %v2906 = vrot.slane %v2905, 2
        %v2907 = vadd.f32 %v2905, %v2906
        %v2908 = vrot.slane %v2907, 1
        %v2909 = vadd.f32 %v2907, %v2908
        %v2910 = vadd.f32 %v2882, %v2884
        %v2911 = vadd.f32 %v2910, %v2886
        %v2912 = vadd.f32 %v2911, %v2888
        %v2913 = vadd.f32 %v2912, %v2890
        %v2914 = vadd.f32 %v2913, %v2892
        %v2915 = vadd.f32 %v2914, %v2894
        %v2916 = vadd.f32 %v2915, %v2896
        %v2917 = vrot.slane %v2916, 4
        %v2918 = vadd.f32 %v2916, %v2917
        %v2919 = vrot.slane %v2918, 2
        %v2920 = vadd.f32 %v2918, %v2919
        %v2921 = vrot.slane %v2920, 1
        %v2922 = vadd.f32 %v2920, %v2921
        %v2923 = vmul.f32 %v2909, %v903
        %v2924 = vmul.f32 %v2922, %v903
        %v2925 = vmul.f32 %v2879, %v2879
        %v2926 = vmul.f32 %v2880, %v2880
        %v2927 = vsub.f32 %v2923, %v2925
        %v2928 = vsub.f32 %v2924, %v2926
        %v2929 = vadd.f32 %v2927, 1e-05
        %v2930 = vadd.f32 %v2928, 1e-05
        %v2931 = vrsqrt.pop %v2929
        %v2932 = vrsqrt.pop %v2930
        %v2933 = vsub.f32 %v2837, %v2879
        %v2934 = vsub.f32 %v2838, %v2880
        %v2935 = vsub.f32 %v2839, %v2879
        %v2936 = vsub.f32 %v2840, %v2880
        %v2937 = vsub.f32 %v2841, %v2879
        %v2938 = vsub.f32 %v2842, %v2880
        %v2939 = vsub.f32 %v2843, %v2879
        %v2940 = vsub.f32 %v2844, %v2880
        %v2941 = vsub.f32 %v2845, %v2879
        %v2942 = vsub.f32 %v2846, %v2880
        %v2943 = vsub.f32 %v2847, %v2879
        %v2944 = vsub.f32 %v2848, %v2880
        %v2945 = vsub.f32 %v2849, %v2879
        %v2946 = vsub.f32 %v2850, %v2880
        %v2947 = vsub.f32 %v2851, %v2879
        %v2948 = vsub.f32 %v2852, %v2880
        %v2949 = vmul.f32 %v2933, %v2931
        %v2950 = vmul.f32 %v2934, %v2932
        %v2951 = vmul.f32 %v2935, %v2931
        %v2952 = vmul.f32 %v2936, %v2932
        %v2953 = vmul.f32 %v2937, %v2931
        %v2954 = vmul.f32 %v2938, %v2932
        %v2955 = vmul.f32 %v2939, %v2931
        %v2956 = vmul.f32 %v2940, %v2932
        %v2957 = vmul.f32 %v2941, %v2931
        %v2958 = vmul.f32 %v2942, %v2932
        %v2959 = vmul.f32 %v2943, %v2931
        %v2960 = vmul.f32 %v2944, %v2932
        %v2961 = vmul.f32 %v2945, %v2931
        %v2962 = vmul.f32 %v2946, %v2932
        %v2963 = vmul.f32 %v2947, %v2931
        %v2964 = vmul.f32 %v2948, %v2932
        %2966 = vset.pattern.permute.xlu0 0
        %2967 = vperm.xlu0 %2966, %v1894
        %v2968 = vpop.permute.xlu0 %2967
        %2971 = vset.pattern.permute.xlu0 0
        %2972 = vperm.xlu0 %2971, %v1895
        %v2973 = vpop.permute.xlu0 %2972
        %2976 = vset.pattern.permute.xlu0 0
        %2977 = vperm.xlu0 %2976, %v1896
        %v2978 = vpop.permute.xlu0 %2977
        %2981 = vset.pattern.permute.xlu0 0
        %2982 = vperm.xlu0 %2981, %v1897
        %v2983 = vpop.permute.xlu0 %2982
        %2986 = vset.pattern.permute.xlu0 0
        %2987 = vperm.xlu0 %2986, %v1898
        %v2988 = vpop.permute.xlu0 %2987
        %2991 = vset.pattern.permute.xlu0 0
        %2992 = vperm.xlu0 %2991, %v1899
        %v2993 = vpop.permute.xlu0 %2992
        %2996 = vset.pattern.permute.xlu0 0
        %2997 = vperm.xlu0 %2996, %v1900
        %v2998 = vpop.permute.xlu0 %2997
        %3001 = vset.pattern.permute.xlu0 0
        %3002 = vperm.xlu0 %3001, %v1901
        %v3003 = vpop.permute.xlu0 %3002
        %v3005 = vmul.f32 %v2949, %v2968
        %v3006 = vmul.f32 %v2950, %v2968
        %v3007 = vmul.f32 %v2951, %v2973
        %v3008 = vmul.f32 %v2952, %v2973
        %v3009 = vmul.f32 %v2953, %v2978
        %v3010 = vmul.f32 %v2954, %v2978
        %v3011 = vmul.f32 %v2955, %v2983
        %v3012 = vmul.f32 %v2956, %v2983
        %v3013 = vmul.f32 %v2957, %v2988
        %v3014 = vmul.f32 %v2958, %v2988
        %v3015 = vmul.f32 %v2959, %v2993
        %v3016 = vmul.f32 %v2960, %v2993
        %v3017 = vmul.f32 %v2961, %v2998
        %v3018 = vmul.f32 %v2962, %v2998
        %v3019 = vmul.f32 %v2963, %v3003
        %v3020 = vmul.f32 %v2964, %v3003
        %3022 = vset.pattern.permute.xlu0 0
        %3023 = vperm.xlu0 %3022, %v1903
        %v3024 = vpop.permute.xlu0 %3023
        %3027 = vset.pattern.permute.xlu0 0
        %3028 = vperm.xlu0 %3027, %v1904
        %v3029 = vpop.permute.xlu0 %3028
        %3032 = vset.pattern.permute.xlu0 0
        %3033 = vperm.xlu0 %3032, %v1905
        %v3034 = vpop.permute.xlu0 %3033
        %3037 = vset.pattern.permute.xlu0 0
        %3038 = vperm.xlu0 %3037, %v1906
        %v3039 = vpop.permute.xlu0 %3038
        %3042 = vset.pattern.permute.xlu0 0
        %3043 = vperm.xlu0 %3042, %v1907
        %v3044 = vpop.permute.xlu0 %3043
        %3047 = vset.pattern.permute.xlu0 0
        %3048 = vperm.xlu0 %3047, %v1908
        %v3049 = vpop.permute.xlu0 %3048
        %3052 = vset.pattern.permute.xlu0 0
        %3053 = vperm.xlu0 %3052, %v1909
        %v3054 = vpop.permute.xlu0 %3053
        %3057 = vset.pattern.permute.xlu0 0
        %3058 = vperm.xlu0 %3057, %v1910
        %v3059 = vpop.permute.xlu0 %3058
        %v3061 = vadd.f32 %v3005, %v3024
        %v3062 = vadd.f32 %v3006, %v3024
        %v3063 = vadd.f32 %v3007, %v3029
        %v3064 = vadd.f32 %v3008, %v3029
        %v3065 = vadd.f32 %v3009, %v3034
        %v3066 = vadd.f32 %v3010, %v3034
        %v3067 = vadd.f32 %v3011, %v3039
        %v3068 = vadd.f32 %v3012, %v3039
        %v3069 = vadd.f32 %v3013, %v3044
        %v3070 = vadd.f32 %v3014, %v3044
        %v3071 = vadd.f32 %v3015, %v3049
        %v3072 = vadd.f32 %v3016, %v3049
        %v3073 = vadd.f32 %v3017, %v3054
        %v3074 = vadd.f32 %v3018, %v3054
        %v3075 = vadd.f32 %v3019, %v3059
        %v3076 = vadd.f32 %v3020, %v3059
        %v3077 = vld [vmem:[%s7] sm:$0x1]
        %v3078 = vld [vmem:[#allocation2] sm:$0x1]
        %3080 = vset.pattern.permute.xlu0 0
        %3081 = vperm.xlu0 %3080, %v3078
        %v3082 = vpop.permute.xlu0 %3081
        %v3084 = vlaneseq
        %v3085 = vshrl.u32 %v3084, 7
        %v3086 = vsub.s32 0, %v3085
        %v3087 = vrot.slane %v3082, %v3086
        %v3089 = vsel %vm1214, %v3077, 0
        %3091 = vmatprep.subr.mxu0 %v3062
        %3092 = vmatpush1.msra.mxu0 %v3061
        %3093 = vmatprep.subr.mxu0 %v3064
        %3094 = vmatpush1.msra.mxu0 %v3063
        %3095 = vmatprep.subr.mxu0 %v3066
        %3096 = vmatpush1.msra.mxu0 %v3065
        %3097 = vmatprep.subr.mxu0 %v3068
        %3098 = vmatpush1.msra.mxu0 %v3067
        %3099 = vmatprep.subr.mxu0 %v3070
        %3100 = vmatpush1.msra.mxu0 %v3069
        %3101 = vmatprep.subr.mxu0 %v3072
        %3102 = vmatpush1.msra.mxu0 %v3071
        %3103 = vmatprep.subr.mxu0 %v3074
        %3104 = vmatpush1.msra.mxu0 %v3073
        %3105 = vmatprep.subr.mxu0 %v3076
        %3106 = vmatpush1.msra.mxu0 %v3075
        %3107 = vmatprep.subr.mxu0 0.0
        %3108 = vmatpush1.msra.mxu0 0.0
        %3109 = vmatprep.subr.mxu0 0.0
        %3110 = vmatpush1.msra.mxu0 0.0
        %3111 = vmatprep.subr.mxu0 0.0
        %3112 = vmatpush1.msra.mxu0 0.0
        %3113 = vmatprep.subr.mxu0 0.0
        %3114 = vmatpush1.msra.mxu0 0.0
        %3115 = vmatprep.subr.mxu0 0.0
        %3116 = vmatpush1.msra.mxu0 0.0
        %3117 = vmatprep.subr.mxu0 0.0
        %3118 = vmatpush1.msra.mxu0 0.0
        %3119 = vmatprep.subr.mxu0 0.0
        %3120 = vmatpush1.msra.mxu0 0.0
        %3121 = vmatprep.subr.mxu0 0.0
        %3122 = vmatpush1.msra.mxu0 0.0
        %3123 = vmatprep.subr.mxu0 0.0
        %3124 = vmatpush1.msra.mxu0 0.0
        %3125 = vmatprep.subr.mxu0 0.0
        %3126 = vmatpush1.msra.mxu0 0.0
        %3127 = vmatprep.subr.mxu0 0.0
        %3128 = vmatpush1.msra.mxu0 0.0
        %3129 = vmatprep.subr.mxu0 0.0
        %3130 = vmatpush1.msra.mxu0 0.0
        %3131 = vmatprep.subr.mxu0 0.0
        %3132 = vmatpush1.msra.mxu0 0.0
        %3133 = vmatprep.subr.mxu0 0.0
        %3134 = vmatpush1.msra.mxu0 0.0
        %3135 = vmatprep.subr.mxu0 0.0
        %3136 = vmatpush1.msra.mxu0 0.0
        %3137 = vmatprep.subr.mxu0 0.0
        %3138 = vmatpush1.msra.mxu0 0.0
        %3139 = vmatprep.subr.mxu0 0.0
        %3140 = vmatpush1.msra.mxu0 0.0
        %3141 = vmatprep.subr.mxu0 0.0
        %3142 = vmatpush1.msra.mxu0 0.0
        %3143 = vmatprep.subr.mxu0 0.0
        %3144 = vmatpush1.msra.mxu0 0.0
        %3145 = vmatprep.subr.mxu0 0.0
        %3146 = vmatpush1.msra.mxu0 0.0
        %3147 = vmatprep.subr.mxu0 0.0
        %3148 = vmatpush1.msra.mxu0 0.0
        %3149 = vmatprep.subr.mxu0 0.0
        %3150 = vmatpush1.msra.mxu0 0.0
        %3151 = vmatprep.subr.mxu0 0.0
        %3152 = vmatpush1.msra.mxu0 0.0
        %3153 = vmatprep.subr.mxu0 0.0
        %3154 = vmatpush1.msra.mxu0 0.0
        %3155 = vmatprep.mubr.f32.mxu0 0.0
        %3156 = vmatmul.mubr.f32.gmra.mrb[0].mxu0 %v3089
        %v3157 = vpop.f32.mrb[0].mxu0
        %v3158 = vadd.f32 %v3087, %v3157
        %v3159 = vpop.f32.mrb[0].mxu0
        %v3160 = vadd.f32 %v3087, %v3159
        %3161 = vdwg.mxu0
        %v3164 = vcombine.low %v3158, %v3160
        %v3166 = vunpack.c.l.s4 1966171168
        %v3167 = vunpack.c.0.s8 %v3166
        %v3168 = vlaneseq
        %v3169 = vshrl.u32 %v3168, 7
        %v3170 = vsub.s32 %v3167, %v3169
        %v3171 = vrot.slane %v3164, %v3170
        %v3173 = vunpack.c.l.s4 1966171168
        %v3174 = vunpack.c.0.s8 %v3173
        %v3175 = vlaneseq
        %v3176 = vshrl.u32 %v3175, 7
        %v3177 = vsub.s32 %v3174, %v3176
        %v3178 = vrot.slane %v3171, %v3177
        %s3180 = sshra.s32 %s342, 7
        %s3181 = sand.u32 %s342, 127
        %s3182 = scalar_lea.vmem %s334, %s3180
        %v3183 = vlaneseq
        %vm3184 = vcmp.ge.s32.totalorder %v3183, 0
        %vm3185 = vcmp.lt.s32.totalorder %v3183, 256
        %vm3186 = vmand %vm3184, %vm3185
        %3187 = vst.msk [vmem:[%s3182] sm:$0x3] %vm3186, %v3178
      $region61: #{transformer_forward.1} parent=55 // loop_footer
        %s341 = sadd.s32 1, %s337
      $region62: #{transformer_forward.1} parent=55 // loop_footer_branch
        %336 = sbr.rel target = $region58
      $region63: #{transformer_forward.1} parent=55 // loop_exit
        _
      %s3188 = smul.u32 4, %s22
      %p3189 = scmp.lt.s32.totalorder %s3188, 7
      %s3190 = scalar_select %p3189, %s3188, 7
      %s3191 = scalar_lea.vmem %s9, %s3190
      // Predicated region
      $region64: #{transformer_forward.1} parent=55 // pred_check
        %p3192 = pneg %p234
      $region65: #{transformer_forward.1} parent=55 // pred_check_branch
        %3194 = sbr.rel (%p3192) target = $region67
      $region66: #{transformer_forward.1} parent=55 // pred_region
        %s3195 = smul.u32 4, %s22
      $region67: #{transformer_forward.1} parent=55 // pred_fallthru
        _
    $region56: #{transformer_forward.1} parent=5 // pred_fallthru
      _
    %p3196 = scmp.le.s32.totalorder 2, %s17
    // Predicated region
    $region68: #{transformer_forward.1} parent=5 // pred_check
      %p3197 = pneg %p3196
    $region69: #{transformer_forward.1} parent=5 // pred_check_branch
      %3199 = sbr.rel (%p3197) target = $region71
    $region70: #{transformer_forward.1} parent=5 // pred_region
      %s3200 = ssub.s32 %s17, 2
      // Predicated region
      $region72: #{transformer_forward.1} parent=70 // pred_check
        %p3201 = pneg %p240
      $region73: #{transformer_forward.1} parent=70 // pred_check_branch
        %3203 = sbr.rel (%p3201) target = $region75
      $region74: #{transformer_forward.1} parent=70 // pred_region
        %s3204 = smul.u32 4, %s23
        %p3205 = scmp.lt.s32.totalorder %s3204, 7
        %s3206 = scalar_select %p3205, %s3204, 7
        %s3207 = scalar_lea.vmem %s9, %s3206
      $region75: #{transformer_forward.1} parent=70 // pred_fallthru
        _
    $region71: #{transformer_forward.1} parent=5 // pred_fallthru
      _
  $region6: #{transformer_forward.1} parent=0 // loop_footer
    %s21 = sadd.s32 1, %s17
  $region7: #{transformer_forward.1} parent=0 // loop_footer_branch
    %16 = sbr.rel target = $region3
  $region8: #{transformer_forward.1} parent=0 // loop_exit
    _

</llo_original>
